<compile_context>
chip_gen: v5e
topology: v5e:2x2
jax: 0.10.0
libtpu: 0.0.40
codegen_flags: <defaults>
</compile_context>

<pallas_src>
import functools

import jax
import jax.numpy as jnp
from jax.experimental import pallas as pl
from jax.experimental.pallas import tpu as pltpu

SOS_token = 0
EOS_token = 1
NEG = -1e30          # masks padded softmax / log_softmax slots
LANE = 128


def _rup(n, m=LANE):
    return ((n + m - 1) // m) * m


# ----------------------------- small math helpers ---------------------------
def _sigmoid(x):
    return 1.0 / (1.0 + jnp.exp(-x))


def _softmax(x):
    m = jnp.max(x, axis=-1, keepdims=True)
    e = jnp.exp(x - m)
    return e * pl.reciprocal(jnp.sum(e, axis=-1, keepdims=True), approx=True)


def _log_softmax(x):
    m = jnp.max(x, axis=-1, keepdims=True)
    s = x - m
    return s - jnp.log(jnp.sum(jnp.exp(s), axis=-1, keepdims=True))


def _gru_fused(x, h, wi, wh, bi, bh, hp):
    """PyTorch GRUCell semantics; gates packed (r|z|n) in lane-aligned blocks of width hp."""
    gi = jnp.dot(x, wi, preferred_element_type=jnp.float32) + bi   # (1, 3*hp)
    gh = jnp.dot(h, wh, preferred_element_type=jnp.float32) + bh   # (1, 3*hp)
    r = _sigmoid(gi[:, 0:hp] + gh[:, 0:hp])
    z = _sigmoid(gi[:, hp:2 * hp] + gh[:, hp:2 * hp])
    n = jnp.tanh(gi[:, 2 * hp:3 * hp] + r * gh[:, 2 * hp:3 * hp])
    return (1.0 - z) * n + z * h


# ------------------------- fused encoder + greedy-decode kernel --------------
def seq2seq_kernel(
        x_ref, emb_ref,
        ewi_ref, ewh_ref, ebi_ref, ebh_ref,
        aw_ref, ab_ref, cw_ref, cb_ref,
        dwi_ref, dwh_ref, dbi_ref, dbh_ref,
        ow_ref, ob_ref,
        logp_ref, vlen_ref,
        enc_scr, hid_scr, onehot_scr, done_scr,
        *, T, Hp, Vp, sos, eos):
    t = pl.program_id(0)

    # --------------------- grid step 0: run the whole encoder ----------------
    @pl.when(t == 0)
    def _init():
        enc_scr[...] = jnp.zeros_like(enc_scr)           # zero-padded encoder outputs
        ewi, ewh = ewi_ref[...], ewh_ref[...]
        ebi, ebh = ebi_ref[...], ebh_ref[...]
        h = jnp.zeros((1, Hp), jnp.float32)              # encoder.init_hidden(): zeros
        for ti in range(T):                              # static T -> fully unrolled
            x = x_ref[pl.ds(ti, 1), :]                   # (1, Ep)
            h = _gru_fused(x, h, ewi, ewh, ebi, ebh, Hp)
            enc_scr[pl.ds(ti, 1), :] = h                 # encoder_outputs[ti]
        hid_scr[...] = h                                 # decoder_hidden = final enc hidden
        col0 = jax.lax.broadcasted_iota(jnp.int32, (1, Vp), 1)
        onehot_scr[...] = (col0 == sos).astype(jnp.float32)   # SOS one-hot
        done_scr[...] = jnp.zeros_like(done_scr)
        vlen_ref[...] = jnp.zeros_like(vlen_ref)

    # -------------------- one greedy decode step per grid step ---------------
    active = done_scr[...] < 0.5                         # (1,1) bool: EOS not yet emitted
    hid = hid_scr[...]                                   # (1, Hp)
    onehot = onehot_scr[...]                             # (1, Vp)

    # decoder-input embedding: one-hot @ table (== row lookup, table resident in VMEM)
    emb = jnp.dot(onehot, emb_ref[...], preferred_element_type=jnp.float32)   # (1, Ep)

    # attention over (zero-padded) encoder outputs
    eh = jnp.concatenate([emb, hid], axis=-1)            # (1, Ep+Hp)
    scores = jnp.dot(eh, aw_ref[...], preferred_element_type=jnp.float32) + ab_ref[...]
    attn_w = _softmax(scores)                            # (1, MLp), padded slots ~0
    ctx = jnp.dot(attn_w, enc_scr[...], preferred_element_type=jnp.float32)   # (1, Hp)

    # attn_combine + ReLU
    ea = jnp.concatenate([emb, ctx], axis=-1)            # (1, Ep+Hp)
    xg = jnp.maximum(
        jnp.dot(ea, cw_ref[...], preferred_element_type=jnp.float32) + cb_ref[...], 0.0)

    # GRU cell + vocab projection + log_softmax
    h_new = _gru_fused(xg, hid, dwi_ref[...], dwh_ref[...], dbi_ref[...], dbh_ref[...], Hp)
    logits = jnp.dot(h_new, ow_ref[...], preferred_element_type=jnp.float32) + ob_ref[...]
    logp = _log_softmax(logits)                          # (1, Vp)

    # greedy argmax entirely on-chip (no device->host round trip)
    col = jax.lax.broadcasted_iota(jnp.int32, (1, Vp), 1).astype(jnp.float32)
    m = jnp.max(logp, axis=-1, keepdims=True)
    idx = jnp.min(jnp.where(logp == m, col, float(Vp)), axis=-1, keepdims=True)   # (1,1)
    new_onehot = (col == idx).astype(jnp.float32)
    is_eos = (idx == float(eos)).astype(jnp.float32)

    # masked state / output updates (rows after EOS are zeroed and trimmed on host)
    logp_ref[0] = jnp.where(active, logp, 0.0)
    hid_scr[...] = jnp.where(active, h_new, hid)
    onehot_scr[...] = jnp.where(active, new_onehot, onehot)
    vlen_ref[...] = jnp.where(active, jnp.zeros((1, 1), jnp.int32) + (t + 1), vlen_ref[...])
    done_scr[...] = jnp.maximum(done_scr[...], is_eos)


# ------------------------------ parameter setup ------------------------------
def init_params(key, vocab_size, embedding_size, hidden_dim, max_len):
    def w(k, shape, scale=0.1):
        return (scale * jax.random.normal(k, shape)).astype(jnp.float32)

    keys = iter(jax.random.split(key, 40))

    def gru(in_dim, h_dim):
        return dict(
            wir=w(next(keys), (in_dim, h_dim)), wiz=w(next(keys), (in_dim, h_dim)),
            win=w(next(keys), (in_dim, h_dim)),
            whr=w(next(keys), (h_dim, h_dim)), whz=w(next(keys), (h_dim, h_dim)),
            whn=w(next(keys), (h_dim, h_dim)),
            bir=w(next(keys), (1, h_dim)), biz=w(next(keys), (1, h_dim)),
            bin=w(next(keys), (1, h_dim)),
            bhr=w(next(keys), (1, h_dim)), bhz=w(next(keys), (1, h_dim)),
            bhn=w(next(keys), (1, h_dim)),
        )

    return dict(
        embedding=w(next(keys), (vocab_size, embedding_size), scale=1.0),
        encoder=gru(embedding_size, hidden_dim),
        decoder=dict(
            attn_we=w(next(keys), (embedding_size, max_len)),
            attn_wh=w(next(keys), (hidden_dim, max_len)),
            attn_b=w(next(keys), (1, max_len)),
            comb_we=w(next(keys), (embedding_size, hidden_dim)),
            comb_wa=w(next(keys), (hidden_dim, hidden_dim)),
            comb_b=w(next(keys), (1, hidden_dim)),
            out_w=w(next(keys), (hidden_dim, vocab_size)),
            out_b=w(next(keys), (1, vocab_size)),
            **gru(hidden_dim, hidden_dim),
        ),
    )


def _pad(a, shape, fill=0.0):
    out = jnp.full(shape, fill, jnp.float32)
    return out.at[tuple(slice(0, s) for s in a.shape)].set(a)


def pack_params(params, max_len):
    """Fuse GRU gates into (in, 3H) / (H, 3H) blocks and zero-pad all feature dims to 128."""
    emb = params["embedding"]
    V, E = emb.shape
    H = params["encoder"]["whr"].shape[0]
    Vp, Ep, Hp, MLp = _rup(V), _rup(E), _rup(H), _rup(max_len)

    def pack_gru(g, in_dim, in_p):
        wi = jnp.zeros((in_p, 3 * Hp), jnp.float32)
        wh = jnp.zeros((Hp, 3 * Hp), jnp.float32)
        bi = jnp.zeros((1, 3 * Hp), jnp.float32)
        bh = jnp.zeros((1, 3 * Hp), jnp.float32)
        for slot, gname in enumerate("rzn"):
            c = slot * Hp
            wi = wi.at[:in_dim, c:c + H].set(g["wi" + gname])
            wh = wh.at[:H, c:c + H].set(g["wh" + gname])
            bi = bi.at[:, c:c + H].set(g["bi" + gname])
            bh = bh.at[:, c:c + H].set(g["bh" + gname])
        return wi, wh, bi, bh

    e_wi, e_wh, e_bi, e_bh = pack_gru(params["encoder"], E, Ep)
    d = params["decoder"]
    d_wi, d_wh, d_bi, d_bh = pack_gru(d, H, Hp)

    # attention / combine take concat([emb, x]) -> stack the two weight halves vertically
    attn_w = jnp.concatenate([_pad(d["attn_we"], (Ep, MLp)),
                              _pad(d["attn_wh"], (Hp, MLp))], axis=0)
    comb_w = jnp.concatenate([_pad(d["comb_we"], (Ep, Hp)),
                              _pad(d["comb_wa"], (Hp, Hp))], axis=0)

    return dict(
        dims=dict(V=V, E=E, H=H, ML=max_len, Vp=Vp, Ep=Ep, Hp=Hp, MLp=MLp),
        emb=_pad(emb, (Vp, Ep)),
        enc_wi=e_wi, enc_wh=e_wh, enc_bi=e_bi, enc_bh=e_bh,
        attn_w=attn_w,
        attn_b=_pad(d["attn_b"], (1, MLp), fill=NEG),   # mask padded attention slots
        comb_w=comb_w,
        comb_b=_pad(d["comb_b"], (1, Hp)),
        dec_wi=d_wi, dec_wh=d_wh, dec_bi=d_bi, dec_bh=d_bh,
        out_w=_pad(d["out_w"], (Hp, Vp)),
        out_b=_pad(d["out_b"], (1, Vp), fill=NEG),      # mask padded vocab slots
    )


# ------------------------------ Generator.forward ----------------------------
def generator_forward(packed, tokens):
    """tokens: int32 (T,) — batch_size is 1 (the reference compares a scalar to EOS)."""
    dims = packed["dims"]
    V, Hp, Vp, MLp = dims["V"], dims["Hp"], dims["Vp"], dims["MLp"]
    T = int(tokens.shape[0])

    x_emb = packed["emb"][tokens]                   # (T, Ep) embedded, lane-padded input

    args = (x_emb, packed["emb"],
            packed["enc_wi"], packed["enc_wh"], packed["enc_bi"], packed["enc_bh"],
            packed["attn_w"], packed["attn_b"], packed["comb_w"], packed["comb_b"],
            packed["dec_wi"], packed["dec_wh"], packed["dec_bi"], packed["dec_bh"],
            packed["out_w"], packed["out_b"])

    def _full(a):
        nd = a.ndim
        return pl.BlockSpec(a.shape, lambda t, _nd=nd: (0,) * _nd)

    kernel = functools.partial(seq2seq_kernel, T=T, Hp=Hp, Vp=Vp,
                               sos=SOS_token, eos=EOS_token)

    logp_all, vlen = pl.pallas_call(
        kernel,
        out_shape=(jax.ShapeDtypeStruct((T, 1, Vp), jnp.float32),
                   jax.ShapeDtypeStruct((1, 1), jnp.int32)),
        grid_spec=pltpu.PrefetchScalarGridSpec(
            num_scalar_prefetch=0,
            grid=(T,),
            in_specs=[_full(a) for a in args],
            out_specs=[pl.BlockSpec((1, 1, Vp), lambda t: (t, 0, 0)),
                       pl.BlockSpec((1, 1), lambda t: (0, 0))],
            scratch_shapes=[pltpu.VMEM((MLp, Hp), jnp.float32),  # padded encoder outputs
                            pltpu.VMEM((1, Hp), jnp.float32),    # decoder hidden
                            pltpu.VMEM((1, Vp), jnp.float32),    # current token one-hot
                            pltpu.VMEM((1, 1), jnp.float32)]),   # EOS-seen flag
        compiler_params=pltpu.CompilerParams(
            dimension_semantics=("arbitrary",)),                 # sequential recurrence
    )(*args)

    # single host sync: data-dependent output length (EOS early-stop), then trim padding
    n = int(vlen[0, 0])
    return logp_all.reshape(T, Vp)[:n, :V]


# ------------------------------------ main -----------------------------------
if __name__ == "__main__":
    VOCAB = 32
    EMBED = 16
    HIDDEN = 32
    MAX_LEN = 8
    SEQ_LEN = 8

    key = jax.random.PRNGKey(0)
    k_params, k_tokens = jax.random.split(key)

    params = init_params(k_params, VOCAB, EMBED, HIDDEN, MAX_LEN)
    packed = pack_params(params, MAX_LEN)
    tokens = jax.random.randint(k_tokens, (SEQ_LEN,), 2, VOCAB, dtype=jnp.int32)

    out = generator_forward(packed, tokens)
    out = jax.block_until_ready(out)
    assert out.ndim == 2 and out.shape[1] == VOCAB and 1 <= out.shape[0] <= SEQ_LEN
    print("KERNEL_OK")
</pallas_src>

<mosaic_0001>
module attributes {stable_mosaic.version = 11 : i64} {
  func.func @seq2seq_kernel(%arg0: i32, %arg1: memref<8x128xf32, #tpu.memory_space<vmem>>, %arg2: memref<128x128xf32, #tpu.memory_space<vmem>>, %arg3: memref<128x384xf32, #tpu.memory_space<vmem>>, %arg4: memref<128x384xf32, #tpu.memory_space<vmem>>, %arg5: memref<1x384xf32, #tpu.memory_space<vmem>>, %arg6: memref<1x384xf32, #tpu.memory_space<vmem>>, %arg7: memref<256x128xf32, #tpu.memory_space<vmem>>, %arg8: memref<1x128xf32, #tpu.memory_space<vmem>>, %arg9: memref<256x128xf32, #tpu.memory_space<vmem>>, %arg10: memref<1x128xf32, #tpu.memory_space<vmem>>, %arg11: memref<128x384xf32, #tpu.memory_space<vmem>>, %arg12: memref<128x384xf32, #tpu.memory_space<vmem>>, %arg13: memref<1x384xf32, #tpu.memory_space<vmem>>, %arg14: memref<1x384xf32, #tpu.memory_space<vmem>>, %arg15: memref<128x128xf32, #tpu.memory_space<vmem>>, %arg16: memref<1x128xf32, #tpu.memory_space<vmem>>, %arg17: memref<1x1x128xf32, #tpu.memory_space<vmem>>, %arg18: memref<1x1xi32, #tpu.memory_space<vmem>>, %arg19: memref<128x128xf32, #tpu.memory_space<vmem>>, %arg20: memref<1x128xf32, #tpu.memory_space<vmem>>, %arg21: memref<1x128xf32, #tpu.memory_space<vmem>>, %arg22: memref<1x1xf32, #tpu.memory_space<vmem>>) attributes {dimension_semantics = [#tpu.dimension_semantics<arbitrary>], iteration_bounds = array<i64: 8>, scalar_prefetch = 0 : i64, scratch_operands = 4 : i64, tpu.core_type = #tpu.core_type<tc>, window_params = [{pipeline_mode = #tpu.pipeline_mode<synchronous>, transform_indices = @transform_0, window_bounds = array<i64: 8, 128>}, {pipeline_mode = #tpu.pipeline_mode<synchronous>, transform_indices = @transform_1, window_bounds = array<i64: 128, 128>}, {pipeline_mode = #tpu.pipeline_mode<synchronous>, transform_indices = @transform_2, window_bounds = array<i64: 128, 384>}, {pipeline_mode = #tpu.pipeline_mode<synchronous>, transform_indices = @transform_3, window_bounds = array<i64: 128, 384>}, {pipeline_mode = #tpu.pipeline_mode<synchronous>, transform_indices = @transform_4, window_bounds = array<i64: 1, 384>}, {pipeline_mode = #tpu.pipeline_mode<synchronous>, transform_indices = @transform_5, window_bounds = array<i64: 1, 384>}, {pipeline_mode = #tpu.pipeline_mode<synchronous>, transform_indices = @transform_6, window_bounds = array<i64: 256, 128>}, {pipeline_mode = #tpu.pipeline_mode<synchronous>, transform_indices = @transform_7, window_bounds = array<i64: 1, 128>}, {pipeline_mode = #tpu.pipeline_mode<synchronous>, transform_indices = @transform_8, window_bounds = array<i64: 256, 128>}, {pipeline_mode = #tpu.pipeline_mode<synchronous>, transform_indices = @transform_9, window_bounds = array<i64: 1, 128>}, {pipeline_mode = #tpu.pipeline_mode<synchronous>, transform_indices = @transform_10, window_bounds = array<i64: 128, 384>}, {pipeline_mode = #tpu.pipeline_mode<synchronous>, transform_indices = @transform_11, window_bounds = array<i64: 128, 384>}, {pipeline_mode = #tpu.pipeline_mode<synchronous>, transform_indices = @transform_12, window_bounds = array<i64: 1, 384>}, {pipeline_mode = #tpu.pipeline_mode<synchronous>, transform_indices = @transform_13, window_bounds = array<i64: 1, 384>}, {pipeline_mode = #tpu.pipeline_mode<synchronous>, transform_indices = @transform_14, window_bounds = array<i64: 128, 128>}, {pipeline_mode = #tpu.pipeline_mode<synchronous>, transform_indices = @transform_15, window_bounds = array<i64: 1, 128>}, {transform_indices = @transform_16, window_bounds = array<i64: 1, 1, 128>}, {pipeline_mode = #tpu.pipeline_mode<synchronous>, transform_indices = @transform_17, window_bounds = array<i64: 1, 1>}]} {
    %c0_i32 = arith.constant 0 : i32
    %0 = arith.cmpi eq, %arg0, %c0_i32 : i32
    %1 = arith.extui %0 : i1 to i32
    %c0_i32_0 = arith.constant 0 : i32
    %2 = arith.cmpi ne, %1, %c0_i32_0 : i32
    scf.if %2 {
      %cst_70 = arith.constant 0.000000e+00 : f32
      %129 = vector.broadcast %cst_70 : f32 to vector<128x128xf32>
      %c0_71 = arith.constant 0 : index
      %c0_72 = arith.constant 0 : index
      %130 = vector.load %arg19[%c0_71, %c0_72] : memref<128x128xf32, #tpu.memory_space<vmem>>, vector<128x128xf32>
      tpu.vector_store %arg19[%c0_71, %c0_72], %129 {strides = array<i32>} : memref<128x128xf32, #tpu.memory_space<vmem>>, vector<128x128xf32>,
      %c0_73 = arith.constant 0 : index
      %c0_74 = arith.constant 0 : index
      %131 = vector.load %arg3[%c0_73, %c0_74] : memref<128x384xf32, #tpu.memory_space<vmem>>, vector<128x384xf32>
      %c0_75 = arith.constant 0 : index
      %c0_76 = arith.constant 0 : index
      %132 = vector.load %arg4[%c0_75, %c0_76] : memref<128x384xf32, #tpu.memory_space<vmem>>, vector<128x384xf32>
      %c0_77 = arith.constant 0 : index
      %c0_78 = arith.constant 0 : index
      %133 = vector.load %arg5[%c0_77, %c0_78] : memref<1x384xf32, #tpu.memory_space<vmem>>, vector<1x384xf32>
      %c0_79 = arith.constant 0 : index
      %c0_80 = arith.constant 0 : index
      %134 = vector.load %arg6[%c0_79, %c0_80] : memref<1x384xf32, #tpu.memory_space<vmem>>, vector<1x384xf32>
      %cst_81 = arith.constant 0.000000e+00 : f32
      %135 = vector.broadcast %cst_81 : f32 to vector<1x128xf32>
      %c0_82 = arith.constant 0 : index
      %c0_83 = arith.constant 0 : index
      %136 = vector.load %arg1[%c0_82, %c0_83] : memref<8x128xf32, #tpu.memory_space<vmem>>, vector<1x128xf32>
      %cst_84 = arith.constant dense<0.000000e+00> : vector<1x384xf32>
      %137 = tpu.matmul %136, %131, %cst_84 {dimension_numbers = #tpu.dot_dimension_numbers<[1], [0], [0], [1], [0, 0, 1, 1], [], []>} : vector<1x128xf32>, vector<128x384xf32>, vector<1x384xf32> -> vector<1x384xf32>
      %138 = arith.addf %137, %133 : vector<1x384xf32>
      %cst_85 = arith.constant dense<0.000000e+00> : vector<1x384xf32>
      %139 = tpu.matmul %135, %132, %cst_85 {dimension_numbers = #tpu.dot_dimension_numbers<[1], [0], [0], [1], [0, 0, 1, 1], [], []>} : vector<1x128xf32>, vector<128x384xf32>, vector<1x384xf32> -> vector<1x384xf32>
      %140 = arith.addf %139, %134 : vector<1x384xf32>
      %141 = vector.extract_strided_slice %138 {offsets = [0, 0], sizes = [1, 128], strides = [1, 1]} : vector<1x384xf32> to vector<1x128xf32>
      %142 = vector.extract_strided_slice %140 {offsets = [0, 0], sizes = [1, 128], strides = [1, 1]} : vector<1x384xf32> to vector<1x128xf32>
      %143 = arith.addf %141, %142 : vector<1x128xf32>
      %cst_86 = arith.constant 0.000000e+00 : f32
      %144 = vector.broadcast %cst_86 : f32 to vector<1x128xf32>
      %145 = arith.subf %144, %143 : vector<1x128xf32>
      %146 = math.exp %145 : vector<1x128xf32>
      %cst_87 = arith.constant 1.000000e+00 : f32
      %147 = vector.broadcast %cst_87 : f32 to vector<1x128xf32>
      %148 = arith.addf %147, %146 : vector<1x128xf32>
      %cst_88 = arith.constant 1.000000e+00 : f32
      %149 = vector.broadcast %cst_88 : f32 to vector<1x128xf32>
      %150 = arith.divf %149, %148 : vector<1x128xf32>
      %151 = vector.extract_strided_slice %138 {offsets = [0, 128], sizes = [1, 128], strides = [1, 1]} : vector<1x384xf32> to vector<1x128xf32>
      %152 = vector.extract_strided_slice %140 {offsets = [0, 128], sizes = [1, 128], strides = [1, 1]} : vector<1x384xf32> to vector<1x128xf32>
      %153 = arith.addf %151, %152 : vector<1x128xf32>
      %cst_89 = arith.constant 0.000000e+00 : f32
      %154 = vector.broadcast %cst_89 : f32 to vector<1x128xf32>
      %155 = arith.subf %154, %153 : vector<1x128xf32>
      %156 = math.exp %155 : vector<1x128xf32>
      %cst_90 = arith.constant 1.000000e+00 : f32
      %157 = vector.broadcast %cst_90 : f32 to vector<1x128xf32>
      %158 = arith.addf %157, %156 : vector<1x128xf32>
      %cst_91 = arith.constant 1.000000e+00 : f32
      %159 = vector.broadcast %cst_91 : f32 to vector<1x128xf32>
      %160 = arith.divf %159, %158 : vector<1x128xf32>
      %161 = vector.extract_strided_slice %138 {offsets = [0, 256], sizes = [1, 128], strides = [1, 1]} : vector<1x384xf32> to vector<1x128xf32>
      %162 = vector.extract_strided_slice %140 {offsets = [0, 256], sizes = [1, 128], strides = [1, 1]} : vector<1x384xf32> to vector<1x128xf32>
      %163 = arith.mulf %150, %162 : vector<1x128xf32>
      %164 = arith.addf %161, %163 : vector<1x128xf32>
      %165 = math.tanh %164 : vector<1x128xf32>
      %cst_92 = arith.constant 1.000000e+00 : f32
      %166 = vector.broadcast %cst_92 : f32 to vector<1x128xf32>
      %167 = arith.subf %166, %160 : vector<1x128xf32>
      %168 = arith.mulf %167, %165 : vector<1x128xf32>
      %169 = arith.mulf %160, %135 : vector<1x128xf32>
      %170 = arith.addf %168, %169 : vector<1x128xf32>
      %c0_93 = arith.constant 0 : index
      %c0_94 = arith.constant 0 : index
      %171 = vector.load %arg19[%c0_93, %c0_94] : memref<128x128xf32, #tpu.memory_space<vmem>>, vector<1x128xf32>
      tpu.vector_store %arg19[%c0_93, %c0_94], %170 {strides = array<i32>} : memref<128x128xf32, #tpu.memory_space<vmem>>, vector<1x128xf32>,
      %c1 = arith.constant 1 : index
      %c0_95 = arith.constant 0 : index
      %172 = vector.load %arg1[%c1, %c0_95] : memref<8x128xf32, #tpu.memory_space<vmem>>, vector<1x128xf32>
      %cst_96 = arith.constant dense<0.000000e+00> : vector<1x384xf32>
      %173 = tpu.matmul %172, %131, %cst_96 {dimension_numbers = #tpu.dot_dimension_numbers<[1], [0], [0], [1], [0, 0, 1, 1], [], []>} : vector<1x128xf32>, vector<128x384xf32>, vector<1x384xf32> -> vector<1x384xf32>
      %174 = arith.addf %173, %133 : vector<1x384xf32>
      %cst_97 = arith.constant dense<0.000000e+00> : vector<1x384xf32>
      %175 = tpu.matmul %170, %132, %cst_97 {dimension_numbers = #tpu.dot_dimension_numbers<[1], [0], [0], [1], [0, 0, 1, 1], [], []>} : vector<1x128xf32>, vector<128x384xf32>, vector<1x384xf32> -> vector<1x384xf32>
      %176 = arith.addf %175, %134 : vector<1x384xf32>
      %177 = vector.extract_strided_slice %174 {offsets = [0, 0], sizes = [1, 128], strides = [1, 1]} : vector<1x384xf32> to vector<1x128xf32>
      %178 = vector.extract_strided_slice %176 {offsets = [0, 0], sizes = [1, 128], strides = [1, 1]} : vector<1x384xf32> to vector<1x128xf32>
      %179 = arith.addf %177, %178 : vector<1x128xf32>
      %cst_98 = arith.constant 0.000000e+00 : f32
      %180 = vector.broadcast %cst_98 : f32 to vector<1x128xf32>
      %181 = arith.subf %180, %179 : vector<1x128xf32>
      %182 = math.exp %181 : vector<1x128xf32>
      %cst_99 = arith.constant 1.000000e+00 : f32
      %183 = vector.broadcast %cst_99 : f32 to vector<1x128xf32>
      %184 = arith.addf %183, %182 : vector<1x128xf32>
      %cst_100 = arith.constant 1.000000e+00 : f32
      %185 = vector.broadcast %cst_100 : f32 to vector<1x128xf32>
      %186 = arith.divf %185, %184 : vector<1x128xf32>
      %187 = vector.extract_strided_slice %174 {offsets = [0, 128], sizes = [1, 128], strides = [1, 1]} : vector<1x384xf32> to vector<1x128xf32>
      %188 = vector.extract_strided_slice %176 {offsets = [0, 128], sizes = [1, 128], strides = [1, 1]} : vector<1x384xf32> to vector<1x128xf32>
      %189 = arith.addf %187, %188 : vector<1x128xf32>
      %cst_101 = arith.constant 0.000000e+00 : f32
      %190 = vector.broadcast %cst_101 : f32 to vector<1x128xf32>
      %191 = arith.subf %190, %189 : vector<1x128xf32>
      %192 = math.exp %191 : vector<1x128xf32>
      %cst_102 = arith.constant 1.000000e+00 : f32
      %193 = vector.broadcast %cst_102 : f32 to vector<1x128xf32>
      %194 = arith.addf %193, %192 : vector<1x128xf32>
      %cst_103 = arith.constant 1.000000e+00 : f32
      %195 = vector.broadcast %cst_103 : f32 to vector<1x128xf32>
      %196 = arith.divf %195, %194 : vector<1x128xf32>
      %197 = vector.extract_strided_slice %174 {offsets = [0, 256], sizes = [1, 128], strides = [1, 1]} : vector<1x384xf32> to vector<1x128xf32>
      %198 = vector.extract_strided_slice %176 {offsets = [0, 256], sizes = [1, 128], strides = [1, 1]} : vector<1x384xf32> to vector<1x128xf32>
      %199 = arith.mulf %186, %198 : vector<1x128xf32>
      %200 = arith.addf %197, %199 : vector<1x128xf32>
      %201 = math.tanh %200 : vector<1x128xf32>
      %cst_104 = arith.constant 1.000000e+00 : f32
      %202 = vector.broadcast %cst_104 : f32 to vector<1x128xf32>
      %203 = arith.subf %202, %196 : vector<1x128xf32>
      %204 = arith.mulf %203, %201 : vector<1x128xf32>
      %205 = arith.mulf %196, %170 : vector<1x128xf32>
      %206 = arith.addf %204, %205 : vector<1x128xf32>
      %c1_105 = arith.constant 1 : index
      %c0_106 = arith.constant 0 : index
      %207 = vector.load %arg19[%c1_105, %c0_106] : memref<128x128xf32, #tpu.memory_space<vmem>>, vector<1x128xf32>
      tpu.vector_store %arg19[%c1_105, %c0_106], %206 {strides = array<i32>} : memref<128x128xf32, #tpu.memory_space<vmem>>, vector<1x128xf32>,
      %c2 = arith.constant 2 : index
      %c0_107 = arith.constant 0 : index
      %208 = vector.load %arg1[%c2, %c0_107] : memref<8x128xf32, #tpu.memory_space<vmem>>, vector<1x128xf32>
      %cst_108 = arith.constant dense<0.000000e+00> : vector<1x384xf32>
      %209 = tpu.matmul %208, %131, %cst_108 {dimension_numbers = #tpu.dot_dimension_numbers<[1], [0], [0], [1], [0, 0, 1, 1], [], []>} : vector<1x128xf32>, vector<128x384xf32>, vector<1x384xf32> -> vector<1x384xf32>
      %210 = arith.addf %209, %133 : vector<1x384xf32>
      %cst_109 = arith.constant dense<0.000000e+00> : vector<1x384xf32>
      %211 = tpu.matmul %206, %132, %cst_109 {dimension_numbers = #tpu.dot_dimension_numbers<[1], [0], [0], [1], [0, 0, 1, 1], [], []>} : vector<1x128xf32>, vector<128x384xf32>, vector<1x384xf32> -> vector<1x384xf32>
      %212 = arith.addf %211, %134 : vector<1x384xf32>
      %213 = vector.extract_strided_slice %210 {offsets = [0, 0], sizes = [1, 128], strides = [1, 1]} : vector<1x384xf32> to vector<1x128xf32>
      %214 = vector.extract_strided_slice %212 {offsets = [0, 0], sizes = [1, 128], strides = [1, 1]} : vector<1x384xf32> to vector<1x128xf32>
      %215 = arith.addf %213, %214 : vector<1x128xf32>
      %cst_110 = arith.constant 0.000000e+00 : f32
      %216 = vector.broadcast %cst_110 : f32 to vector<1x128xf32>
      %217 = arith.subf %216, %215 : vector<1x128xf32>
      %218 = math.exp %217 : vector<1x128xf32>
      %cst_111 = arith.constant 1.000000e+00 : f32
      %219 = vector.broadcast %cst_111 : f32 to vector<1x128xf32>
      %220 = arith.addf %219, %218 : vector<1x128xf32>
      %cst_112 = arith.constant 1.000000e+00 : f32
      %221 = vector.broadcast %cst_112 : f32 to vector<1x128xf32>
      %222 = arith.divf %221, %220 : vector<1x128xf32>
      %223 = vector.extract_strided_slice %210 {offsets = [0, 128], sizes = [1, 128], strides = [1, 1]} : vector<1x384xf32> to vector<1x128xf32>
      %224 = vector.extract_strided_slice %212 {offsets = [0, 128], sizes = [1, 128], strides = [1, 1]} : vector<1x384xf32> to vector<1x128xf32>
      %225 = arith.addf %223, %224 : vector<1x128xf32>
      %cst_113 = arith.constant 0.000000e+00 : f32
      %226 = vector.broadcast %cst_113 : f32 to vector<1x128xf32>
      %227 = arith.subf %226, %225 : vector<1x128xf32>
      %228 = math.exp %227 : vector<1x128xf32>
      %cst_114 = arith.constant 1.000000e+00 : f32
      %229 = vector.broadcast %cst_114 : f32 to vector<1x128xf32>
      %230 = arith.addf %229, %228 : vector<1x128xf32>
      %cst_115 = arith.constant 1.000000e+00 : f32
      %231 = vector.broadcast %cst_115 : f32 to vector<1x128xf32>
      %232 = arith.divf %231, %230 : vector<1x128xf32>
      %233 = vector.extract_strided_slice %210 {offsets = [0, 256], sizes = [1, 128], strides = [1, 1]} : vector<1x384xf32> to vector<1x128xf32>
      %234 = vector.extract_strided_slice %212 {offsets = [0, 256], sizes = [1, 128], strides = [1, 1]} : vector<1x384xf32> to vector<1x128xf32>
      %235 = arith.mulf %222, %234 : vector<1x128xf32>
      %236 = arith.addf %233, %235 : vector<1x128xf32>
      %237 = math.tanh %236 : vector<1x128xf32>
      %cst_116 = arith.constant 1.000000e+00 : f32
      %238 = vector.broadcast %cst_116 : f32 to vector<1x128xf32>
      %239 = arith.subf %238, %232 : vector<1x128xf32>
      %240 = arith.mulf %239, %237 : vector<1x128xf32>
      %241 = arith.mulf %232, %206 : vector<1x128xf32>
      %242 = arith.addf %240, %241 : vector<1x128xf32>
      %c2_117 = arith.constant 2 : index
      %c0_118 = arith.constant 0 : index
      %243 = vector.load %arg19[%c2_117, %c0_118] : memref<128x128xf32, #tpu.memory_space<vmem>>, vector<1x128xf32>
      tpu.vector_store %arg19[%c2_117, %c0_118], %242 {strides = array<i32>} : memref<128x128xf32, #tpu.memory_space<vmem>>, vector<1x128xf32>,
      %c3 = arith.constant 3 : index
      %c0_119 = arith.constant 0 : index
      %244 = vector.load %arg1[%c3, %c0_119] : memref<8x128xf32, #tpu.memory_space<vmem>>, vector<1x128xf32>
      %cst_120 = arith.constant dense<0.000000e+00> : vector<1x384xf32>
      %245 = tpu.matmul %244, %131, %cst_120 {dimension_numbers = #tpu.dot_dimension_numbers<[1], [0], [0], [1], [0, 0, 1, 1], [], []>} : vector<1x128xf32>, vector<128x384xf32>, vector<1x384xf32> -> vector<1x384xf32>
      %246 = arith.addf %245, %133 : vector<1x384xf32>
      %cst_121 = arith.constant dense<0.000000e+00> : vector<1x384xf32>
      %247 = tpu.matmul %242, %132, %cst_121 {dimension_numbers = #tpu.dot_dimension_numbers<[1], [0], [0], [1], [0, 0, 1, 1], [], []>} : vector<1x128xf32>, vector<128x384xf32>, vector<1x384xf32> -> vector<1x384xf32>
      %248 = arith.addf %247, %134 : vector<1x384xf32>
      %249 = vector.extract_strided_slice %246 {offsets = [0, 0], sizes = [1, 128], strides = [1, 1]} : vector<1x384xf32> to vector<1x128xf32>
      %250 = vector.extract_strided_slice %248 {offsets = [0, 0], sizes = [1, 128], strides = [1, 1]} : vector<1x384xf32> to vector<1x128xf32>
      %251 = arith.addf %249, %250 : vector<1x128xf32>
      %cst_122 = arith.constant 0.000000e+00 : f32
      %252 = vector.broadcast %cst_122 : f32 to vector<1x128xf32>
      %253 = arith.subf %252, %251 : vector<1x128xf32>
      %254 = math.exp %253 : vector<1x128xf32>
      %cst_123 = arith.constant 1.000000e+00 : f32
      %255 = vector.broadcast %cst_123 : f32 to vector<1x128xf32>
      %256 = arith.addf %255, %254 : vector<1x128xf32>
      %cst_124 = arith.constant 1.000000e+00 : f32
      %257 = vector.broadcast %cst_124 : f32 to vector<1x128xf32>
      %258 = arith.divf %257, %256 : vector<1x128xf32>
      %259 = vector.extract_strided_slice %246 {offsets = [0, 128], sizes = [1, 128], strides = [1, 1]} : vector<1x384xf32> to vector<1x128xf32>
      %260 = vector.extract_strided_slice %248 {offsets = [0, 128], sizes = [1, 128], strides = [1, 1]} : vector<1x384xf32> to vector<1x128xf32>
      %261 = arith.addf %259, %260 : vector<1x128xf32>
      %cst_125 = arith.constant 0.000000e+00 : f32
      %262 = vector.broadcast %cst_125 : f32 to vector<1x128xf32>
      %263 = arith.subf %262, %261 : vector<1x128xf32>
      %264 = math.exp %263 : vector<1x128xf32>
      %cst_126 = arith.constant 1.000000e+00 : f32
      %265 = vector.broadcast %cst_126 : f32 to vector<1x128xf32>
      %266 = arith.addf %265, %264 : vector<1x128xf32>
      %cst_127 = arith.constant 1.000000e+00 : f32
      %267 = vector.broadcast %cst_127 : f32 to vector<1x128xf32>
      %268 = arith.divf %267, %266 : vector<1x128xf32>
      %269 = vector.extract_strided_slice %246 {offsets = [0, 256], sizes = [1, 128], strides = [1, 1]} : vector<1x384xf32> to vector<1x128xf32>
      %270 = vector.extract_strided_slice %248 {offsets = [0, 256], sizes = [1, 128], strides = [1, 1]} : vector<1x384xf32> to vector<1x128xf32>
      %271 = arith.mulf %258, %270 : vector<1x128xf32>
      %272 = arith.addf %269, %271 : vector<1x128xf32>
      %273 = math.tanh %272 : vector<1x128xf32>
      %cst_128 = arith.constant 1.000000e+00 : f32
      %274 = vector.broadcast %cst_128 : f32 to vector<1x128xf32>
      %275 = arith.subf %274, %268 : vector<1x128xf32>
      %276 = arith.mulf %275, %273 : vector<1x128xf32>
      %277 = arith.mulf %268, %242 : vector<1x128xf32>
      %278 = arith.addf %276, %277 : vector<1x128xf32>
      %c3_129 = arith.constant 3 : index
      %c0_130 = arith.constant 0 : index
      %279 = vector.load %arg19[%c3_129, %c0_130] : memref<128x128xf32, #tpu.memory_space<vmem>>, vector<1x128xf32>
      tpu.vector_store %arg19[%c3_129, %c0_130], %278 {strides = array<i32>} : memref<128x128xf32, #tpu.memory_space<vmem>>, vector<1x128xf32>,
      %c4 = arith.constant 4 : index
      %c0_131 = arith.constant 0 : index
      %280 = vector.load %arg1[%c4, %c0_131] : memref<8x128xf32, #tpu.memory_space<vmem>>, vector<1x128xf32>
      %cst_132 = arith.constant dense<0.000000e+00> : vector<1x384xf32>
      %281 = tpu.matmul %280, %131, %cst_132 {dimension_numbers = #tpu.dot_dimension_numbers<[1], [0], [0], [1], [0, 0, 1, 1], [], []>} : vector<1x128xf32>, vector<128x384xf32>, vector<1x384xf32> -> vector<1x384xf32>
      %282 = arith.addf %281, %133 : vector<1x384xf32>
      %cst_133 = arith.constant dense<0.000000e+00> : vector<1x384xf32>
      %283 = tpu.matmul %278, %132, %cst_133 {dimension_numbers = #tpu.dot_dimension_numbers<[1], [0], [0], [1], [0, 0, 1, 1], [], []>} : vector<1x128xf32>, vector<128x384xf32>, vector<1x384xf32> -> vector<1x384xf32>
      %284 = arith.addf %283, %134 : vector<1x384xf32>
      %285 = vector.extract_strided_slice %282 {offsets = [0, 0], sizes = [1, 128], strides = [1, 1]} : vector<1x384xf32> to vector<1x128xf32>
      %286 = vector.extract_strided_slice %284 {offsets = [0, 0], sizes = [1, 128], strides = [1, 1]} : vector<1x384xf32> to vector<1x128xf32>
      %287 = arith.addf %285, %286 : vector<1x128xf32>
      %cst_134 = arith.constant 0.000000e+00 : f32
      %288 = vector.broadcast %cst_134 : f32 to vector<1x128xf32>
      %289 = arith.subf %288, %287 : vector<1x128xf32>
      %290 = math.exp %289 : vector<1x128xf32>
      %cst_135 = arith.constant 1.000000e+00 : f32
      %291 = vector.broadcast %cst_135 : f32 to vector<1x128xf32>
      %292 = arith.addf %291, %290 : vector<1x128xf32>
      %cst_136 = arith.constant 1.000000e+00 : f32
      %293 = vector.broadcast %cst_136 : f32 to vector<1x128xf32>
      %294 = arith.divf %293, %292 : vector<1x128xf32>
      %295 = vector.extract_strided_slice %282 {offsets = [0, 128], sizes = [1, 128], strides = [1, 1]} : vector<1x384xf32> to vector<1x128xf32>
      %296 = vector.extract_strided_slice %284 {offsets = [0, 128], sizes = [1, 128], strides = [1, 1]} : vector<1x384xf32> to vector<1x128xf32>
      %297 = arith.addf %295, %296 : vector<1x128xf32>
      %cst_137 = arith.constant 0.000000e+00 : f32
      %298 = vector.broadcast %cst_137 : f32 to vector<1x128xf32>
      %299 = arith.subf %298, %297 : vector<1x128xf32>
      %300 = math.exp %299 : vector<1x128xf32>
      %cst_138 = arith.constant 1.000000e+00 : f32
      %301 = vector.broadcast %cst_138 : f32 to vector<1x128xf32>
      %302 = arith.addf %301, %300 : vector<1x128xf32>
      %cst_139 = arith.constant 1.000000e+00 : f32
      %303 = vector.broadcast %cst_139 : f32 to vector<1x128xf32>
      %304 = arith.divf %303, %302 : vector<1x128xf32>
      %305 = vector.extract_strided_slice %282 {offsets = [0, 256], sizes = [1, 128], strides = [1, 1]} : vector<1x384xf32> to vector<1x128xf32>
      %306 = vector.extract_strided_slice %284 {offsets = [0, 256], sizes = [1, 128], strides = [1, 1]} : vector<1x384xf32> to vector<1x128xf32>
      %307 = arith.mulf %294, %306 : vector<1x128xf32>
      %308 = arith.addf %305, %307 : vector<1x128xf32>
      %309 = math.tanh %308 : vector<1x128xf32>
      %cst_140 = arith.constant 1.000000e+00 : f32
      %310 = vector.broadcast %cst_140 : f32 to vector<1x128xf32>
      %311 = arith.subf %310, %304 : vector<1x128xf32>
      %312 = arith.mulf %311, %309 : vector<1x128xf32>
      %313 = arith.mulf %304, %278 : vector<1x128xf32>
      %314 = arith.addf %312, %313 : vector<1x128xf32>
      %c4_141 = arith.constant 4 : index
      %c0_142 = arith.constant 0 : index
      %315 = vector.load %arg19[%c4_141, %c0_142] : memref<128x128xf32, #tpu.memory_space<vmem>>, vector<1x128xf32>
      tpu.vector_store %arg19[%c4_141, %c0_142], %314 {strides = array<i32>} : memref<128x128xf32, #tpu.memory_space<vmem>>, vector<1x128xf32>,
      %c5 = arith.constant 5 : index
      %c0_143 = arith.constant 0 : index
      %316 = vector.load %arg1[%c5, %c0_143] : memref<8x128xf32, #tpu.memory_space<vmem>>, vector<1x128xf32>
      %cst_144 = arith.constant dense<0.000000e+00> : vector<1x384xf32>
      %317 = tpu.matmul %316, %131, %cst_144 {dimension_numbers = #tpu.dot_dimension_numbers<[1], [0], [0], [1], [0, 0, 1, 1], [], []>} : vector<1x128xf32>, vector<128x384xf32>, vector<1x384xf32> -> vector<1x384xf32>
      %318 = arith.addf %317, %133 : vector<1x384xf32>
      %cst_145 = arith.constant dense<0.000000e+00> : vector<1x384xf32>
      %319 = tpu.matmul %314, %132, %cst_145 {dimension_numbers = #tpu.dot_dimension_numbers<[1], [0], [0], [1], [0, 0, 1, 1], [], []>} : vector<1x128xf32>, vector<128x384xf32>, vector<1x384xf32> -> vector<1x384xf32>
      %320 = arith.addf %319, %134 : vector<1x384xf32>
      %321 = vector.extract_strided_slice %318 {offsets = [0, 0], sizes = [1, 128], strides = [1, 1]} : vector<1x384xf32> to vector<1x128xf32>
      %322 = vector.extract_strided_slice %320 {offsets = [0, 0], sizes = [1, 128], strides = [1, 1]} : vector<1x384xf32> to vector<1x128xf32>
      %323 = arith.addf %321, %322 : vector<1x128xf32>
      %cst_146 = arith.constant 0.000000e+00 : f32
      %324 = vector.broadcast %cst_146 : f32 to vector<1x128xf32>
      %325 = arith.subf %324, %323 : vector<1x128xf32>
      %326 = math.exp %325 : vector<1x128xf32>
      %cst_147 = arith.constant 1.000000e+00 : f32
      %327 = vector.broadcast %cst_147 : f32 to vector<1x128xf32>
      %328 = arith.addf %327, %326 : vector<1x128xf32>
      %cst_148 = arith.constant 1.000000e+00 : f32
      %329 = vector.broadcast %cst_148 : f32 to vector<1x128xf32>
      %330 = arith.divf %329, %328 : vector<1x128xf32>
      %331 = vector.extract_strided_slice %318 {offsets = [0, 128], sizes = [1, 128], strides = [1, 1]} : vector<1x384xf32> to vector<1x128xf32>
      %332 = vector.extract_strided_slice %320 {offsets = [0, 128], sizes = [1, 128], strides = [1, 1]} : vector<1x384xf32> to vector<1x128xf32>
      %333 = arith.addf %331, %332 : vector<1x128xf32>
      %cst_149 = arith.constant 0.000000e+00 : f32
      %334 = vector.broadcast %cst_149 : f32 to vector<1x128xf32>
      %335 = arith.subf %334, %333 : vector<1x128xf32>
      %336 = math.exp %335 : vector<1x128xf32>
      %cst_150 = arith.constant 1.000000e+00 : f32
      %337 = vector.broadcast %cst_150 : f32 to vector<1x128xf32>
      %338 = arith.addf %337, %336 : vector<1x128xf32>
      %cst_151 = arith.constant 1.000000e+00 : f32
      %339 = vector.broadcast %cst_151 : f32 to vector<1x128xf32>
      %340 = arith.divf %339, %338 : vector<1x128xf32>
      %341 = vector.extract_strided_slice %318 {offsets = [0, 256], sizes = [1, 128], strides = [1, 1]} : vector<1x384xf32> to vector<1x128xf32>
      %342 = vector.extract_strided_slice %320 {offsets = [0, 256], sizes = [1, 128], strides = [1, 1]} : vector<1x384xf32> to vector<1x128xf32>
      %343 = arith.mulf %330, %342 : vector<1x128xf32>
      %344 = arith.addf %341, %343 : vector<1x128xf32>
      %345 = math.tanh %344 : vector<1x128xf32>
      %cst_152 = arith.constant 1.000000e+00 : f32
      %346 = vector.broadcast %cst_152 : f32 to vector<1x128xf32>
      %347 = arith.subf %346, %340 : vector<1x128xf32>
      %348 = arith.mulf %347, %345 : vector<1x128xf32>
      %349 = arith.mulf %340, %314 : vector<1x128xf32>
      %350 = arith.addf %348, %349 : vector<1x128xf32>
      %c5_153 = arith.constant 5 : index
      %c0_154 = arith.constant 0 : index
      %351 = vector.load %arg19[%c5_153, %c0_154] : memref<128x128xf32, #tpu.memory_space<vmem>>, vector<1x128xf32>
      tpu.vector_store %arg19[%c5_153, %c0_154], %350 {strides = array<i32>} : memref<128x128xf32, #tpu.memory_space<vmem>>, vector<1x128xf32>,
      %c6 = arith.constant 6 : index
      %c0_155 = arith.constant 0 : index
      %352 = vector.load %arg1[%c6, %c0_155] : memref<8x128xf32, #tpu.memory_space<vmem>>, vector<1x128xf32>
      %cst_156 = arith.constant dense<0.000000e+00> : vector<1x384xf32>
      %353 = tpu.matmul %352, %131, %cst_156 {dimension_numbers = #tpu.dot_dimension_numbers<[1], [0], [0], [1], [0, 0, 1, 1], [], []>} : vector<1x128xf32>, vector<128x384xf32>, vector<1x384xf32> -> vector<1x384xf32>
      %354 = arith.addf %353, %133 : vector<1x384xf32>
      %cst_157 = arith.constant dense<0.000000e+00> : vector<1x384xf32>
      %355 = tpu.matmul %350, %132, %cst_157 {dimension_numbers = #tpu.dot_dimension_numbers<[1], [0], [0], [1], [0, 0, 1, 1], [], []>} : vector<1x128xf32>, vector<128x384xf32>, vector<1x384xf32> -> vector<1x384xf32>
      %356 = arith.addf %355, %134 : vector<1x384xf32>
      %357 = vector.extract_strided_slice %354 {offsets = [0, 0], sizes = [1, 128], strides = [1, 1]} : vector<1x384xf32> to vector<1x128xf32>
      %358 = vector.extract_strided_slice %356 {offsets = [0, 0], sizes = [1, 128], strides = [1, 1]} : vector<1x384xf32> to vector<1x128xf32>
      %359 = arith.addf %357, %358 : vector<1x128xf32>
      %cst_158 = arith.constant 0.000000e+00 : f32
      %360 = vector.broadcast %cst_158 : f32 to vector<1x128xf32>
      %361 = arith.subf %360, %359 : vector<1x128xf32>
      %362 = math.exp %361 : vector<1x128xf32>
      %cst_159 = arith.constant 1.000000e+00 : f32
      %363 = vector.broadcast %cst_159 : f32 to vector<1x128xf32>
      %364 = arith.addf %363, %362 : vector<1x128xf32>
      %cst_160 = arith.constant 1.000000e+00 : f32
      %365 = vector.broadcast %cst_160 : f32 to vector<1x128xf32>
      %366 = arith.divf %365, %364 : vector<1x128xf32>
      %367 = vector.extract_strided_slice %354 {offsets = [0, 128], sizes = [1, 128], strides = [1, 1]} : vector<1x384xf32> to vector<1x128xf32>
      %368 = vector.extract_strided_slice %356 {offsets = [0, 128], sizes = [1, 128], strides = [1, 1]} : vector<1x384xf32> to vector<1x128xf32>
      %369 = arith.addf %367, %368 : vector<1x128xf32>
      %cst_161 = arith.constant 0.000000e+00 : f32
      %370 = vector.broadcast %cst_161 : f32 to vector<1x128xf32>
      %371 = arith.subf %370, %369 : vector<1x128xf32>
      %372 = math.exp %371 : vector<1x128xf32>
      %cst_162 = arith.constant 1.000000e+00 : f32
      %373 = vector.broadcast %cst_162 : f32 to vector<1x128xf32>
      %374 = arith.addf %373, %372 : vector<1x128xf32>
      %cst_163 = arith.constant 1.000000e+00 : f32
      %375 = vector.broadcast %cst_163 : f32 to vector<1x128xf32>
      %376 = arith.divf %375, %374 : vector<1x128xf32>
      %377 = vector.extract_strided_slice %354 {offsets = [0, 256], sizes = [1, 128], strides = [1, 1]} : vector<1x384xf32> to vector<1x128xf32>
      %378 = vector.extract_strided_slice %356 {offsets = [0, 256], sizes = [1, 128], strides = [1, 1]} : vector<1x384xf32> to vector<1x128xf32>
      %379 = arith.mulf %366, %378 : vector<1x128xf32>
      %380 = arith.addf %377, %379 : vector<1x128xf32>
      %381 = math.tanh %380 : vector<1x128xf32>
      %cst_164 = arith.constant 1.000000e+00 : f32
      %382 = vector.broadcast %cst_164 : f32 to vector<1x128xf32>
      %383 = arith.subf %382, %376 : vector<1x128xf32>
      %384 = arith.mulf %383, %381 : vector<1x128xf32>
      %385 = arith.mulf %376, %350 : vector<1x128xf32>
      %386 = arith.addf %384, %385 : vector<1x128xf32>
      %c6_165 = arith.constant 6 : index
      %c0_166 = arith.constant 0 : index
      %387 = vector.load %arg19[%c6_165, %c0_166] : memref<128x128xf32, #tpu.memory_space<vmem>>, vector<1x128xf32>
      tpu.vector_store %arg19[%c6_165, %c0_166], %386 {strides = array<i32>} : memref<128x128xf32, #tpu.memory_space<vmem>>, vector<1x128xf32>,
      %c7 = arith.constant 7 : index
      %c0_167 = arith.constant 0 : index
      %388 = vector.load %arg1[%c7, %c0_167] : memref<8x128xf32, #tpu.memory_space<vmem>>, vector<1x128xf32>
      %cst_168 = arith.constant dense<0.000000e+00> : vector<1x384xf32>
      %389 = tpu.matmul %388, %131, %cst_168 {dimension_numbers = #tpu.dot_dimension_numbers<[1], [0], [0], [1], [0, 0, 1, 1], [], []>} : vector<1x128xf32>, vector<128x384xf32>, vector<1x384xf32> -> vector<1x384xf32>
      %390 = arith.addf %389, %133 : vector<1x384xf32>
      %cst_169 = arith.constant dense<0.000000e+00> : vector<1x384xf32>
      %391 = tpu.matmul %386, %132, %cst_169 {dimension_numbers = #tpu.dot_dimension_numbers<[1], [0], [0], [1], [0, 0, 1, 1], [], []>} : vector<1x128xf32>, vector<128x384xf32>, vector<1x384xf32> -> vector<1x384xf32>
      %392 = arith.addf %391, %134 : vector<1x384xf32>
      %393 = vector.extract_strided_slice %390 {offsets = [0, 0], sizes = [1, 128], strides = [1, 1]} : vector<1x384xf32> to vector<1x128xf32>
      %394 = vector.extract_strided_slice %392 {offsets = [0, 0], sizes = [1, 128], strides = [1, 1]} : vector<1x384xf32> to vector<1x128xf32>
      %395 = arith.addf %393, %394 : vector<1x128xf32>
      %cst_170 = arith.constant 0.000000e+00 : f32
      %396 = vector.broadcast %cst_170 : f32 to vector<1x128xf32>
      %397 = arith.subf %396, %395 : vector<1x128xf32>
      %398 = math.exp %397 : vector<1x128xf32>
      %cst_171 = arith.constant 1.000000e+00 : f32
      %399 = vector.broadcast %cst_171 : f32 to vector<1x128xf32>
      %400 = arith.addf %399, %398 : vector<1x128xf32>
      %cst_172 = arith.constant 1.000000e+00 : f32
      %401 = vector.broadcast %cst_172 : f32 to vector<1x128xf32>
      %402 = arith.divf %401, %400 : vector<1x128xf32>
      %403 = vector.extract_strided_slice %390 {offsets = [0, 128], sizes = [1, 128], strides = [1, 1]} : vector<1x384xf32> to vector<1x128xf32>
      %404 = vector.extract_strided_slice %392 {offsets = [0, 128], sizes = [1, 128], strides = [1, 1]} : vector<1x384xf32> to vector<1x128xf32>
      %405 = arith.addf %403, %404 : vector<1x128xf32>
      %cst_173 = arith.constant 0.000000e+00 : f32
      %406 = vector.broadcast %cst_173 : f32 to vector<1x128xf32>
      %407 = arith.subf %406, %405 : vector<1x128xf32>
      %408 = math.exp %407 : vector<1x128xf32>
      %cst_174 = arith.constant 1.000000e+00 : f32
      %409 = vector.broadcast %cst_174 : f32 to vector<1x128xf32>
      %410 = arith.addf %409, %408 : vector<1x128xf32>
      %cst_175 = arith.constant 1.000000e+00 : f32
      %411 = vector.broadcast %cst_175 : f32 to vector<1x128xf32>
      %412 = arith.divf %411, %410 : vector<1x128xf32>
      %413 = vector.extract_strided_slice %390 {offsets = [0, 256], sizes = [1, 128], strides = [1, 1]} : vector<1x384xf32> to vector<1x128xf32>
      %414 = vector.extract_strided_slice %392 {offsets = [0, 256], sizes = [1, 128], strides = [1, 1]} : vector<1x384xf32> to vector<1x128xf32>
      %415 = arith.mulf %402, %414 : vector<1x128xf32>
      %416 = arith.addf %413, %415 : vector<1x128xf32>
      %417 = math.tanh %416 : vector<1x128xf32>
      %cst_176 = arith.constant 1.000000e+00 : f32
      %418 = vector.broadcast %cst_176 : f32 to vector<1x128xf32>
      %419 = arith.subf %418, %412 : vector<1x128xf32>
      %420 = arith.mulf %419, %417 : vector<1x128xf32>
      %421 = arith.mulf %412, %386 : vector<1x128xf32>
      %422 = arith.addf %420, %421 : vector<1x128xf32>
      %c7_177 = arith.constant 7 : index
      %c0_178 = arith.constant 0 : index
      %423 = vector.load %arg19[%c7_177, %c0_178] : memref<128x128xf32, #tpu.memory_space<vmem>>, vector<1x128xf32>
      tpu.vector_store %arg19[%c7_177, %c0_178], %422 {strides = array<i32>} : memref<128x128xf32, #tpu.memory_space<vmem>>, vector<1x128xf32>,
      %c0_179 = arith.constant 0 : index
      %c0_180 = arith.constant 0 : index
      %424 = vector.load %arg20[%c0_179, %c0_180] : memref<1x128xf32, #tpu.memory_space<vmem>>, vector<1x128xf32>
      tpu.vector_store %arg20[%c0_179, %c0_180], %422 {strides = array<i32>} : memref<1x128xf32, #tpu.memory_space<vmem>>, vector<1x128xf32>,
      %425 = tpu.iota {dimensions = array<i32: 1>} : vector<1x128xi32>
      %c0_i32_181 = arith.constant 0 : i32
      %426 = vector.broadcast %c0_i32_181 : i32 to vector<1x128xi32>
      %427 = arith.cmpi eq, %425, %426 : vector<1x128xi32>
      %428 = arith.extui %427 : vector<1x128xi1> to vector<1x128xi32>
      %429 = arith.sitofp %428 : vector<1x128xi32> to vector<1x128xf32>
      %c0_182 = arith.constant 0 : index
      %c0_183 = arith.constant 0 : index
      %430 = vector.load %arg21[%c0_182, %c0_183] : memref<1x128xf32, #tpu.memory_space<vmem>>, vector<1x128xf32>
      tpu.vector_store %arg21[%c0_182, %c0_183], %429 {strides = array<i32>} : memref<1x128xf32, #tpu.memory_space<vmem>>, vector<1x128xf32>,
      %cst_184 = arith.constant 0.000000e+00 : f32
      %431 = vector.broadcast %cst_184 : f32 to vector<1x1xf32>
      %c0_185 = arith.constant 0 : index
      %c0_186 = arith.constant 0 : index
      %432 = vector.load %arg22[%c0_185, %c0_186] : memref<1x1xf32, #tpu.memory_space<vmem>>, vector<1x1xf32>
      tpu.vector_store %arg22[%c0_185, %c0_186], %431 {strides = array<i32>} : memref<1x1xf32, #tpu.memory_space<vmem>>, vector<1x1xf32>,
      %c0_i32_187 = arith.constant 0 : i32
      %433 = vector.broadcast %c0_i32_187 : i32 to vector<1x1xi32>
      %c0_188 = arith.constant 0 : index
      %c0_189 = arith.constant 0 : index
      %434 = vector.load %arg18[%c0_188, %c0_189] : memref<1x1xi32, #tpu.memory_space<vmem>>, vector<1x1xi32>
      tpu.vector_store %arg18[%c0_188, %c0_189], %433 {strides = array<i32>} : memref<1x1xi32, #tpu.memory_space<vmem>>, vector<1x1xi32>,
    } else {
    }
    %c0 = arith.constant 0 : index
    %c0_1 = arith.constant 0 : index
    %3 = vector.load %arg22[%c0, %c0_1] : memref<1x1xf32, #tpu.memory_space<vmem>>, vector<1x1xf32>
    %cst = arith.constant 5.000000e-01 : f32
    %4 = vector.broadcast %cst : f32 to vector<1x1xf32>
    %5 = arith.cmpf olt, %3, %4 : vector<1x1xf32>
    %c0_2 = arith.constant 0 : index
    %c0_3 = arith.constant 0 : index
    %6 = vector.load %arg20[%c0_2, %c0_3] : memref<1x128xf32, #tpu.memory_space<vmem>>, vector<1x128xf32>
    %c0_4 = arith.constant 0 : index
    %c0_5 = arith.constant 0 : index
    %7 = vector.load %arg21[%c0_4, %c0_5] : memref<1x128xf32, #tpu.memory_space<vmem>>, vector<1x128xf32>
    %c0_6 = arith.constant 0 : index
    %c0_7 = arith.constant 0 : index
    %8 = vector.load %arg2[%c0_6, %c0_7] : memref<128x128xf32, #tpu.memory_space<vmem>>, vector<128x128xf32>
    %cst_8 = arith.constant dense<0.000000e+00> : vector<1x128xf32>
    %9 = tpu.matmul %7, %8, %cst_8 {dimension_numbers = #tpu.dot_dimension_numbers<[1], [0], [0], [1], [0, 0, 1, 1], [], []>} : vector<1x128xf32>, vector<128x128xf32>, vector<1x128xf32> -> vector<1x128xf32>
    %10 = tpu.concatenate %9, %6 in 1 : vector<1x128xf32>, vector<1x128xf32> -> vector<1x256xf32>
    %c0_9 = arith.constant 0 : index
    %c0_10 = arith.constant 0 : index
    %11 = vector.load %arg7[%c0_9, %c0_10] : memref<256x128xf32, #tpu.memory_space<vmem>>, vector<256x128xf32>
    %cst_11 = arith.constant dense<0.000000e+00> : vector<1x128xf32>
    %12 = tpu.matmul %10, %11, %cst_11 {dimension_numbers = #tpu.dot_dimension_numbers<[1], [0], [0], [1], [0, 0, 1, 1], [], []>} : vector<1x256xf32>, vector<256x128xf32>, vector<1x128xf32> -> vector<1x128xf32>
    %c0_12 = arith.constant 0 : index
    %c0_13 = arith.constant 0 : index
    %13 = vector.load %arg8[%c0_12, %c0_13] : memref<1x128xf32, #tpu.memory_space<vmem>>, vector<1x128xf32>
    %14 = arith.addf %12, %13 : vector<1x128xf32>
    %cst_14 = arith.constant dense<0xFF800000> : vector<1xf32>
    %15 = vector.multi_reduction <maximumf>, %14, %cst_14 [1] : vector<1x128xf32> to vector<1xf32>
    %16 = vector.shape_cast %15 : vector<1xf32> to vector<1x1xf32>
    %17 = vector.broadcast %16 : vector<1x1xf32> to vector<1x128xf32>
    %18 = arith.subf %14, %17 : vector<1x128xf32>
    %19 = math.exp %18 : vector<1x128xf32>
    %cst_15 = arith.constant dense<0.000000e+00> : vector<1xf32>
    %20 = vector.multi_reduction <add>, %19, %cst_15 [1] : vector<1x128xf32> to vector<1xf32>
    %21 = vector.shape_cast %20 : vector<1xf32> to vector<1x1xf32>
    %22 = tpu.reciprocal %21 {approx = true} : vector<1x1xf32> -> vector<1x1xf32>
    %23 = vector.broadcast %22 : vector<1x1xf32> to vector<1x128xf32>
    %24 = arith.mulf %19, %23 : vector<1x128xf32>
    %c0_16 = arith.constant 0 : index
    %c0_17 = arith.constant 0 : index
    %25 = vector.load %arg19[%c0_16, %c0_17] : memref<128x128xf32, #tpu.memory_space<vmem>>, vector<128x128xf32>
    %cst_18 = arith.constant dense<0.000000e+00> : vector<1x128xf32>
    %26 = tpu.matmul %24, %25, %cst_18 {dimension_numbers = #tpu.dot_dimension_numbers<[1], [0], [0], [1], [0, 0, 1, 1], [], []>} : vector<1x128xf32>, vector<128x128xf32>, vector<1x128xf32> -> vector<1x128xf32>
    %27 = tpu.concatenate %9, %26 in 1 : vector<1x128xf32>, vector<1x128xf32> -> vector<1x256xf32>
    %c0_19 = arith.constant 0 : index
    %c0_20 = arith.constant 0 : index
    %28 = vector.load %arg9[%c0_19, %c0_20] : memref<256x128xf32, #tpu.memory_space<vmem>>, vector<256x128xf32>
    %cst_21 = arith.constant dense<0.000000e+00> : vector<1x128xf32>
    %29 = tpu.matmul %27, %28, %cst_21 {dimension_numbers = #tpu.dot_dimension_numbers<[1], [0], [0], [1], [0, 0, 1, 1], [], []>} : vector<1x256xf32>, vector<256x128xf32>, vector<1x128xf32> -> vector<1x128xf32>
    %c0_22 = arith.constant 0 : index
    %c0_23 = arith.constant 0 : index
    %30 = vector.load %arg10[%c0_22, %c0_23] : memref<1x128xf32, #tpu.memory_space<vmem>>, vector<1x128xf32>
    %31 = arith.addf %29, %30 : vector<1x128xf32>
    %cst_24 = arith.constant 0.000000e+00 : f32
    %32 = vector.broadcast %cst_24 : f32 to vector<1x128xf32>
    %33 = arith.maximumf %31, %32 : vector<1x128xf32>
    %c0_25 = arith.constant 0 : index
    %c0_26 = arith.constant 0 : index
    %34 = vector.load %arg11[%c0_25, %c0_26] : memref<128x384xf32, #tpu.memory_space<vmem>>, vector<128x384xf32>
    %c0_27 = arith.constant 0 : index
    %c0_28 = arith.constant 0 : index
    %35 = vector.load %arg12[%c0_27, %c0_28] : memref<128x384xf32, #tpu.memory_space<vmem>>, vector<128x384xf32>
    %c0_29 = arith.constant 0 : index
    %c0_30 = arith.constant 0 : index
    %36 = vector.load %arg13[%c0_29, %c0_30] : memref<1x384xf32, #tpu.memory_space<vmem>>, vector<1x384xf32>
    %c0_31 = arith.constant 0 : index
    %c0_32 = arith.constant 0 : index
    %37 = vector.load %arg14[%c0_31, %c0_32] : memref<1x384xf32, #tpu.memory_space<vmem>>, vector<1x384xf32>
    %cst_33 = arith.constant dense<0.000000e+00> : vector<1x384xf32>
    %38 = tpu.matmul %33, %34, %cst_33 {dimension_numbers = #tpu.dot_dimension_numbers<[1], [0], [0], [1], [0, 0, 1, 1], [], []>} : vector<1x128xf32>, vector<128x384xf32>, vector<1x384xf32> -> vector<1x384xf32>
    %39 = arith.addf %38, %36 : vector<1x384xf32>
    %cst_34 = arith.constant dense<0.000000e+00> : vector<1x384xf32>
    %40 = tpu.matmul %6, %35, %cst_34 {dimension_numbers = #tpu.dot_dimension_numbers<[1], [0], [0], [1], [0, 0, 1, 1], [], []>} : vector<1x128xf32>, vector<128x384xf32>, vector<1x384xf32> -> vector<1x384xf32>
    %41 = arith.addf %40, %37 : vector<1x384xf32>
    %42 = vector.extract_strided_slice %39 {offsets = [0, 0], sizes = [1, 128], strides = [1, 1]} : vector<1x384xf32> to vector<1x128xf32>
    %43 = vector.extract_strided_slice %41 {offsets = [0, 0], sizes = [1, 128], strides = [1, 1]} : vector<1x384xf32> to vector<1x128xf32>
    %44 = arith.addf %42, %43 : vector<1x128xf32>
    %cst_35 = arith.constant 0.000000e+00 : f32
    %45 = vector.broadcast %cst_35 : f32 to vector<1x128xf32>
    %46 = arith.subf %45, %44 : vector<1x128xf32>
    %47 = math.exp %46 : vector<1x128xf32>
    %cst_36 = arith.constant 1.000000e+00 : f32
    %48 = vector.broadcast %cst_36 : f32 to vector<1x128xf32>
    %49 = arith.addf %48, %47 : vector<1x128xf32>
    %cst_37 = arith.constant 1.000000e+00 : f32
    %50 = vector.broadcast %cst_37 : f32 to vector<1x128xf32>
    %51 = arith.divf %50, %49 : vector<1x128xf32>
    %52 = vector.extract_strided_slice %39 {offsets = [0, 128], sizes = [1, 128], strides = [1, 1]} : vector<1x384xf32> to vector<1x128xf32>
    %53 = vector.extract_strided_slice %41 {offsets = [0, 128], sizes = [1, 128], strides = [1, 1]} : vector<1x384xf32> to vector<1x128xf32>
    %54 = arith.addf %52, %53 : vector<1x128xf32>
    %cst_38 = arith.constant 0.000000e+00 : f32
    %55 = vector.broadcast %cst_38 : f32 to vector<1x128xf32>
    %56 = arith.subf %55, %54 : vector<1x128xf32>
    %57 = math.exp %56 : vector<1x128xf32>
    %cst_39 = arith.constant 1.000000e+00 : f32
    %58 = vector.broadcast %cst_39 : f32 to vector<1x128xf32>
    %59 = arith.addf %58, %57 : vector<1x128xf32>
    %cst_40 = arith.constant 1.000000e+00 : f32
    %60 = vector.broadcast %cst_40 : f32 to vector<1x128xf32>
    %61 = arith.divf %60, %59 : vector<1x128xf32>
    %62 = vector.extract_strided_slice %39 {offsets = [0, 256], sizes = [1, 128], strides = [1, 1]} : vector<1x384xf32> to vector<1x128xf32>
    %63 = vector.extract_strided_slice %41 {offsets = [0, 256], sizes = [1, 128], strides = [1, 1]} : vector<1x384xf32> to vector<1x128xf32>
    %64 = arith.mulf %51, %63 : vector<1x128xf32>
    %65 = arith.addf %62, %64 : vector<1x128xf32>
    %66 = math.tanh %65 : vector<1x128xf32>
    %cst_41 = arith.constant 1.000000e+00 : f32
    %67 = vector.broadcast %cst_41 : f32 to vector<1x128xf32>
    %68 = arith.subf %67, %61 : vector<1x128xf32>
    %69 = arith.mulf %68, %66 : vector<1x128xf32>
    %70 = arith.mulf %61, %6 : vector<1x128xf32>
    %71 = arith.addf %69, %70 : vector<1x128xf32>
    %c0_42 = arith.constant 0 : index
    %c0_43 = arith.constant 0 : index
    %72 = vector.load %arg15[%c0_42, %c0_43] : memref<128x128xf32, #tpu.memory_space<vmem>>, vector<128x128xf32>
    %cst_44 = arith.constant dense<0.000000e+00> : vector<1x128xf32>
    %73 = tpu.matmul %71, %72, %cst_44 {dimension_numbers = #tpu.dot_dimension_numbers<[1], [0], [0], [1], [0, 0, 1, 1], [], []>} : vector<1x128xf32>, vector<128x128xf32>, vector<1x128xf32> -> vector<1x128xf32>
    %c0_45 = arith.constant 0 : index
    %c0_46 = arith.constant 0 : index
    %74 = vector.load %arg16[%c0_45, %c0_46] : memref<1x128xf32, #tpu.memory_space<vmem>>, vector<1x128xf32>
    %75 = arith.addf %73, %74 : vector<1x128xf32>
    %cst_47 = arith.constant dense<0xFF800000> : vector<1xf32>
    %76 = vector.multi_reduction <maximumf>, %75, %cst_47 [1] : vector<1x128xf32> to vector<1xf32>
    %77 = vector.shape_cast %76 : vector<1xf32> to vector<1x1xf32>
    %78 = vector.broadcast %77 : vector<1x1xf32> to vector<1x128xf32>
    %79 = arith.subf %75, %78 : vector<1x128xf32>
    %80 = math.exp %79 : vector<1x128xf32>
    %cst_48 = arith.constant dense<0.000000e+00> : vector<1xf32>
    %81 = vector.multi_reduction <add>, %80, %cst_48 [1] : vector<1x128xf32> to vector<1xf32>
    %82 = vector.shape_cast %81 : vector<1xf32> to vector<1x1xf32>
    %83 = math.log %82 : vector<1x1xf32>
    %84 = vector.broadcast %83 : vector<1x1xf32> to vector<1x128xf32>
    %85 = arith.subf %79, %84 : vector<1x128xf32>
    %86 = tpu.iota {dimensions = array<i32: 1>} : vector<1x128xi32>
    %87 = arith.sitofp %86 : vector<1x128xi32> to vector<1x128xf32>
    %cst_49 = arith.constant dense<0xFF800000> : vector<1xf32>
    %88 = vector.multi_reduction <maximumf>, %85, %cst_49 [1] : vector<1x128xf32> to vector<1xf32>
    %89 = vector.shape_cast %88 : vector<1xf32> to vector<1x1xf32>
    %90 = vector.broadcast %89 : vector<1x1xf32> to vector<1x128xf32>
    %91 = arith.cmpf oeq, %85, %90 : vector<1x128xf32>
    %cst_50 = arith.constant 1.280000e+02 : f32
    %92 = vector.broadcast %cst_50 : f32 to vector<1x128xf32>
    %93 = arith.select %91, %87, %92 : vector<1x128xi1>, vector<1x128xf32>
    %cst_51 = arith.constant dense<0x7F800000> : vector<1xf32>
    %94 = vector.multi_reduction <minimumf>, %93, %cst_51 [1] : vector<1x128xf32> to vector<1xf32>
    %95 = vector.shape_cast %94 : vector<1xf32> to vector<1x1xf32>
    %96 = vector.broadcast %95 : vector<1x1xf32> to vector<1x128xf32>
    %97 = arith.cmpf oeq, %87, %96 : vector<1x128xf32>
    %98 = arith.extui %97 : vector<1x128xi1> to vector<1x128xi32>
    %99 = arith.sitofp %98 : vector<1x128xi32> to vector<1x128xf32>
    %cst_52 = arith.constant 1.000000e+00 : f32
    %100 = vector.broadcast %cst_52 : f32 to vector<1x1xf32>
    %101 = arith.cmpf oeq, %95, %100 : vector<1x1xf32>
    %102 = arith.extui %101 : vector<1x1xi1> to vector<1x1xi32>
    %103 = arith.sitofp %102 : vector<1x1xi32> to vector<1x1xf32>
    %cst_53 = arith.constant 0.000000e+00 : f32
    %104 = vector.shape_cast %5 : vector<1x1xi1> to vector<1x1xi1>
    %105 = vector.broadcast %104 : vector<1x1xi1> to vector<1x128xi1>
    %106 = vector.broadcast %cst_53 : f32 to vector<1x128xf32>
    %107 = arith.select %105, %85, %106 : vector<1x128xi1>, vector<1x128xf32>
    %c0_54 = arith.constant 0 : index
    %c0_55 = arith.constant 0 : index
    %c0_56 = arith.constant 0 : index
    %108 = vector.load %arg17[%c0_54, %c0_55, %c0_56] : memref<1x1x128xf32, #tpu.memory_space<vmem>>, vector<1x1x128xf32>
    %109 = vector.shape_cast %108 : vector<1x1x128xf32> to vector<1x128xf32>
    %110 = vector.shape_cast %107 : vector<1x128xf32> to vector<1x1x128xf32>
    tpu.vector_store %arg17[%c0_54, %c0_55, %c0_56], %110 {strides = array<i32>} : memref<1x1x128xf32, #tpu.memory_space<vmem>>, vector<1x1x128xf32>,
    %111 = vector.shape_cast %5 : vector<1x1xi1> to vector<1x1xi1>
    %112 = vector.broadcast %111 : vector<1x1xi1> to vector<1x128xi1>
    %113 = arith.select %112, %71, %6 : vector<1x128xi1>, vector<1x128xf32>
    %c0_57 = arith.constant 0 : index
    %c0_58 = arith.constant 0 : index
    %114 = vector.load %arg20[%c0_57, %c0_58] : memref<1x128xf32, #tpu.memory_space<vmem>>, vector<1x128xf32>
    tpu.vector_store %arg20[%c0_57, %c0_58], %113 {strides = array<i32>} : memref<1x128xf32, #tpu.memory_space<vmem>>, vector<1x128xf32>,
    %115 = vector.shape_cast %5 : vector<1x1xi1> to vector<1x1xi1>
    %116 = vector.broadcast %115 : vector<1x1xi1> to vector<1x128xi1>
    %117 = arith.select %116, %99, %7 : vector<1x128xi1>, vector<1x128xf32>
    %c0_59 = arith.constant 0 : index
    %c0_60 = arith.constant 0 : index
    %118 = vector.load %arg21[%c0_59, %c0_60] : memref<1x128xf32, #tpu.memory_space<vmem>>, vector<1x128xf32>
    tpu.vector_store %arg21[%c0_59, %c0_60], %117 {strides = array<i32>} : memref<1x128xf32, #tpu.memory_space<vmem>>, vector<1x128xf32>,
    %c0_i32_61 = arith.constant 0 : i32
    %119 = vector.broadcast %c0_i32_61 : i32 to vector<1x1xi32>
    %c1_i32 = arith.constant 1 : i32
    %120 = arith.addi %arg0, %c1_i32 : i32
    %121 = vector.broadcast %120 : i32 to vector<1x1xi32>
    %122 = arith.addi %119, %121 : vector<1x1xi32>
    %c0_62 = arith.constant 0 : index
    %c0_63 = arith.constant 0 : index
    %123 = vector.load %arg18[%c0_62, %c0_63] : memref<1x1xi32, #tpu.memory_space<vmem>>, vector<1x1xi32>
    %124 = arith.select %5, %122, %123 : vector<1x1xi1>, vector<1x1xi32>
    %c0_64 = arith.constant 0 : index
    %c0_65 = arith.constant 0 : index
    %125 = vector.load %arg18[%c0_64, %c0_65] : memref<1x1xi32, #tpu.memory_space<vmem>>, vector<1x1xi32>
    tpu.vector_store %arg18[%c0_64, %c0_65], %124 {strides = array<i32>} : memref<1x1xi32, #tpu.memory_space<vmem>>, vector<1x1xi32>,
    %c0_66 = arith.constant 0 : index
    %c0_67 = arith.constant 0 : index
    %126 = vector.load %arg22[%c0_66, %c0_67] : memref<1x1xf32, #tpu.memory_space<vmem>>, vector<1x1xf32>
    %127 = arith.maximumf %126, %103 : vector<1x1xf32>
    %c0_68 = arith.constant 0 : index
    %c0_69 = arith.constant 0 : index
    %128 = vector.load %arg22[%c0_68, %c0_69] : memref<1x1xf32, #tpu.memory_space<vmem>>, vector<1x1xf32>
    tpu.vector_store %arg22[%c0_68, %c0_69], %127 {strides = array<i32>} : memref<1x1xf32, #tpu.memory_space<vmem>>, vector<1x1xf32>,
    return
  }
  func.func @transform_0(%arg0: i32) -> (i32, i32) {
    %c0_i32 = arith.constant 0 : i32
    %c0_i32_0 = arith.constant 0 : i32
    %c0_i32_1 = arith.constant 0 : i32
    return %c0_i32, %c0_i32_0 : i32, i32
  }
  func.func @transform_1(%arg0: i32) -> (i32, i32) {
    %c0_i32 = arith.constant 0 : i32
    %c0_i32_0 = arith.constant 0 : i32
    %c0_i32_1 = arith.constant 0 : i32
    return %c0_i32, %c0_i32_0 : i32, i32
  }
  func.func @transform_2(%arg0: i32) -> (i32, i32) {
    %c0_i32 = arith.constant 0 : i32
    %c0_i32_0 = arith.constant 0 : i32
    %c0_i32_1 = arith.constant 0 : i32
    return %c0_i32, %c0_i32_0 : i32, i32
  }
  func.func @transform_3(%arg0: i32) -> (i32, i32) {
    %c0_i32 = arith.constant 0 : i32
    %c0_i32_0 = arith.constant 0 : i32
    %c0_i32_1 = arith.constant 0 : i32
    return %c0_i32, %c0_i32_0 : i32, i32
  }
  func.func @transform_4(%arg0: i32) -> (i32, i32) {
    %c0_i32 = arith.constant 0 : i32
    %c0_i32_0 = arith.constant 0 : i32
    %c0_i32_1 = arith.constant 0 : i32
    return %c0_i32, %c0_i32_0 : i32, i32
  }
  func.func @transform_5(%arg0: i32) -> (i32, i32) {
    %c0_i32 = arith.constant 0 : i32
    %c0_i32_0 = arith.constant 0 : i32
    %c0_i32_1 = arith.constant 0 : i32
    return %c0_i32, %c0_i32_0 : i32, i32
  }
  func.func @transform_6(%arg0: i32) -> (i32, i32) {
    %c0_i32 = arith.constant 0 : i32
    %c0_i32_0 = arith.constant 0 : i32
    %c0_i32_1 = arith.constant 0 : i32
    return %c0_i32, %c0_i32_0 : i32, i32
  }
  func.func @transform_7(%arg0: i32) -> (i32, i32) {
    %c0_i32 = arith.constant 0 : i32
    %c0_i32_0 = arith.constant 0 : i32
    %c0_i32_1 = arith.constant 0 : i32
    return %c0_i32, %c0_i32_0 : i32, i32
  }
  func.func @transform_8(%arg0: i32) -> (i32, i32) {
    %c0_i32 = arith.constant 0 : i32
    %c0_i32_0 = arith.constant 0 : i32
    %c0_i32_1 = arith.constant 0 : i32
    return %c0_i32, %c0_i32_0 : i32, i32
  }
  func.func @transform_9(%arg0: i32) -> (i32, i32) {
    %c0_i32 = arith.constant 0 : i32
    %c0_i32_0 = arith.constant 0 : i32
    %c0_i32_1 = arith.constant 0 : i32
    return %c0_i32, %c0_i32_0 : i32, i32
  }
  func.func @transform_10(%arg0: i32) -> (i32, i32) {
    %c0_i32 = arith.constant 0 : i32
    %c0_i32_0 = arith.constant 0 : i32
    %c0_i32_1 = arith.constant 0 : i32
    return %c0_i32, %c0_i32_0 : i32, i32
  }
  func.func @transform_11(%arg0: i32) -> (i32, i32) {
    %c0_i32 = arith.constant 0 : i32
    %c0_i32_0 = arith.constant 0 : i32
    %c0_i32_1 = arith.constant 0 : i32
    return %c0_i32, %c0_i32_0 : i32, i32
  }
  func.func @transform_12(%arg0: i32) -> (i32, i32) {
    %c0_i32 = arith.constant 0 : i32
    %c0_i32_0 = arith.constant 0 : i32
    %c0_i32_1 = arith.constant 0 : i32
    return %c0_i32, %c0_i32_0 : i32, i32
  }
  func.func @transform_13(%arg0: i32) -> (i32, i32) {
    %c0_i32 = arith.constant 0 : i32
    %c0_i32_0 = arith.constant 0 : i32
    %c0_i32_1 = arith.constant 0 : i32
    return %c0_i32, %c0_i32_0 : i32, i32
  }
  func.func @transform_14(%arg0: i32) -> (i32, i32) {
    %c0_i32 = arith.constant 0 : i32
    %c0_i32_0 = arith.constant 0 : i32
    %c0_i32_1 = arith.constant 0 : i32
    return %c0_i32, %c0_i32_0 : i32, i32
  }
  func.func @transform_15(%arg0: i32) -> (i32, i32) {
    %c0_i32 = arith.constant 0 : i32
    %c0_i32_0 = arith.constant 0 : i32
    %c0_i32_1 = arith.constant 0 : i32
    return %c0_i32, %c0_i32_0 : i32, i32
  }
  func.func @transform_16(%arg0: i32) -> (i32, i32, i32) {
    %c0_i32 = arith.constant 0 : i32
    %c0_i32_0 = arith.constant 0 : i32
    %c0_i32_1 = arith.constant 0 : i32
    return %arg0, %c0_i32, %c0_i32_0 : i32, i32, i32
  }
  func.func @transform_17(%arg0: i32) -> (i32, i32) {
    %c0_i32 = arith.constant 0 : i32
    %c0_i32_0 = arith.constant 0 : i32
    %c0_i32_1 = arith.constant 0 : i32
    return %c0_i32, %c0_i32_0 : i32, i32
  }
}

</mosaic_0001>

<llo_original>
// kernel: tpu_custom_call.1
$region0: #{tpu_custom_call.1}
  #allocation0 [shape = 'u32[]', space=smem, size = 0x4, offset = 0x4, fixed_abs, tag = 'smem constant byte address 0x4 - core index']
  #allocation1 [shape = 'u32[72,128]{1,0:T(1,128)}', space=vmem, size = 0x9000, scoped, tag = 'internal scratch']
  #allocation2 [shape = 'f32[128,128]{1,0:T(8,128)}', space=vmem, size = 0x10000, scoped, tag = 'scratch operand']
  #allocation3 [shape = 'f32[1,128]{1,0:T(1,128)}', space=vmem, size = 0x200, scoped, tag = 'scratch operand']
  #allocation4 [shape = 'f32[1,128]{1,0:T(1,128)}', space=vmem, size = 0x200, scoped, tag = 'scratch operand']
  #allocation5 [shape = 'f32[1,1]{1,0:T(1,128)}', space=vmem, size = 0x200, scoped, tag = 'scratch operand']
  %s0 = inlined_call_operand.hbm [shape: f32[8,128], index: 0, kind: input, shape index: {}]
  %s1 = inlined_call_operand.hbm [shape: f32[128,128], index: 1, kind: input, shape index: {}]
  %s2 = inlined_call_operand.hbm [shape: f32[128,384], index: 2, kind: input, shape index: {}]
  %s3 = inlined_call_operand.hbm [shape: f32[128,384], index: 3, kind: input, shape index: {}]
  %s4 = inlined_call_operand.vmem [shape: f32[1,384], index: 4, kind: input, shape index: {}]
  %s5 = inlined_call_operand.hbm [shape: f32[1,384], index: 5, kind: input, shape index: {}]
  %s6 = inlined_call_operand.hbm [shape: f32[256,128], index: 6, kind: input, shape index: {}]
  %s7 = inlined_call_operand.hbm [shape: f32[1,128], index: 7, kind: input, shape index: {}]
  %s8 = inlined_call_operand.hbm [shape: f32[256,128], index: 8, kind: input, shape index: {}]
  %s9 = inlined_call_operand.hbm [shape: f32[1,128], index: 9, kind: input, shape index: {}]
  %s10 = inlined_call_operand.hbm [shape: f32[128,384], index: 10, kind: input, shape index: {}]
  %s11 = inlined_call_operand.hbm [shape: f32[128,384], index: 11, kind: input, shape index: {}]
  %s12 = inlined_call_operand.vmem [shape: f32[1,384], index: 12, kind: input, shape index: {}]
  %s13 = inlined_call_operand.vmem [shape: f32[1,384], index: 13, kind: input, shape index: {}]
  %s14 = inlined_call_operand.hbm [shape: f32[128,128], index: 14, kind: input, shape index: {}]
  %s15 = inlined_call_operand.vmem [shape: f32[1,128], index: 15, kind: input, shape index: {}]
  %s16 = inlined_call_operand.hbm [shape: f32[8,1,128], index: 16, kind: output, shape index: {0}]
  %s17 = inlined_call_operand.hbm [shape: s32[1,1], index: 17, kind: output, shape index: {1}]
  %18 = xla_tuple %s16, %s17
  %s19 = sld [smem:[#allocation0]]
  $region157: #{tpu_custom_call.1} parent=0
    _
  %s21 = ssub.s32 1, %s19
  %s22 = scalar_select 0, %s21, %s19
  $region1: #{tpu_custom_call.1} parent=0
    #allocation6 [shape = 'u8[4096]{0}', space=vmem, size = 0x1000, scoped, tag = 'input window, operand 0, single buffered']
    #allocation7 [shape = 's32[2]{0}', space=sflag, size = 0x8, scoped, tag = 'scoped memory for tpu_custom_call.1']
    #allocation8 [shape = 's32[2]{0}', space=sflag, size = 0x8, scoped, tag = 'scoped memory for tpu_custom_call.1']
    #allocation9 [shape = 'u8[65536]{0}', space=vmem, size = 0x10000, scoped, tag = 'input window, operand 1, single buffered']
    #allocation10 [shape = 's32[1]{0}', space=sflag, size = 0x4, scoped, tag = 'scoped memory for tpu_custom_call.1']
    #allocation11 [shape = 'u8[196608]{0}', space=vmem, size = 0x30000, scoped, tag = 'input window, operand 2, single buffered']
    #allocation12 [shape = 'u8[196608]{0}', space=vmem, size = 0x30000, scoped, tag = 'input window, operand 3, single buffered']
    #allocation13 [shape = 's32[1]{0}', space=sflag, size = 0x4, scoped, tag = 'scoped memory for tpu_custom_call.1']
    #allocation14 [shape = 'u8[1536]{0}', space=vmem, size = 0x800, scoped, tag = 'input window, operand 5, single buffered']
    #allocation15 [shape = 'u8[131072]{0}', space=vmem, size = 0x20000, scoped, tag = 'input window, operand 6, single buffered']
    #allocation16 [shape = 's32[1]{0}', space=sflag, size = 0x4, scoped, tag = 'scoped memory for tpu_custom_call.1']
    #allocation17 [shape = 'u8[512]{0}', space=vmem, size = 0x400, scoped, tag = 'input window, operand 7, single buffered']
    #allocation18 [shape = 'u8[131072]{0}', space=vmem, size = 0x20000, scoped, tag = 'input window, operand 8, single buffered']
    #allocation19 [shape = 's32[1]{0}', space=sflag, size = 0x4, scoped, tag = 'scoped memory for tpu_custom_call.1']
    #allocation20 [shape = 'u8[512]{0}', space=vmem, size = 0x400, scoped, tag = 'input window, operand 9, single buffered']
    #allocation21 [shape = 'u8[196608]{0}', space=vmem, size = 0x30000, scoped, tag = 'input window, operand 10, single buffered']
    #allocation22 [shape = 's32[1]{0}', space=sflag, size = 0x4, scoped, tag = 'scoped memory for tpu_custom_call.1']
    #allocation23 [shape = 'u8[196608]{0}', space=vmem, size = 0x30000, scoped, tag = 'input window, operand 11, single buffered']
    #allocation24 [shape = 'u8[65536]{0}', space=vmem, size = 0x10000, scoped, tag = 'input window, operand 14, single buffered']
    #allocation25 [shape = 's32[1]{0}', space=sflag, size = 0x4, scoped, tag = 'scoped memory for tpu_custom_call.1']
    #allocation26 [shape = 'u8[1024]{0}', space=vmem, size = 0x400, scoped, tag = 'output window, operand 0']
    #allocation27 [shape = 'u8[512]{0}', space=vmem, size = 0x400, scoped, tag = 'output window, operand 1, single buffered']
    #allocation28 [shape = 's32[1]{0}', space=sflag, size = 0x4, scoped, tag = 'scoped memory for tpu_custom_call.1']
    %23 = vsyncpa [#allocation7], 0
    %24 = vsyncpa [#allocation10], 0
    %25 = vsyncpa [#allocation13], 0
    %26 = vsyncpa [#allocation16], 0
    %27 = vsyncpa [#allocation19], 0
    %28 = vsyncpa [#allocation22], 0
    %29 = vsyncpa [#allocation25], 0
    %30 = vsyncpa [#allocation8], 0
    %s31 = scalar_lea.sflag [#allocation8], 1
    %32 = vsyncpa %s31, 0
    %33 = vsyncpa [#allocation28], 0
    loop: start=0, step=1, limit=10
    $region2: #{tpu_custom_call.1} parent=1 // loop_pre_header
      _
    $region3: #{tpu_custom_call.1} parent=1 // loop_header
      %s35 = sphi 0, %s39
      %p36 = scmp.ge.s32.totalorder %s35, 10
      %s43 = sphi 0, %s43
      %s45 = sphi 0, %s43
      %s46 = sphi 0, %s45
      %s60 = sphi 0, %s46
      %s64 = sphi 0, %s64
      %s66 = sphi 0, %s64
      %s67 = sphi 0, %s66
      %s81 = sphi 0, %s67
      %s85 = sphi 0, %s85
      %s87 = sphi 0, %s85
      %s88 = sphi 0, %s87
      %s102 = sphi 0, %s88
      %s106 = sphi 0, %s106
      %s108 = sphi 0, %s106
      %s109 = sphi 0, %s108
      %s123 = sphi 0, %s109
      %s127 = sphi 0, %s127
      %s129 = sphi 0, %s127
      %s130 = sphi 0, %s129
      %s144 = sphi 0, %s130
      %s148 = sphi 0, %s148
      %s150 = sphi 0, %s148
      %s151 = sphi 0, %s150
      %s165 = sphi 0, %s151
      %s169 = sphi 0, %s169
      %s171 = sphi 0, %s169
      %s172 = sphi 0, %s171
      %s186 = sphi 0, %s172
      %s190 = sphi 0, %s190
      %s192 = sphi 0, %s190
      %s193 = sphi 0, %s192
      %s207 = sphi 0, %s193
      %s211 = sphi 0, %s211
      %s213 = sphi 0, %s211
      %s214 = sphi 0, %s213
      %s228 = sphi 0, %s214
      %s232 = sphi 0, %s232
      %s234 = sphi 0, %s232
      %s235 = sphi 0, %s234
      %s249 = sphi 0, %s235
      %s253 = sphi 0, %s253
      %s255 = sphi 0, %s253
      %s256 = sphi 0, %s255
      %s270 = sphi 0, %s256
      %s274 = sphi 0, %s274
      %s276 = sphi 0, %s274
      %s277 = sphi 0, %s276
      %s291 = sphi 0, %s277
      %s295 = sphi 0, %s295
      %s297 = sphi 0, %s295
      %s298 = sphi 0, %s297
      %s312 = sphi 0, %s298
      %s316 = sphi 0, %s316
      %s318 = sphi 0, %s316
      %s319 = sphi 0, %s318
      %s333 = sphi 0, %s319
      %s337 = sphi 0, %s337
      %s339 = sphi 0, %s337
      %s340 = sphi 0, %s339
      %s354 = sphi 0, %s340
      %s358 = sphi 0, %s358
      %s360 = sphi 0, %s358
      %s361 = sphi 0, %s360
      %s375 = sphi 0, %s361
      %s381 = sphi 0, %s383
      %s384 = sphi 0, %s381
      %s385 = sphi 0, %s384
      %s401 = sphi 0, %s385
      %s405 = sphi 0, %s405
      %s407 = sphi 0, %s405
      %s408 = sphi 0, %s407
      %s422 = sphi 0, %s408
    $region4: #{tpu_custom_call.1} parent=1 // loop_header_branch
      %38 = sbr.rel (%p36) target = $region8
    $region5: #{tpu_custom_call.1} parent=1 // loop_body
      %s40 = ssub.s32 %s35, 1
      %s41 = ssub.s32 %s35, 2
      %s42 = sadd.s32 %s35, 1
      %s44 = sadd.s32 %s43, 1
      %p47 = scmp.eq.s32.totalorder %s35, 7
      %p48 = scmp.ne.s32.totalorder %s43, %s45
      %p49 = scmp.eq.s32.totalorder %s35, 0
      %p50 = por %p48, %p49
      %p51 = scmp.ne.s32.totalorder %s43, %s45
      %p52 = scmp.eq.s32.totalorder %s40, 7
      %p53 = por %p51, %p52
      %p54 = scmp.ne.s32.totalorder %s45, %s46
      %p55 = scmp.eq.s32.totalorder %s40, 0
      %p56 = por %p54, %p55
      %p57 = scmp.ne.s32.totalorder %s45, %s46
      %p58 = scmp.eq.s32.totalorder %s41, 7
      %p59 = por %p57, %p58
      %p61 = scmp.ne.s32.totalorder %s46, %s60
      %p62 = scmp.eq.s32.totalorder %s41, 0
      %p63 = por %p61, %p62
      %s65 = sadd.s32 %s64, 1
      %p68 = scmp.eq.s32.totalorder %s35, 7
      %p69 = scmp.ne.s32.totalorder %s64, %s66
      %p70 = scmp.eq.s32.totalorder %s35, 0
      %p71 = por %p69, %p70
      %p72 = scmp.ne.s32.totalorder %s64, %s66
      %p73 = scmp.eq.s32.totalorder %s40, 7
      %p74 = por %p72, %p73
      %p75 = scmp.ne.s32.totalorder %s66, %s67
      %p76 = scmp.eq.s32.totalorder %s40, 0
      %p77 = por %p75, %p76
      %p78 = scmp.ne.s32.totalorder %s66, %s67
      %p79 = scmp.eq.s32.totalorder %s41, 7
      %p80 = por %p78, %p79
      %p82 = scmp.ne.s32.totalorder %s67, %s81
      %p83 = scmp.eq.s32.totalorder %s41, 0
      %p84 = por %p82, %p83
      %s86 = sadd.s32 %s85, 1
      %p89 = scmp.eq.s32.totalorder %s35, 7
      %p90 = scmp.ne.s32.totalorder %s85, %s87
      %p91 = scmp.eq.s32.totalorder %s35, 0
      %p92 = por %p90, %p91
      %p93 = scmp.ne.s32.totalorder %s85, %s87
      %p94 = scmp.eq.s32.totalorder %s40, 7
      %p95 = por %p93, %p94
      %p96 = scmp.ne.s32.totalorder %s87, %s88
      %p97 = scmp.eq.s32.totalorder %s40, 0
      %p98 = por %p96, %p97
      %p99 = scmp.ne.s32.totalorder %s87, %s88
      %p100 = scmp.eq.s32.totalorder %s41, 7
      %p101 = por %p99, %p100
      %p103 = scmp.ne.s32.totalorder %s88, %s102
      %p104 = scmp.eq.s32.totalorder %s41, 0
      %p105 = por %p103, %p104
      %s107 = sadd.s32 %s106, 1
      %p110 = scmp.eq.s32.totalorder %s35, 7
      %p111 = scmp.ne.s32.totalorder %s106, %s108
      %p112 = scmp.eq.s32.totalorder %s35, 0
      %p113 = por %p111, %p112
      %p114 = scmp.ne.s32.totalorder %s106, %s108
      %p115 = scmp.eq.s32.totalorder %s40, 7
      %p116 = por %p114, %p115
      %p117 = scmp.ne.s32.totalorder %s108, %s109
      %p118 = scmp.eq.s32.totalorder %s40, 0
      %p119 = por %p117, %p118
      %p120 = scmp.ne.s32.totalorder %s108, %s109
      %p121 = scmp.eq.s32.totalorder %s41, 7
      %p122 = por %p120, %p121
      %p124 = scmp.ne.s32.totalorder %s109, %s123
      %p125 = scmp.eq.s32.totalorder %s41, 0
      %p126 = por %p124, %p125
      %s128 = sadd.s32 %s127, 1
      %p131 = scmp.eq.s32.totalorder %s35, 7
      %p132 = scmp.ne.s32.totalorder %s127, %s129
      %p133 = scmp.eq.s32.totalorder %s35, 0
      %p134 = por %p132, %p133
      %p135 = scmp.ne.s32.totalorder %s127, %s129
      %p136 = scmp.eq.s32.totalorder %s40, 7
      %p137 = por %p135, %p136
      %p138 = scmp.ne.s32.totalorder %s129, %s130
      %p139 = scmp.eq.s32.totalorder %s40, 0
      %p140 = por %p138, %p139
      %p141 = scmp.ne.s32.totalorder %s129, %s130
      %p142 = scmp.eq.s32.totalorder %s41, 7
      %p143 = por %p141, %p142
      %p145 = scmp.ne.s32.totalorder %s130, %s144
      %p146 = scmp.eq.s32.totalorder %s41, 0
      %p147 = por %p145, %p146
      %s149 = sadd.s32 %s148, 1
      %p152 = scmp.eq.s32.totalorder %s35, 7
      %p153 = scmp.ne.s32.totalorder %s148, %s150
      %p154 = scmp.eq.s32.totalorder %s35, 0
      %p155 = por %p153, %p154
      %p156 = scmp.ne.s32.totalorder %s148, %s150
      %p157 = scmp.eq.s32.totalorder %s40, 7
      %p158 = por %p156, %p157
      %p159 = scmp.ne.s32.totalorder %s150, %s151
      %p160 = scmp.eq.s32.totalorder %s40, 0
      %p161 = por %p159, %p160
      %p162 = scmp.ne.s32.totalorder %s150, %s151
      %p163 = scmp.eq.s32.totalorder %s41, 7
      %p164 = por %p162, %p163
      %p166 = scmp.ne.s32.totalorder %s151, %s165
      %p167 = scmp.eq.s32.totalorder %s41, 0
      %p168 = por %p166, %p167
      %s170 = sadd.s32 %s169, 1
      %p173 = scmp.eq.s32.totalorder %s35, 7
      %p174 = scmp.ne.s32.totalorder %s169, %s171
      %p175 = scmp.eq.s32.totalorder %s35, 0
      %p176 = por %p174, %p175
      %p177 = scmp.ne.s32.totalorder %s169, %s171
      %p178 = scmp.eq.s32.totalorder %s40, 7
      %p179 = por %p177, %p178
      %p180 = scmp.ne.s32.totalorder %s171, %s172
      %p181 = scmp.eq.s32.totalorder %s40, 0
      %p182 = por %p180, %p181
      %p183 = scmp.ne.s32.totalorder %s171, %s172
      %p184 = scmp.eq.s32.totalorder %s41, 7
      %p185 = por %p183, %p184
      %p187 = scmp.ne.s32.totalorder %s172, %s186
      %p188 = scmp.eq.s32.totalorder %s41, 0
      %p189 = por %p187, %p188
      %s191 = sadd.s32 %s190, 1
      %p194 = scmp.eq.s32.totalorder %s35, 7
      %p195 = scmp.ne.s32.totalorder %s190, %s192
      %p196 = scmp.eq.s32.totalorder %s35, 0
      %p197 = por %p195, %p196
      %p198 = scmp.ne.s32.totalorder %s190, %s192
      %p199 = scmp.eq.s32.totalorder %s40, 7
      %p200 = por %p198, %p199
      %p201 = scmp.ne.s32.totalorder %s192, %s193
      %p202 = scmp.eq.s32.totalorder %s40, 0
      %p203 = por %p201, %p202
      %p204 = scmp.ne.s32.totalorder %s192, %s193
      %p205 = scmp.eq.s32.totalorder %s41, 7
      %p206 = por %p204, %p205
      %p208 = scmp.ne.s32.totalorder %s193, %s207
      %p209 = scmp.eq.s32.totalorder %s41, 0
      %p210 = por %p208, %p209
      %s212 = sadd.s32 %s211, 1
      %p215 = scmp.eq.s32.totalorder %s35, 7
      %p216 = scmp.ne.s32.totalorder %s211, %s213
      %p217 = scmp.eq.s32.totalorder %s35, 0
      %p218 = por %p216, %p217
      %p219 = scmp.ne.s32.totalorder %s211, %s213
      %p220 = scmp.eq.s32.totalorder %s40, 7
      %p221 = por %p219, %p220
      %p222 = scmp.ne.s32.totalorder %s213, %s214
      %p223 = scmp.eq.s32.totalorder %s40, 0
      %p224 = por %p222, %p223
      %p225 = scmp.ne.s32.totalorder %s213, %s214
      %p226 = scmp.eq.s32.totalorder %s41, 7
      %p227 = por %p225, %p226
      %p229 = scmp.ne.s32.totalorder %s214, %s228
      %p230 = scmp.eq.s32.totalorder %s41, 0
      %p231 = por %p229, %p230
      %s233 = sadd.s32 %s232, 1
      %p236 = scmp.eq.s32.totalorder %s35, 7
      %p237 = scmp.ne.s32.totalorder %s232, %s234
      %p238 = scmp.eq.s32.totalorder %s35, 0
      %p239 = por %p237, %p238
      %p240 = scmp.ne.s32.totalorder %s232, %s234
      %p241 = scmp.eq.s32.totalorder %s40, 7
      %p242 = por %p240, %p241
      %p243 = scmp.ne.s32.totalorder %s234, %s235
      %p244 = scmp.eq.s32.totalorder %s40, 0
      %p245 = por %p243, %p244
      %p246 = scmp.ne.s32.totalorder %s234, %s235
      %p247 = scmp.eq.s32.totalorder %s41, 7
      %p248 = por %p246, %p247
      %p250 = scmp.ne.s32.totalorder %s235, %s249
      %p251 = scmp.eq.s32.totalorder %s41, 0
      %p252 = por %p250, %p251
      %s254 = sadd.s32 %s253, 1
      %p257 = scmp.eq.s32.totalorder %s35, 7
      %p258 = scmp.ne.s32.totalorder %s253, %s255
      %p259 = scmp.eq.s32.totalorder %s35, 0
      %p260 = por %p258, %p259
      %p261 = scmp.ne.s32.totalorder %s253, %s255
      %p262 = scmp.eq.s32.totalorder %s40, 7
      %p263 = por %p261, %p262
      %p264 = scmp.ne.s32.totalorder %s255, %s256
      %p265 = scmp.eq.s32.totalorder %s40, 0
      %p266 = por %p264, %p265
      %p267 = scmp.ne.s32.totalorder %s255, %s256
      %p268 = scmp.eq.s32.totalorder %s41, 7
      %p269 = por %p267, %p268
      %p271 = scmp.ne.s32.totalorder %s256, %s270
      %p272 = scmp.eq.s32.totalorder %s41, 0
      %p273 = por %p271, %p272
      %s275 = sadd.s32 %s274, 1
      %p278 = scmp.eq.s32.totalorder %s35, 7
      %p279 = scmp.ne.s32.totalorder %s274, %s276
      %p280 = scmp.eq.s32.totalorder %s35, 0
      %p281 = por %p279, %p280
      %p282 = scmp.ne.s32.totalorder %s274, %s276
      %p283 = scmp.eq.s32.totalorder %s40, 7
      %p284 = por %p282, %p283
      %p285 = scmp.ne.s32.totalorder %s276, %s277
      %p286 = scmp.eq.s32.totalorder %s40, 0
      %p287 = por %p285, %p286
      %p288 = scmp.ne.s32.totalorder %s276, %s277
      %p289 = scmp.eq.s32.totalorder %s41, 7
      %p290 = por %p288, %p289
      %p292 = scmp.ne.s32.totalorder %s277, %s291
      %p293 = scmp.eq.s32.totalorder %s41, 0
      %p294 = por %p292, %p293
      %s296 = sadd.s32 %s295, 1
      %p299 = scmp.eq.s32.totalorder %s35, 7
      %p300 = scmp.ne.s32.totalorder %s295, %s297
      %p301 = scmp.eq.s32.totalorder %s35, 0
      %p302 = por %p300, %p301
      %p303 = scmp.ne.s32.totalorder %s295, %s297
      %p304 = scmp.eq.s32.totalorder %s40, 7
      %p305 = por %p303, %p304
      %p306 = scmp.ne.s32.totalorder %s297, %s298
      %p307 = scmp.eq.s32.totalorder %s40, 0
      %p308 = por %p306, %p307
      %p309 = scmp.ne.s32.totalorder %s297, %s298
      %p310 = scmp.eq.s32.totalorder %s41, 7
      %p311 = por %p309, %p310
      %p313 = scmp.ne.s32.totalorder %s298, %s312
      %p314 = scmp.eq.s32.totalorder %s41, 0
      %p315 = por %p313, %p314
      %s317 = sadd.s32 %s316, 1
      %p320 = scmp.eq.s32.totalorder %s35, 7
      %p321 = scmp.ne.s32.totalorder %s316, %s318
      %p322 = scmp.eq.s32.totalorder %s35, 0
      %p323 = por %p321, %p322
      %p324 = scmp.ne.s32.totalorder %s316, %s318
      %p325 = scmp.eq.s32.totalorder %s40, 7
      %p326 = por %p324, %p325
      %p327 = scmp.ne.s32.totalorder %s318, %s319
      %p328 = scmp.eq.s32.totalorder %s40, 0
      %p329 = por %p327, %p328
      %p330 = scmp.ne.s32.totalorder %s318, %s319
      %p331 = scmp.eq.s32.totalorder %s41, 7
      %p332 = por %p330, %p331
      %p334 = scmp.ne.s32.totalorder %s319, %s333
      %p335 = scmp.eq.s32.totalorder %s41, 0
      %p336 = por %p334, %p335
      %s338 = sadd.s32 %s337, 1
      %p341 = scmp.eq.s32.totalorder %s35, 7
      %p342 = scmp.ne.s32.totalorder %s337, %s339
      %p343 = scmp.eq.s32.totalorder %s35, 0
      %p344 = por %p342, %p343
      %p345 = scmp.ne.s32.totalorder %s337, %s339
      %p346 = scmp.eq.s32.totalorder %s40, 7
      %p347 = por %p345, %p346
      %p348 = scmp.ne.s32.totalorder %s339, %s340
      %p349 = scmp.eq.s32.totalorder %s40, 0
      %p350 = por %p348, %p349
      %p351 = scmp.ne.s32.totalorder %s339, %s340
      %p352 = scmp.eq.s32.totalorder %s41, 7
      %p353 = por %p351, %p352
      %p355 = scmp.ne.s32.totalorder %s340, %s354
      %p356 = scmp.eq.s32.totalorder %s41, 0
      %p357 = por %p355, %p356
      %s359 = sadd.s32 %s358, 1
      %p362 = scmp.eq.s32.totalorder %s35, 7
      %p363 = scmp.ne.s32.totalorder %s358, %s360
      %p364 = scmp.eq.s32.totalorder %s35, 0
      %p365 = por %p363, %p364
      %p366 = scmp.ne.s32.totalorder %s358, %s360
      %p367 = scmp.eq.s32.totalorder %s40, 7
      %p368 = por %p366, %p367
      %p369 = scmp.ne.s32.totalorder %s360, %s361
      %p370 = scmp.eq.s32.totalorder %s40, 0
      %p371 = por %p369, %p370
      %p372 = scmp.ne.s32.totalorder %s360, %s361
      %p373 = scmp.eq.s32.totalorder %s41, 7
      %p374 = por %p372, %p373
      %p376 = scmp.ne.s32.totalorder %s361, %s375
      %p377 = scmp.eq.s32.totalorder %s41, 0
      %p378 = por %p376, %p377
      %s379 = ssub.s32 %s35, %s42
      %p380 = scmp.eq.s32.totalorder %s379, 0
      %s382 = sadd.s32 %s381, 1
      %s383 = scalar_select %p380, %s381, %s382
      %p386 = pneg %p380
      %p387 = scmp.eq.s32.totalorder %s35, 7
      %p388 = por %p386, %p387
      %p389 = scmp.ne.s32.totalorder %s381, %s384
      %p390 = scmp.eq.s32.totalorder %s35, 0
      %p391 = por %p389, %p390
      %p392 = scmp.ne.s32.totalorder %s381, %s384
      %p393 = scmp.eq.s32.totalorder %s40, 7
      %p394 = por %p392, %p393
      %p395 = scmp.ne.s32.totalorder %s384, %s385
      %p396 = scmp.eq.s32.totalorder %s40, 0
      %p397 = por %p395, %p396
      %p398 = scmp.ne.s32.totalorder %s384, %s385
      %p399 = scmp.eq.s32.totalorder %s41, 7
      %p400 = por %p398, %p399
      %p402 = scmp.ne.s32.totalorder %s385, %s401
      %p403 = scmp.eq.s32.totalorder %s41, 0
      %p404 = por %p402, %p403
      %s406 = sadd.s32 %s405, 1
      %p409 = scmp.eq.s32.totalorder %s35, 7
      %p410 = scmp.ne.s32.totalorder %s405, %s407
      %p411 = scmp.eq.s32.totalorder %s35, 0
      %p412 = por %p410, %p411
      %p413 = scmp.ne.s32.totalorder %s405, %s407
      %p414 = scmp.eq.s32.totalorder %s40, 7
      %p415 = por %p413, %p414
      %p416 = scmp.ne.s32.totalorder %s407, %s408
      %p417 = scmp.eq.s32.totalorder %s40, 0
      %p418 = por %p416, %p417
      %p419 = scmp.ne.s32.totalorder %s407, %s408
      %p420 = scmp.eq.s32.totalorder %s41, 7
      %p421 = por %p419, %p420
      %p423 = scmp.ne.s32.totalorder %s408, %s422
      %p424 = scmp.eq.s32.totalorder %s41, 0
      %p425 = por %p423, %p424
      %p426 = scmp.le.s32.totalorder 1, %s35
      %p427 = scmp.lt.s32.totalorder %s35, 9
      %p428 = pnand %p426, %p427
      %p429 = pneg %p428
      // Predicated region
      $region9: #{tpu_custom_call.1} parent=5 // pred_check
        _
      $region10: #{tpu_custom_call.1} parent=5 // pred_check_branch
        %431 = sbr.rel (%p428) target = $region12
      $region11: #{tpu_custom_call.1} parent=5 // pred_region
        %s432 = ssub.s32 %s35, 1
        // Predicated region
        $region13: #{tpu_custom_call.1} parent=11 // pred_check
          %p433 = pneg %p56
        $region14: #{tpu_custom_call.1} parent=11 // pred_check_branch
          %435 = sbr.rel (%p433) target = $region16
        $region15: #{tpu_custom_call.1} parent=11 // pred_region
          %437 = vsyncadd [#allocation7], 0
          %s439 = sshll.u32 %s0, 4
          %s440 = int_to_ptr.hbm [resolvable:$true] %s439
          %s441 = sshll.u32 [#allocation6], 4
          %s442 = int_to_ptr.vmem [resolvable:$true] %s441
          %444 = dma.hbm_to_vmem [thread:$0]  %s440, 128, %s442, [#allocation7]
        $region16: #{tpu_custom_call.1} parent=11 // pred_fallthru
          _
        // Predicated region
        $region17: #{tpu_custom_call.1} parent=11 // pred_check
          %p445 = pneg %p77
        $region18: #{tpu_custom_call.1} parent=11 // pred_check_branch
          %447 = sbr.rel (%p445) target = $region20
        $region19: #{tpu_custom_call.1} parent=11 // pred_region
          %449 = vsyncadd [#allocation10], 0
          %s450 = sshll.u32 %s1, 4
          %s451 = int_to_ptr.hbm [resolvable:$true] %s450
          %s452 = sshll.u32 [#allocation9], 4
          %s453 = int_to_ptr.vmem [resolvable:$true] %s452
          %458 = dma.hbm_to_vmem [thread:$0]  %s451, 2048, %s453, [#allocation10], 128, 128, 8
        $region20: #{tpu_custom_call.1} parent=11 // pred_fallthru
          _
        // Predicated region
        $region21: #{tpu_custom_call.1} parent=11 // pred_check
          %p459 = pneg %p98
        $region22: #{tpu_custom_call.1} parent=11 // pred_check_branch
          %461 = sbr.rel (%p459) target = $region24
        $region23: #{tpu_custom_call.1} parent=11 // pred_region
          %463 = vsyncadd [#allocation10], 0
          %s464 = sshll.u32 %s2, 4
          %s465 = int_to_ptr.hbm [resolvable:$true] %s464
          %s466 = sshll.u32 [#allocation11], 4
          %s467 = int_to_ptr.vmem [resolvable:$true] %s466
          %472 = dma.hbm_to_vmem [thread:$0]  %s465, 6144, %s467, [#allocation10], 384, 384, 24
        $region24: #{tpu_custom_call.1} parent=11 // pred_fallthru
          _
        // Predicated region
        $region25: #{tpu_custom_call.1} parent=11 // pred_check
          %p473 = pneg %p119
        $region26: #{tpu_custom_call.1} parent=11 // pred_check_branch
          %475 = sbr.rel (%p473) target = $region28
        $region27: #{tpu_custom_call.1} parent=11 // pred_region
          %477 = vsyncadd [#allocation13], 0
          %s478 = sshll.u32 %s3, 4
          %s479 = int_to_ptr.hbm [resolvable:$true] %s478
          %s480 = sshll.u32 [#allocation12], 4
          %s481 = int_to_ptr.vmem [resolvable:$true] %s480
          %486 = dma.hbm_to_vmem [thread:$0]  %s479, 6144, %s481, [#allocation13], 384, 384, 24
        $region28: #{tpu_custom_call.1} parent=11 // pred_fallthru
          _
        // Predicated region
        $region29: #{tpu_custom_call.1} parent=11 // pred_check
          %p487 = pneg %p140
        $region30: #{tpu_custom_call.1} parent=11 // pred_check_branch
          %489 = sbr.rel (%p487) target = $region32
        $region31: #{tpu_custom_call.1} parent=11 // pred_region
          _
        $region32: #{tpu_custom_call.1} parent=11 // pred_fallthru
          _
        // Predicated region
        $region33: #{tpu_custom_call.1} parent=11 // pred_check
          %p490 = pneg %p161
        $region34: #{tpu_custom_call.1} parent=11 // pred_check_branch
          %492 = sbr.rel (%p490) target = $region36
        $region35: #{tpu_custom_call.1} parent=11 // pred_region
          %494 = vsyncadd [#allocation13], 0
          %s496 = sshll.u32 %s5, 4
          %s497 = int_to_ptr.hbm [resolvable:$true] %s496
          %s498 = sshll.u32 [#allocation14], 4
          %s499 = int_to_ptr.vmem [resolvable:$true] %s498
          %501 = dma.hbm_to_vmem [thread:$0]  %s497, 48, %s499, [#allocation13]
        $region36: #{tpu_custom_call.1} parent=11 // pred_fallthru
          _
        // Predicated region
        $region37: #{tpu_custom_call.1} parent=11 // pred_check
          %p502 = pneg %p182
        $region38: #{tpu_custom_call.1} parent=11 // pred_check_branch
          %504 = sbr.rel (%p502) target = $region40
        $region39: #{tpu_custom_call.1} parent=11 // pred_region
          %506 = vsyncadd [#allocation16], 0
          %s507 = sshll.u32 %s6, 4
          %s508 = int_to_ptr.hbm [resolvable:$true] %s507
          %s509 = sshll.u32 [#allocation15], 4
          %s510 = int_to_ptr.vmem [resolvable:$true] %s509
          %515 = dma.hbm_to_vmem [thread:$0]  %s508, 4096, %s510, [#allocation16], 128, 128, 8
        $region40: #{tpu_custom_call.1} parent=11 // pred_fallthru
          _
        // Predicated region
        $region41: #{tpu_custom_call.1} parent=11 // pred_check
          %p516 = pneg %p203
        $region42: #{tpu_custom_call.1} parent=11 // pred_check_branch
          %518 = sbr.rel (%p516) target = $region44
        $region43: #{tpu_custom_call.1} parent=11 // pred_region
          %520 = vsyncadd [#allocation16], 0
          %s522 = sshll.u32 %s7, 4
          %s523 = int_to_ptr.hbm [resolvable:$true] %s522
          %s524 = sshll.u32 [#allocation17], 4
          %s525 = int_to_ptr.vmem [resolvable:$true] %s524
          %527 = dma.hbm_to_vmem [thread:$0]  %s523, 16, %s525, [#allocation16]
        $region44: #{tpu_custom_call.1} parent=11 // pred_fallthru
          _
        // Predicated region
        $region45: #{tpu_custom_call.1} parent=11 // pred_check
          %p528 = pneg %p224
        $region46: #{tpu_custom_call.1} parent=11 // pred_check_branch
          %530 = sbr.rel (%p528) target = $region48
        $region47: #{tpu_custom_call.1} parent=11 // pred_region
          %532 = vsyncadd [#allocation19], 0
          %s533 = sshll.u32 %s8, 4
          %s534 = int_to_ptr.hbm [resolvable:$true] %s533
          %s535 = sshll.u32 [#allocation18], 4
          %s536 = int_to_ptr.vmem [resolvable:$true] %s535
          %541 = dma.hbm_to_vmem [thread:$0]  %s534, 4096, %s536, [#allocation19], 128, 128, 8
        $region48: #{tpu_custom_call.1} parent=11 // pred_fallthru
          _
        // Predicated region
        $region49: #{tpu_custom_call.1} parent=11 // pred_check
          %p542 = pneg %p245
        $region50: #{tpu_custom_call.1} parent=11 // pred_check_branch
          %544 = sbr.rel (%p542) target = $region52
        $region51: #{tpu_custom_call.1} parent=11 // pred_region
          %546 = vsyncadd [#allocation19], 0
          %s548 = sshll.u32 %s9, 4
          %s549 = int_to_ptr.hbm [resolvable:$true] %s548
          %s550 = sshll.u32 [#allocation20], 4
          %s551 = int_to_ptr.vmem [resolvable:$true] %s550
          %553 = dma.hbm_to_vmem [thread:$0]  %s549, 16, %s551, [#allocation19]
        $region52: #{tpu_custom_call.1} parent=11 // pred_fallthru
          _
        // Predicated region
        $region53: #{tpu_custom_call.1} parent=11 // pred_check
          %p554 = pneg %p266
        $region54: #{tpu_custom_call.1} parent=11 // pred_check_branch
          %556 = sbr.rel (%p554) target = $region56
        $region55: #{tpu_custom_call.1} parent=11 // pred_region
          %558 = vsyncadd [#allocation22], 0
          %s559 = sshll.u32 %s10, 4
          %s560 = int_to_ptr.hbm [resolvable:$true] %s559
          %s561 = sshll.u32 [#allocation21], 4
          %s562 = int_to_ptr.vmem [resolvable:$true] %s561
          %567 = dma.hbm_to_vmem [thread:$0]  %s560, 6144, %s562, [#allocation22], 384, 384, 24
        $region56: #{tpu_custom_call.1} parent=11 // pred_fallthru
          _
        // Predicated region
        $region57: #{tpu_custom_call.1} parent=11 // pred_check
          %p568 = pneg %p287
        $region58: #{tpu_custom_call.1} parent=11 // pred_check_branch
          %570 = sbr.rel (%p568) target = $region60
        $region59: #{tpu_custom_call.1} parent=11 // pred_region
          %572 = vsyncadd [#allocation22], 0
          %s573 = sshll.u32 %s11, 4
          %s574 = int_to_ptr.hbm [resolvable:$true] %s573
          %s575 = sshll.u32 [#allocation23], 4
          %s576 = int_to_ptr.vmem [resolvable:$true] %s575
          %581 = dma.hbm_to_vmem [thread:$0]  %s574, 6144, %s576, [#allocation22], 384, 384, 24
        $region60: #{tpu_custom_call.1} parent=11 // pred_fallthru
          _
        // Predicated region
        $region61: #{tpu_custom_call.1} parent=11 // pred_check
          %p582 = pneg %p308
        $region62: #{tpu_custom_call.1} parent=11 // pred_check_branch
          %584 = sbr.rel (%p582) target = $region64
        $region63: #{tpu_custom_call.1} parent=11 // pred_region
          _
        $region64: #{tpu_custom_call.1} parent=11 // pred_fallthru
          _
        // Predicated region
        $region65: #{tpu_custom_call.1} parent=11 // pred_check
          %p585 = pneg %p329
        $region66: #{tpu_custom_call.1} parent=11 // pred_check_branch
          %587 = sbr.rel (%p585) target = $region68
        $region67: #{tpu_custom_call.1} parent=11 // pred_region
          _
        $region68: #{tpu_custom_call.1} parent=11 // pred_fallthru
          _
        // Predicated region
        $region69: #{tpu_custom_call.1} parent=11 // pred_check
          %p588 = pneg %p350
        $region70: #{tpu_custom_call.1} parent=11 // pred_check_branch
          %590 = sbr.rel (%p588) target = $region72
        $region71: #{tpu_custom_call.1} parent=11 // pred_region
          %592 = vsyncadd [#allocation25], 0
          %s593 = sshll.u32 %s14, 4
          %s594 = int_to_ptr.hbm [resolvable:$true] %s593
          %s595 = sshll.u32 [#allocation24], 4
          %s596 = int_to_ptr.vmem [resolvable:$true] %s595
          %601 = dma.hbm_to_vmem [thread:$0]  %s594, 2048, %s596, [#allocation25], 128, 128, 8
        $region72: #{tpu_custom_call.1} parent=11 // pred_fallthru
          _
        // Predicated region
        $region73: #{tpu_custom_call.1} parent=11 // pred_check
          %p602 = pneg %p371
        $region74: #{tpu_custom_call.1} parent=11 // pred_check_branch
          %604 = sbr.rel (%p602) target = $region76
        $region75: #{tpu_custom_call.1} parent=11 // pred_region
          _
        $region76: #{tpu_custom_call.1} parent=11 // pred_fallthru
          _
      $region12: #{tpu_custom_call.1} parent=5 // pred_fallthru
        _
      %p605 = scmp.lt.s32.totalorder %s35, 8
      // Predicated region
      $region77: #{tpu_custom_call.1} parent=5 // pred_check
        %p606 = pneg %p605
      $region78: #{tpu_custom_call.1} parent=5 // pred_check_branch
        %608 = sbr.rel (%p606) target = $region80
      $region79: #{tpu_custom_call.1} parent=5 // pred_region
        _
      $region80: #{tpu_custom_call.1} parent=5 // pred_fallthru
        _
      %p609 = scmp.le.s32.totalorder 1, %s35
      %p610 = scmp.lt.s32.totalorder %s35, 9
      %p611 = pnand %p609, %p610
      %p612 = pneg %p611
      // Predicated region
      $region81: #{tpu_custom_call.1} parent=5 // pred_check
        _
      $region82: #{tpu_custom_call.1} parent=5 // pred_check_branch
        %614 = sbr.rel (%p611) target = $region84
      $region83: #{tpu_custom_call.1} parent=5 // pred_region
        %s615 = ssub.s32 %s35, 1
        // Predicated region
        $region85: #{tpu_custom_call.1} parent=83 // pred_check
          %p616 = pneg %p56
        $region86: #{tpu_custom_call.1} parent=83 // pred_check_branch
          %618 = sbr.rel (%p616) target = $region88
        $region87: #{tpu_custom_call.1} parent=83 // pred_region
          %620 = dma.done [#allocation7], 128
        $region88: #{tpu_custom_call.1} parent=83 // pred_fallthru
          _
        // Predicated region
        $region89: #{tpu_custom_call.1} parent=83 // pred_check
          %p621 = pneg %p77
        $region90: #{tpu_custom_call.1} parent=83 // pred_check_branch
          %623 = sbr.rel (%p621) target = $region92
        $region91: #{tpu_custom_call.1} parent=83 // pred_region
          %625 = dma.done [#allocation10], 2048
        $region92: #{tpu_custom_call.1} parent=83 // pred_fallthru
          _
        // Predicated region
        $region93: #{tpu_custom_call.1} parent=83 // pred_check
          %p626 = pneg %p98
        $region94: #{tpu_custom_call.1} parent=83 // pred_check_branch
          %628 = sbr.rel (%p626) target = $region96
        $region95: #{tpu_custom_call.1} parent=83 // pred_region
          %630 = dma.done [#allocation10], 6144
        $region96: #{tpu_custom_call.1} parent=83 // pred_fallthru
          _
        // Predicated region
        $region97: #{tpu_custom_call.1} parent=83 // pred_check
          %p631 = pneg %p119
        $region98: #{tpu_custom_call.1} parent=83 // pred_check_branch
          %633 = sbr.rel (%p631) target = $region100
        $region99: #{tpu_custom_call.1} parent=83 // pred_region
          %635 = dma.done [#allocation13], 6144
        $region100: #{tpu_custom_call.1} parent=83 // pred_fallthru
          _
        // Predicated region
        $region101: #{tpu_custom_call.1} parent=83 // pred_check
          %p636 = pneg %p161
        $region102: #{tpu_custom_call.1} parent=83 // pred_check_branch
          %638 = sbr.rel (%p636) target = $region104
        $region103: #{tpu_custom_call.1} parent=83 // pred_region
          %640 = dma.done [#allocation13], 48
        $region104: #{tpu_custom_call.1} parent=83 // pred_fallthru
          _
        // Predicated region
        $region105: #{tpu_custom_call.1} parent=83 // pred_check
          %p641 = pneg %p182
        $region106: #{tpu_custom_call.1} parent=83 // pred_check_branch
          %643 = sbr.rel (%p641) target = $region108
        $region107: #{tpu_custom_call.1} parent=83 // pred_region
          %645 = dma.done [#allocation16], 4096
        $region108: #{tpu_custom_call.1} parent=83 // pred_fallthru
          _
        // Predicated region
        $region109: #{tpu_custom_call.1} parent=83 // pred_check
          %p646 = pneg %p203
        $region110: #{tpu_custom_call.1} parent=83 // pred_check_branch
          %648 = sbr.rel (%p646) target = $region112
        $region111: #{tpu_custom_call.1} parent=83 // pred_region
          %650 = dma.done [#allocation16], 16
        $region112: #{tpu_custom_call.1} parent=83 // pred_fallthru
          _
        // Predicated region
        $region113: #{tpu_custom_call.1} parent=83 // pred_check
          %p651 = pneg %p224
        $region114: #{tpu_custom_call.1} parent=83 // pred_check_branch
          %653 = sbr.rel (%p651) target = $region116
        $region115: #{tpu_custom_call.1} parent=83 // pred_region
          %655 = dma.done [#allocation19], 4096
        $region116: #{tpu_custom_call.1} parent=83 // pred_fallthru
          _
        // Predicated region
        $region117: #{tpu_custom_call.1} parent=83 // pred_check
          %p656 = pneg %p245
        $region118: #{tpu_custom_call.1} parent=83 // pred_check_branch
          %658 = sbr.rel (%p656) target = $region120
        $region119: #{tpu_custom_call.1} parent=83 // pred_region
          %660 = dma.done [#allocation19], 16
        $region120: #{tpu_custom_call.1} parent=83 // pred_fallthru
          _
        // Predicated region
        $region121: #{tpu_custom_call.1} parent=83 // pred_check
          %p661 = pneg %p266
        $region122: #{tpu_custom_call.1} parent=83 // pred_check_branch
          %663 = sbr.rel (%p661) target = $region124
        $region123: #{tpu_custom_call.1} parent=83 // pred_region
          %665 = dma.done [#allocation22], 6144
        $region124: #{tpu_custom_call.1} parent=83 // pred_fallthru
          _
        // Predicated region
        $region125: #{tpu_custom_call.1} parent=83 // pred_check
          %p666 = pneg %p287
        $region126: #{tpu_custom_call.1} parent=83 // pred_check_branch
          %668 = sbr.rel (%p666) target = $region128
        $region127: #{tpu_custom_call.1} parent=83 // pred_region
          %670 = dma.done [#allocation22], 6144
        $region128: #{tpu_custom_call.1} parent=83 // pred_fallthru
          _
        // Predicated region
        $region129: #{tpu_custom_call.1} parent=83 // pred_check
          %p671 = pneg %p350
        $region130: #{tpu_custom_call.1} parent=83 // pred_check_branch
          %673 = sbr.rel (%p671) target = $region132
        $region131: #{tpu_custom_call.1} parent=83 // pred_region
          %675 = dma.done [#allocation25], 2048
        $region132: #{tpu_custom_call.1} parent=83 // pred_fallthru
          _
        %p676 = pneg %p56
        %p677 = pneg %p53
        %p678 = pneg %p77
        %p679 = pneg %p74
        %p680 = pneg %p98
        %p681 = pneg %p95
        %p682 = pneg %p119
        %p683 = pneg %p116
        %p684 = pneg %p140
        %p685 = pneg %p137
        %p686 = pneg %p161
        %p687 = pneg %p158
        %p688 = pneg %p182
        %p689 = pneg %p179
        %p690 = pneg %p203
        %p691 = pneg %p200
        %p692 = pneg %p224
        %p693 = pneg %p221
        %p694 = pneg %p245
        %p695 = pneg %p242
        %p696 = pneg %p266
        %p697 = pneg %p263
        %p698 = pneg %p287
        %p699 = pneg %p284
        %p700 = pneg %p308
        %p701 = pneg %p305
        %p702 = pneg %p329
        %p703 = pneg %p326
        %p704 = pneg %p350
        %p705 = pneg %p347
        %p706 = pneg %p371
        %p707 = pneg %p368
        %p708 = pneg %p397
        %p709 = pneg %p394
        %s710 = sand.u32 %s384, 1
        %s711 = scalar_lea.sflag [#allocation8], %s710
        %s712 = sand.u32 %s384, 1
        %s713 = scalar_lea.vmem [#allocation26], %s712
        %p714 = pneg %p418
        %p715 = pneg %p415
        %p716 = scmp.eq.s32.totalorder %s40, 0
        // Predicated region
        $region133: #{tpu_custom_call.1} parent=83 // pred_check
          %p717 = pneg %p716
        $region134: #{tpu_custom_call.1} parent=83 // pred_check_branch
          %719 = sbr.rel (%p717) target = $region136
        $region135: #{tpu_custom_call.1} parent=83 // pred_region
          %720 = vst [vmem:[#allocation2] sm:$0xff] 0.0
          %721 = vst [vmem:[#allocation2 + $0x8] sm:$0xff] 0.0
          %722 = vst [vmem:[#allocation2 + $0x10] sm:$0xff] 0.0
          %723 = vst [vmem:[#allocation2 + $0x18] sm:$0xff] 0.0
          %724 = vst [vmem:[#allocation2 + $0x20] sm:$0xff] 0.0
          %725 = vst [vmem:[#allocation2 + $0x28] sm:$0xff] 0.0
          %726 = vst [vmem:[#allocation2 + $0x30] sm:$0xff] 0.0
          %727 = vst [vmem:[#allocation2 + $0x38] sm:$0xff] 0.0
          %728 = vst [vmem:[#allocation2 + $0x40] sm:$0xff] 0.0
          %729 = vst [vmem:[#allocation2 + $0x48] sm:$0xff] 0.0
          %730 = vst [vmem:[#allocation2 + $0x50] sm:$0xff] 0.0
          %731 = vst [vmem:[#allocation2 + $0x58] sm:$0xff] 0.0
          %732 = vst [vmem:[#allocation2 + $0x60] sm:$0xff] 0.0
          %733 = vst [vmem:[#allocation2 + $0x68] sm:$0xff] 0.0
          %734 = vst [vmem:[#allocation2 + $0x70] sm:$0xff] 0.0
          %735 = vst [vmem:[#allocation2 + $0x78] sm:$0xff] 0.0
          %v736 = vld [vmem:[#allocation11] sm:$0xff]
          %v737 = vld [vmem:[#allocation11 + $0x8] sm:$0xff]
          %v738 = vld [vmem:[#allocation11 + $0x10] sm:$0xff]
          %v739 = vld [vmem:[#allocation11 + $0x18] sm:$0xff]
          %v740 = vld [vmem:[#allocation11 + $0x20] sm:$0xff]
          %v741 = vld [vmem:[#allocation11 + $0x28] sm:$0xff]
          %v742 = vld [vmem:[#allocation11 + $0x30] sm:$0xff]
          %v743 = vld [vmem:[#allocation11 + $0x38] sm:$0xff]
          %v744 = vld [vmem:[#allocation11 + $0x40] sm:$0xff]
          %v745 = vld [vmem:[#allocation11 + $0x48] sm:$0xff]
          %v746 = vld [vmem:[#allocation11 + $0x50] sm:$0xff]
          %v747 = vld [vmem:[#allocation11 + $0x58] sm:$0xff]
          %v748 = vld [vmem:[#allocation11 + $0x60] sm:$0xff]
          %v749 = vld [vmem:[#allocation11 + $0x68] sm:$0xff]
          %v750 = vld [vmem:[#allocation11 + $0x70] sm:$0xff]
          %v751 = vld [vmem:[#allocation11 + $0x78] sm:$0xff]
          %v752 = vld [vmem:[#allocation11 + $0x80] sm:$0xff]
          %v753 = vld [vmem:[#allocation11 + $0x88] sm:$0xff]
          %v754 = vld [vmem:[#allocation11 + $0x90] sm:$0xff]
          %v755 = vld [vmem:[#allocation11 + $0x98] sm:$0xff]
          %v756 = vld [vmem:[#allocation11 + $0xa0] sm:$0xff]
          %v757 = vld [vmem:[#allocation11 + $0xa8] sm:$0xff]
          %v758 = vld [vmem:[#allocation11 + $0xb0] sm:$0xff]
          %v759 = vld [vmem:[#allocation11 + $0xb8] sm:$0xff]
          %v760 = vld [vmem:[#allocation11 + $0xc0] sm:$0xff]
          %v761 = vld [vmem:[#allocation11 + $0xc8] sm:$0xff]
          %v762 = vld [vmem:[#allocation11 + $0xd0] sm:$0xff]
          %v763 = vld [vmem:[#allocation11 + $0xd8] sm:$0xff]
          %v764 = vld [vmem:[#allocation11 + $0xe0] sm:$0xff]
          %v765 = vld [vmem:[#allocation11 + $0xe8] sm:$0xff]
          %v766 = vld [vmem:[#allocation11 + $0xf0] sm:$0xff]
          %v767 = vld [vmem:[#allocation11 + $0xf8] sm:$0xff]
          %v768 = vld [vmem:[#allocation11 + $0x100] sm:$0xff]
          %v769 = vld [vmem:[#allocation11 + $0x108] sm:$0xff]
          %v770 = vld [vmem:[#allocation11 + $0x110] sm:$0xff]
          %v771 = vld [vmem:[#allocation11 + $0x118] sm:$0xff]
          %v772 = vld [vmem:[#allocation11 + $0x120] sm:$0xff]
          %v773 = vld [vmem:[#allocation11 + $0x128] sm:$0xff]
          %v774 = vld [vmem:[#allocation11 + $0x130] sm:$0xff]
          %v775 = vld [vmem:[#allocation11 + $0x138] sm:$0xff]
          %v776 = vld [vmem:[#allocation11 + $0x140] sm:$0xff]
          %v777 = vld [vmem:[#allocation11 + $0x148] sm:$0xff]
          %v778 = vld [vmem:[#allocation11 + $0x150] sm:$0xff]
          %v779 = vld [vmem:[#allocation11 + $0x158] sm:$0xff]
          %v780 = vld [vmem:[#allocation11 + $0x160] sm:$0xff]
          %v781 = vld [vmem:[#allocation11 + $0x168] sm:$0xff]
          %v782 = vld [vmem:[#allocation11 + $0x170] sm:$0xff]
          %v783 = vld [vmem:[#allocation11 + $0x178] sm:$0xff]
          %v784 = vld [vmem:[#allocation12] sm:$0xff]
          %v785 = vld [vmem:[#allocation12 + $0x8] sm:$0xff]
          %v786 = vld [vmem:[#allocation12 + $0x10] sm:$0xff]
          %v787 = vld [vmem:[#allocation12 + $0x18] sm:$0xff]
          %v788 = vld [vmem:[#allocation12 + $0x20] sm:$0xff]
          %v789 = vld [vmem:[#allocation12 + $0x28] sm:$0xff]
          %v790 = vld [vmem:[#allocation12 + $0x30] sm:$0xff]
          %v791 = vld [vmem:[#allocation12 + $0x38] sm:$0xff]
          %v792 = vld [vmem:[#allocation12 + $0x40] sm:$0xff]
          %v793 = vld [vmem:[#allocation12 + $0x48] sm:$0xff]
          %v794 = vld [vmem:[#allocation12 + $0x50] sm:$0xff]
          %v795 = vld [vmem:[#allocation12 + $0x58] sm:$0xff]
          %v796 = vld [vmem:[#allocation12 + $0x60] sm:$0xff]
          %v797 = vld [vmem:[#allocation12 + $0x68] sm:$0xff]
          %v798 = vld [vmem:[#allocation12 + $0x70] sm:$0xff]
          %v799 = vld [vmem:[#allocation12 + $0x78] sm:$0xff]
          %v800 = vld [vmem:[#allocation12 + $0x80] sm:$0xff]
          %v801 = vld [vmem:[#allocation12 + $0x88] sm:$0xff]
          %v802 = vld [vmem:[#allocation12 + $0x90] sm:$0xff]
          %v803 = vld [vmem:[#allocation12 + $0x98] sm:$0xff]
          %v804 = vld [vmem:[#allocation12 + $0xa0] sm:$0xff]
          %v805 = vld [vmem:[#allocation12 + $0xa8] sm:$0xff]
          %v806 = vld [vmem:[#allocation12 + $0xb0] sm:$0xff]
          %v807 = vld [vmem:[#allocation12 + $0xb8] sm:$0xff]
          %v808 = vld [vmem:[#allocation12 + $0xc0] sm:$0xff]
          %v809 = vld [vmem:[#allocation12 + $0xc8] sm:$0xff]
          %v810 = vld [vmem:[#allocation12 + $0xd0] sm:$0xff]
          %v811 = vld [vmem:[#allocation12 + $0xd8] sm:$0xff]
          %v812 = vld [vmem:[#allocation12 + $0xe0] sm:$0xff]
          %v813 = vld [vmem:[#allocation12 + $0xe8] sm:$0xff]
          %v814 = vld [vmem:[#allocation12 + $0xf0] sm:$0xff]
          %v815 = vld [vmem:[#allocation12 + $0xf8] sm:$0xff]
          %v816 = vld [vmem:[#allocation12 + $0x100] sm:$0xff]
          %v817 = vld [vmem:[#allocation12 + $0x108] sm:$0xff]
          %v818 = vld [vmem:[#allocation12 + $0x110] sm:$0xff]
          %v819 = vld [vmem:[#allocation12 + $0x118] sm:$0xff]
          %v820 = vld [vmem:[#allocation12 + $0x120] sm:$0xff]
          %v821 = vld [vmem:[#allocation12 + $0x128] sm:$0xff]
          %v822 = vld [vmem:[#allocation12 + $0x130] sm:$0xff]
          %v823 = vld [vmem:[#allocation12 + $0x138] sm:$0xff]
          %v824 = vld [vmem:[#allocation12 + $0x140] sm:$0xff]
          %v825 = vld [vmem:[#allocation12 + $0x148] sm:$0xff]
          %v826 = vld [vmem:[#allocation12 + $0x150] sm:$0xff]
          %v827 = vld [vmem:[#allocation12 + $0x158] sm:$0xff]
          %v828 = vld [vmem:[#allocation12 + $0x160] sm:$0xff]
          %v829 = vld [vmem:[#allocation12 + $0x168] sm:$0xff]
          %v830 = vld [vmem:[#allocation12 + $0x170] sm:$0xff]
          %v831 = vld [vmem:[#allocation12 + $0x178] sm:$0xff]
          %v832 = vld [vmem:[%s4] sm:$0x7]
          %v833 = vld [vmem:[#allocation14] sm:$0x7]
          %v834 = vld [vmem:[#allocation6] sm:$0x1]
          %v836 = vperm.slane %v832, 0
          %v837 = vperm.slane %v832, 1
          %v838 = vperm.slane %v832, 2
          %842 = vmatpush.msra.mxu0 %v781
          %843 = vmatpush.msra.mxu0 %v778
          %844 = vmatpush.msra.mxu0 %v775
          %845 = vmatpush.msra.mxu0 %v772
          %846 = vmatpush.msra.mxu0 %v769
          %847 = vmatpush.msra.mxu0 %v766
          %848 = vmatpush.msra.mxu0 %v763
          %849 = vmatpush.msra.mxu0 %v760
          %850 = vmatpush.msra.mxu0 %v757
          %851 = vmatpush.msra.mxu0 %v754
          %852 = vmatpush.msra.mxu0 %v751
          %853 = vmatpush.msra.mxu0 %v748
          %854 = vmatpush.msra.mxu0 %v745
          %855 = vmatpush.msra.mxu0 %v742
          %856 = vmatpush.msra.mxu0 %v739
          %857 = vmatpush.msra.mxu0 %v736
          %858 = vmatmul.f32.gmra.mxu0 %v834
          %v859 = vpop.f32.mrf.mxu0
          %v860 = vadd.f32 %v836, %v859
          %861 = vdwg.mxu0
          %862 = vmatpush.msra.mxu0 %v782
          %863 = vmatpush.msra.mxu0 %v779
          %864 = vmatpush.msra.mxu0 %v776
          %865 = vmatpush.msra.mxu0 %v773
          %866 = vmatpush.msra.mxu0 %v770
          %867 = vmatpush.msra.mxu0 %v767
          %868 = vmatpush.msra.mxu0 %v764
          %869 = vmatpush.msra.mxu0 %v761
          %870 = vmatpush.msra.mxu0 %v758
          %871 = vmatpush.msra.mxu0 %v755
          %872 = vmatpush.msra.mxu0 %v752
          %873 = vmatpush.msra.mxu0 %v749
          %874 = vmatpush.msra.mxu0 %v746
          %875 = vmatpush.msra.mxu0 %v743
          %876 = vmatpush.msra.mxu0 %v740
          %877 = vmatpush.msra.mxu0 %v737
          %878 = vmatmul.f32.gmra.mxu0 %v834
          %v879 = vpop.f32.mrf.mxu0
          %v880 = vadd.f32 %v837, %v879
          %881 = vdwg.mxu0
          %882 = vmatpush.msra.mxu0 %v783
          %883 = vmatpush.msra.mxu0 %v780
          %884 = vmatpush.msra.mxu0 %v777
          %885 = vmatpush.msra.mxu0 %v774
          %886 = vmatpush.msra.mxu0 %v771
          %887 = vmatpush.msra.mxu0 %v768
          %888 = vmatpush.msra.mxu0 %v765
          %889 = vmatpush.msra.mxu0 %v762
          %890 = vmatpush.msra.mxu0 %v759
          %891 = vmatpush.msra.mxu0 %v756
          %892 = vmatpush.msra.mxu0 %v753
          %893 = vmatpush.msra.mxu0 %v750
          %894 = vmatpush.msra.mxu0 %v747
          %895 = vmatpush.msra.mxu0 %v744
          %896 = vmatpush.msra.mxu0 %v741
          %897 = vmatpush.msra.mxu0 %v738
          %898 = vmatmul.f32.gmra.mxu0 %v834
          %v899 = vpop.f32.mrf.mxu0
          %v900 = vadd.f32 %v838, %v899
          %901 = vdwg.mxu0
          %v903 = vperm.slane %v833, 0
          %v904 = vperm.slane %v833, 1
          %v905 = vperm.slane %v833, 2
          %909 = vmatpush.msra.mxu0 %v829
          %910 = vmatpush.msra.mxu0 %v826
          %911 = vmatpush.msra.mxu0 %v823
          %912 = vmatpush.msra.mxu0 %v820
          %913 = vmatpush.msra.mxu0 %v817
          %914 = vmatpush.msra.mxu0 %v814
          %915 = vmatpush.msra.mxu0 %v811
          %916 = vmatpush.msra.mxu0 %v808
          %917 = vmatpush.msra.mxu0 %v805
          %918 = vmatpush.msra.mxu0 %v802
          %919 = vmatpush.msra.mxu0 %v799
          %920 = vmatpush.msra.mxu0 %v796
          %921 = vmatpush.msra.mxu0 %v793
          %922 = vmatpush.msra.mxu0 %v790
          %923 = vmatpush.msra.mxu0 %v787
          %924 = vmatpush.msra.mxu0 %v784
          %925 = vmatmul.f32.gmra.mxu0 0.0
          %v926 = vpop.f32.mrf.mxu0
          %v927 = vadd.f32 %v903, %v926
          %928 = vdwg.mxu0
          %929 = vmatpush.msra.mxu0 %v830
          %930 = vmatpush.msra.mxu0 %v827
          %931 = vmatpush.msra.mxu0 %v824
          %932 = vmatpush.msra.mxu0 %v821
          %933 = vmatpush.msra.mxu0 %v818
          %934 = vmatpush.msra.mxu0 %v815
          %935 = vmatpush.msra.mxu0 %v812
          %936 = vmatpush.msra.mxu0 %v809
          %937 = vmatpush.msra.mxu0 %v806
          %938 = vmatpush.msra.mxu0 %v803
          %939 = vmatpush.msra.mxu0 %v800
          %940 = vmatpush.msra.mxu0 %v797
          %941 = vmatpush.msra.mxu0 %v794
          %942 = vmatpush.msra.mxu0 %v791
          %943 = vmatpush.msra.mxu0 %v788
          %944 = vmatpush.msra.mxu0 %v785
          %945 = vmatmul.f32.gmra.mxu0 0.0
          %v946 = vpop.f32.mrf.mxu0
          %v947 = vadd.f32 %v904, %v946
          %948 = vdwg.mxu0
          %949 = vmatpush.msra.mxu0 %v831
          %950 = vmatpush.msra.mxu0 %v828
          %951 = vmatpush.msra.mxu0 %v825
          %952 = vmatpush.msra.mxu0 %v822
          %953 = vmatpush.msra.mxu0 %v819
          %954 = vmatpush.msra.mxu0 %v816
          %955 = vmatpush.msra.mxu0 %v813
          %956 = vmatpush.msra.mxu0 %v810
          %957 = vmatpush.msra.mxu0 %v807
          %958 = vmatpush.msra.mxu0 %v804
          %959 = vmatpush.msra.mxu0 %v801
          %960 = vmatpush.msra.mxu0 %v798
          %961 = vmatpush.msra.mxu0 %v795
          %962 = vmatpush.msra.mxu0 %v792
          %963 = vmatpush.msra.mxu0 %v789
          %964 = vmatpush.msra.mxu0 %v786
          %965 = vmatmul.f32.gmra.mxu0 0.0
          %v966 = vpop.f32.mrf.mxu0
          %v967 = vadd.f32 %v905, %v966
          %968 = vdwg.mxu0
          %v969 = vadd.f32 %v860, %v927
          %v970 = vsub.f32 0.0, %v969
          %v971 = vmul.f32 %v970, 1.442695
          %v972 = vpow.pop %v971
          %v973 = vadd.f32 %v972, 1.0
          %v974 = vrcp.pop %v973
          %v975 = vmul.f32 %v973, %v974
          %v976 = vsub.f32 1.0, %v975
          %v977 = vmul.f32 %v974, %v976
          %v978 = vadd.f32 %v974, %v977
          %vm979 = vweird.f32 %v973
          %vm980 = vweird.f32 %v974
          %vm981 = vmor %vm979, %vm980
          %v982 = vsel %vm981, %v974, %v978
          %v983 = vand.u32 2147483647, %v973
          %vm984 = vcmp.eq.f32.partialorder %v983, 8.507059e+37
          %v985 = vand.u32 %v973, 2147483648
          %v986 = vor.u32 1.1754944e-38, %v985
          %v987 = vsel %vm984, %v986, %v982
          %v988 = vmul.f32 1.0, %v987
          %v989 = vadd.f32 %v880, %v947
          %v990 = vsub.f32 0.0, %v989
          %v991 = vmul.f32 %v990, 1.442695
          %v992 = vpow.pop %v991
          %v993 = vadd.f32 %v992, 1.0
          %v994 = vrcp.pop %v993
          %v995 = vmul.f32 %v993, %v994
          %v996 = vsub.f32 1.0, %v995
          %v997 = vmul.f32 %v994, %v996
          %v998 = vadd.f32 %v994, %v997
          %vm999 = vweird.f32 %v993
          %vm1000 = vweird.f32 %v994
          %vm1001 = vmor %vm999, %vm1000
          %v1002 = vsel %vm1001, %v994, %v998
          %v1003 = vand.u32 2147483647, %v993
          %vm1004 = vcmp.eq.f32.partialorder %v1003, 8.507059e+37
          %v1005 = vand.u32 %v993, 2147483648
          %v1006 = vor.u32 1.1754944e-38, %v1005
          %v1007 = vsel %vm1004, %v1006, %v1002
          %v1008 = vmul.f32 1.0, %v1007
          %v1009 = vmul.f32 %v988, %v967
          %v1010 = vadd.f32 %v900, %v1009
          %v1011 = vtanh.pop %v1010
          %v1012 = vsub.f32 1.0, %v1008
          %v1013 = vmul.f32 %v1012, %v1011
          %v1014 = vmul.f32 %v1008, 0.0
          %v1015 = vadd.f32 %v1013, %v1014
          %1016 = vst [vmem:[#allocation2] sm:$0x1] %v1015
          %v1017 = vld [vmem:[#allocation6 + $0x1] sm:$0x1]
          %1018 = vmatpush.msra.mxu0 %v781
          %1019 = vmatpush.msra.mxu0 %v778
          %1020 = vmatpush.msra.mxu0 %v775
          %1021 = vmatpush.msra.mxu0 %v772
          %1022 = vmatpush.msra.mxu0 %v769
          %1023 = vmatpush.msra.mxu0 %v766
          %1024 = vmatpush.msra.mxu0 %v763
          %1025 = vmatpush.msra.mxu0 %v760
          %1026 = vmatpush.msra.mxu0 %v757
          %1027 = vmatpush.msra.mxu0 %v754
          %1028 = vmatpush.msra.mxu0 %v751
          %1029 = vmatpush.msra.mxu0 %v748
          %1030 = vmatpush.msra.mxu0 %v745
          %1031 = vmatpush.msra.mxu0 %v742
          %1032 = vmatpush.msra.mxu0 %v739
          %1033 = vmatpush.msra.mxu0 %v736
          %1034 = vmatmul.f32.gmra.mxu0 %v1017
          %v1035 = vpop.f32.mrf.mxu0
          %v1036 = vadd.f32 %v836, %v1035
          %1037 = vdwg.mxu0
          %1038 = vmatpush.msra.mxu0 %v782
          %1039 = vmatpush.msra.mxu0 %v779
          %1040 = vmatpush.msra.mxu0 %v776
          %1041 = vmatpush.msra.mxu0 %v773
          %1042 = vmatpush.msra.mxu0 %v770
          %1043 = vmatpush.msra.mxu0 %v767
          %1044 = vmatpush.msra.mxu0 %v764
          %1045 = vmatpush.msra.mxu0 %v761
          %1046 = vmatpush.msra.mxu0 %v758
          %1047 = vmatpush.msra.mxu0 %v755
          %1048 = vmatpush.msra.mxu0 %v752
          %1049 = vmatpush.msra.mxu0 %v749
          %1050 = vmatpush.msra.mxu0 %v746
          %1051 = vmatpush.msra.mxu0 %v743
          %1052 = vmatpush.msra.mxu0 %v740
          %1053 = vmatpush.msra.mxu0 %v737
          %1054 = vmatmul.f32.gmra.mxu0 %v1017
          %v1055 = vpop.f32.mrf.mxu0
          %v1056 = vadd.f32 %v837, %v1055
          %1057 = vdwg.mxu0
          %1058 = vmatpush.msra.mxu0 %v783
          %1059 = vmatpush.msra.mxu0 %v780
          %1060 = vmatpush.msra.mxu0 %v777
          %1061 = vmatpush.msra.mxu0 %v774
          %1062 = vmatpush.msra.mxu0 %v771
          %1063 = vmatpush.msra.mxu0 %v768
          %1064 = vmatpush.msra.mxu0 %v765
          %1065 = vmatpush.msra.mxu0 %v762
          %1066 = vmatpush.msra.mxu0 %v759
          %1067 = vmatpush.msra.mxu0 %v756
          %1068 = vmatpush.msra.mxu0 %v753
          %1069 = vmatpush.msra.mxu0 %v750
          %1070 = vmatpush.msra.mxu0 %v747
          %1071 = vmatpush.msra.mxu0 %v744
          %1072 = vmatpush.msra.mxu0 %v741
          %1073 = vmatpush.msra.mxu0 %v738
          %1074 = vmatmul.f32.gmra.mxu0 %v1017
          %v1075 = vpop.f32.mrf.mxu0
          %v1076 = vadd.f32 %v838, %v1075
          %1077 = vdwg.mxu0
          %1078 = vmatpush.msra.mxu0 %v829
          %1079 = vmatpush.msra.mxu0 %v826
          %1080 = vmatpush.msra.mxu0 %v823
          %1081 = vmatpush.msra.mxu0 %v820
          %1082 = vmatpush.msra.mxu0 %v817
          %1083 = vmatpush.msra.mxu0 %v814
          %1084 = vmatpush.msra.mxu0 %v811
          %1085 = vmatpush.msra.mxu0 %v808
          %1086 = vmatpush.msra.mxu0 %v805
          %1087 = vmatpush.msra.mxu0 %v802
          %1088 = vmatpush.msra.mxu0 %v799
          %1089 = vmatpush.msra.mxu0 %v796
          %1090 = vmatpush.msra.mxu0 %v793
          %1091 = vmatpush.msra.mxu0 %v790
          %1092 = vmatpush.msra.mxu0 %v787
          %1093 = vmatpush.msra.mxu0 %v784
          %1094 = vmatmul.f32.gmra.mxu0 %v1015
          %v1095 = vpop.f32.mrf.mxu0
          %v1096 = vadd.f32 %v903, %v1095
          %1097 = vdwg.mxu0
          %1098 = vmatpush.msra.mxu0 %v830
          %1099 = vmatpush.msra.mxu0 %v827
          %1100 = vmatpush.msra.mxu0 %v824
          %1101 = vmatpush.msra.mxu0 %v821
          %1102 = vmatpush.msra.mxu0 %v818
          %1103 = vmatpush.msra.mxu0 %v815
          %1104 = vmatpush.msra.mxu0 %v812
          %1105 = vmatpush.msra.mxu0 %v809
          %1106 = vmatpush.msra.mxu0 %v806
          %1107 = vmatpush.msra.mxu0 %v803
          %1108 = vmatpush.msra.mxu0 %v800
          %1109 = vmatpush.msra.mxu0 %v797
          %1110 = vmatpush.msra.mxu0 %v794
          %1111 = vmatpush.msra.mxu0 %v791
          %1112 = vmatpush.msra.mxu0 %v788
          %1113 = vmatpush.msra.mxu0 %v785
          %1114 = vmatmul.f32.gmra.mxu0 %v1015
          %v1115 = vpop.f32.mrf.mxu0
          %v1116 = vadd.f32 %v904, %v1115
          %1117 = vdwg.mxu0
          %1118 = vmatpush.msra.mxu0 %v831
          %1119 = vmatpush.msra.mxu0 %v828
          %1120 = vmatpush.msra.mxu0 %v825
          %1121 = vmatpush.msra.mxu0 %v822
          %1122 = vmatpush.msra.mxu0 %v819
          %1123 = vmatpush.msra.mxu0 %v816
          %1124 = vmatpush.msra.mxu0 %v813
          %1125 = vmatpush.msra.mxu0 %v810
          %1126 = vmatpush.msra.mxu0 %v807
          %1127 = vmatpush.msra.mxu0 %v804
          %1128 = vmatpush.msra.mxu0 %v801
          %1129 = vmatpush.msra.mxu0 %v798
          %1130 = vmatpush.msra.mxu0 %v795
          %1131 = vmatpush.msra.mxu0 %v792
          %1132 = vmatpush.msra.mxu0 %v789
          %1133 = vmatpush.msra.mxu0 %v786
          %1134 = vmatmul.f32.gmra.mxu0 %v1015
          %v1135 = vpop.f32.mrf.mxu0
          %v1136 = vadd.f32 %v905, %v1135
          %1137 = vdwg.mxu0
          %v1138 = vadd.f32 %v1036, %v1096
          %v1139 = vsub.f32 0.0, %v1138
          %v1140 = vmul.f32 %v1139, 1.442695
          %v1141 = vpow.pop %v1140
          %v1142 = vadd.f32 %v1141, 1.0
          %v1143 = vrcp.pop %v1142
          %v1144 = vmul.f32 %v1142, %v1143
          %v1145 = vsub.f32 1.0, %v1144
          %v1146 = vmul.f32 %v1143, %v1145
          %v1147 = vadd.f32 %v1143, %v1146
          %vm1148 = vweird.f32 %v1142
          %vm1149 = vweird.f32 %v1143
          %vm1150 = vmor %vm1148, %vm1149
          %v1151 = vsel %vm1150, %v1143, %v1147
          %v1152 = vand.u32 2147483647, %v1142
          %vm1153 = vcmp.eq.f32.partialorder %v1152, 8.507059e+37
          %v1154 = vand.u32 %v1142, 2147483648
          %v1155 = vor.u32 1.1754944e-38, %v1154
          %v1156 = vsel %vm1153, %v1155, %v1151
          %v1157 = vmul.f32 1.0, %v1156
          %v1158 = vadd.f32 %v1056, %v1116
          %v1159 = vsub.f32 0.0, %v1158
          %v1160 = vmul.f32 %v1159, 1.442695
          %v1161 = vpow.pop %v1160
          %v1162 = vadd.f32 %v1161, 1.0
          %v1163 = vrcp.pop %v1162
          %v1164 = vmul.f32 %v1162, %v1163
          %v1165 = vsub.f32 1.0, %v1164
          %v1166 = vmul.f32 %v1163, %v1165
          %v1167 = vadd.f32 %v1163, %v1166
          %vm1168 = vweird.f32 %v1162
          %vm1169 = vweird.f32 %v1163
          %vm1170 = vmor %vm1168, %vm1169
          %v1171 = vsel %vm1170, %v1163, %v1167
          %v1172 = vand.u32 2147483647, %v1162
          %vm1173 = vcmp.eq.f32.partialorder %v1172, 8.507059e+37
          %v1174 = vand.u32 %v1162, 2147483648
          %v1175 = vor.u32 1.1754944e-38, %v1174
          %v1176 = vsel %vm1173, %v1175, %v1171
          %v1177 = vmul.f32 1.0, %v1176
          %v1178 = vmul.f32 %v1157, %v1136
          %v1179 = vadd.f32 %v1076, %v1178
          %v1180 = vtanh.pop %v1179
          %v1181 = vsub.f32 1.0, %v1177
          %v1182 = vmul.f32 %v1181, %v1180
          %v1183 = vmul.f32 %v1177, %v1015
          %v1184 = vadd.f32 %v1182, %v1183
          %1185 = vst [vmem:[#allocation2 + $0x1] sm:$0x1] %v1184
          %v1186 = vld [vmem:[#allocation6 + $0x2] sm:$0x1]
          %1187 = vmatpush.msra.mxu0 %v781
          %1188 = vmatpush.msra.mxu0 %v778
          %1189 = vmatpush.msra.mxu0 %v775
          %1190 = vmatpush.msra.mxu0 %v772
          %1191 = vmatpush.msra.mxu0 %v769
          %1192 = vmatpush.msra.mxu0 %v766
          %1193 = vmatpush.msra.mxu0 %v763
          %1194 = vmatpush.msra.mxu0 %v760
          %1195 = vmatpush.msra.mxu0 %v757
          %1196 = vmatpush.msra.mxu0 %v754
          %1197 = vmatpush.msra.mxu0 %v751
          %1198 = vmatpush.msra.mxu0 %v748
          %1199 = vmatpush.msra.mxu0 %v745
          %1200 = vmatpush.msra.mxu0 %v742
          %1201 = vmatpush.msra.mxu0 %v739
          %1202 = vmatpush.msra.mxu0 %v736
          %1203 = vmatmul.f32.gmra.mxu0 %v1186
          %v1204 = vpop.f32.mrf.mxu0
          %v1205 = vadd.f32 %v836, %v1204
          %1206 = vdwg.mxu0
          %1207 = vmatpush.msra.mxu0 %v782
          %1208 = vmatpush.msra.mxu0 %v779
          %1209 = vmatpush.msra.mxu0 %v776
          %1210 = vmatpush.msra.mxu0 %v773
          %1211 = vmatpush.msra.mxu0 %v770
          %1212 = vmatpush.msra.mxu0 %v767
          %1213 = vmatpush.msra.mxu0 %v764
          %1214 = vmatpush.msra.mxu0 %v761
          %1215 = vmatpush.msra.mxu0 %v758
          %1216 = vmatpush.msra.mxu0 %v755
          %1217 = vmatpush.msra.mxu0 %v752
          %1218 = vmatpush.msra.mxu0 %v749
          %1219 = vmatpush.msra.mxu0 %v746
          %1220 = vmatpush.msra.mxu0 %v743
          %1221 = vmatpush.msra.mxu0 %v740
          %1222 = vmatpush.msra.mxu0 %v737
          %1223 = vmatmul.f32.gmra.mxu0 %v1186
          %v1224 = vpop.f32.mrf.mxu0
          %v1225 = vadd.f32 %v837, %v1224
          %1226 = vdwg.mxu0
          %1227 = vmatpush.msra.mxu0 %v783
          %1228 = vmatpush.msra.mxu0 %v780
          %1229 = vmatpush.msra.mxu0 %v777
          %1230 = vmatpush.msra.mxu0 %v774
          %1231 = vmatpush.msra.mxu0 %v771
          %1232 = vmatpush.msra.mxu0 %v768
          %1233 = vmatpush.msra.mxu0 %v765
          %1234 = vmatpush.msra.mxu0 %v762
          %1235 = vmatpush.msra.mxu0 %v759
          %1236 = vmatpush.msra.mxu0 %v756
          %1237 = vmatpush.msra.mxu0 %v753
          %1238 = vmatpush.msra.mxu0 %v750
          %1239 = vmatpush.msra.mxu0 %v747
          %1240 = vmatpush.msra.mxu0 %v744
          %1241 = vmatpush.msra.mxu0 %v741
          %1242 = vmatpush.msra.mxu0 %v738
          %1243 = vmatmul.f32.gmra.mxu0 %v1186
          %v1244 = vpop.f32.mrf.mxu0
          %v1245 = vadd.f32 %v838, %v1244
          %1246 = vdwg.mxu0
          %1247 = vmatpush.msra.mxu0 %v829
          %1248 = vmatpush.msra.mxu0 %v826
          %1249 = vmatpush.msra.mxu0 %v823
          %1250 = vmatpush.msra.mxu0 %v820
          %1251 = vmatpush.msra.mxu0 %v817
          %1252 = vmatpush.msra.mxu0 %v814
          %1253 = vmatpush.msra.mxu0 %v811
          %1254 = vmatpush.msra.mxu0 %v808
          %1255 = vmatpush.msra.mxu0 %v805
          %1256 = vmatpush.msra.mxu0 %v802
          %1257 = vmatpush.msra.mxu0 %v799
          %1258 = vmatpush.msra.mxu0 %v796
          %1259 = vmatpush.msra.mxu0 %v793
          %1260 = vmatpush.msra.mxu0 %v790
          %1261 = vmatpush.msra.mxu0 %v787
          %1262 = vmatpush.msra.mxu0 %v784
          %1263 = vmatmul.f32.gmra.mxu0 %v1184
          %v1264 = vpop.f32.mrf.mxu0
          %v1265 = vadd.f32 %v903, %v1264
          %1266 = vdwg.mxu0
          %1267 = vmatpush.msra.mxu0 %v830
          %1268 = vmatpush.msra.mxu0 %v827
          %1269 = vmatpush.msra.mxu0 %v824
          %1270 = vmatpush.msra.mxu0 %v821
          %1271 = vmatpush.msra.mxu0 %v818
          %1272 = vmatpush.msra.mxu0 %v815
          %1273 = vmatpush.msra.mxu0 %v812
          %1274 = vmatpush.msra.mxu0 %v809
          %1275 = vmatpush.msra.mxu0 %v806
          %1276 = vmatpush.msra.mxu0 %v803
          %1277 = vmatpush.msra.mxu0 %v800
          %1278 = vmatpush.msra.mxu0 %v797
          %1279 = vmatpush.msra.mxu0 %v794
          %1280 = vmatpush.msra.mxu0 %v791
          %1281 = vmatpush.msra.mxu0 %v788
          %1282 = vmatpush.msra.mxu0 %v785
          %1283 = vmatmul.f32.gmra.mxu0 %v1184
          %v1284 = vpop.f32.mrf.mxu0
          %v1285 = vadd.f32 %v904, %v1284
          %1286 = vdwg.mxu0
          %1287 = vmatpush.msra.mxu0 %v831
          %1288 = vmatpush.msra.mxu0 %v828
          %1289 = vmatpush.msra.mxu0 %v825
          %1290 = vmatpush.msra.mxu0 %v822
          %1291 = vmatpush.msra.mxu0 %v819
          %1292 = vmatpush.msra.mxu0 %v816
          %1293 = vmatpush.msra.mxu0 %v813
          %1294 = vmatpush.msra.mxu0 %v810
          %1295 = vmatpush.msra.mxu0 %v807
          %1296 = vmatpush.msra.mxu0 %v804
          %1297 = vmatpush.msra.mxu0 %v801
          %1298 = vmatpush.msra.mxu0 %v798
          %1299 = vmatpush.msra.mxu0 %v795
          %1300 = vmatpush.msra.mxu0 %v792
          %1301 = vmatpush.msra.mxu0 %v789
          %1302 = vmatpush.msra.mxu0 %v786
          %1303 = vmatmul.f32.gmra.mxu0 %v1184
          %v1304 = vpop.f32.mrf.mxu0
          %v1305 = vadd.f32 %v905, %v1304
          %1306 = vdwg.mxu0
          %v1307 = vadd.f32 %v1205, %v1265
          %v1308 = vsub.f32 0.0, %v1307
          %v1309 = vmul.f32 %v1308, 1.442695
          %v1310 = vpow.pop %v1309
          %v1311 = vadd.f32 %v1310, 1.0
          %v1312 = vrcp.pop %v1311
          %v1313 = vmul.f32 %v1311, %v1312
          %v1314 = vsub.f32 1.0, %v1313
          %v1315 = vmul.f32 %v1312, %v1314
          %v1316 = vadd.f32 %v1312, %v1315
          %vm1317 = vweird.f32 %v1311
          %vm1318 = vweird.f32 %v1312
          %vm1319 = vmor %vm1317, %vm1318
          %v1320 = vsel %vm1319, %v1312, %v1316
          %v1321 = vand.u32 2147483647, %v1311
          %vm1322 = vcmp.eq.f32.partialorder %v1321, 8.507059e+37
          %v1323 = vand.u32 %v1311, 2147483648
          %v1324 = vor.u32 1.1754944e-38, %v1323
          %v1325 = vsel %vm1322, %v1324, %v1320
          %v1326 = vmul.f32 1.0, %v1325
          %v1327 = vadd.f32 %v1225, %v1285
          %v1328 = vsub.f32 0.0, %v1327
          %v1329 = vmul.f32 %v1328, 1.442695
          %v1330 = vpow.pop %v1329
          %v1331 = vadd.f32 %v1330, 1.0
          %v1332 = vrcp.pop %v1331
          %v1333 = vmul.f32 %v1331, %v1332
          %v1334 = vsub.f32 1.0, %v1333
          %v1335 = vmul.f32 %v1332, %v1334
          %v1336 = vadd.f32 %v1332, %v1335
          %vm1337 = vweird.f32 %v1331
          %vm1338 = vweird.f32 %v1332
          %vm1339 = vmor %vm1337, %vm1338
          %v1340 = vsel %vm1339, %v1332, %v1336
          %v1341 = vand.u32 2147483647, %v1331
          %vm1342 = vcmp.eq.f32.partialorder %v1341, 8.507059e+37
          %v1343 = vand.u32 %v1331, 2147483648
          %v1344 = vor.u32 1.1754944e-38, %v1343
          %v1345 = vsel %vm1342, %v1344, %v1340
          %v1346 = vmul.f32 1.0, %v1345
          %v1347 = vmul.f32 %v1326, %v1305
          %v1348 = vadd.f32 %v1245, %v1347
          %v1349 = vtanh.pop %v1348
          %v1350 = vsub.f32 1.0, %v1346
          %v1351 = vmul.f32 %v1350, %v1349
          %v1352 = vmul.f32 %v1346, %v1184
          %v1353 = vadd.f32 %v1351, %v1352
          %1354 = vst [vmem:[#allocation2 + $0x2] sm:$0x1] %v1353
          %v1355 = vld [vmem:[#allocation6 + $0x3] sm:$0x1]
          %1356 = vmatpush.msra.mxu0 %v781
          %1357 = vmatpush.msra.mxu0 %v778
          %1358 = vmatpush.msra.mxu0 %v775
          %1359 = vmatpush.msra.mxu0 %v772
          %1360 = vmatpush.msra.mxu0 %v769
          %1361 = vmatpush.msra.mxu0 %v766
          %1362 = vmatpush.msra.mxu0 %v763
          %1363 = vmatpush.msra.mxu0 %v760
          %1364 = vmatpush.msra.mxu0 %v757
          %1365 = vmatpush.msra.mxu0 %v754
          %1366 = vmatpush.msra.mxu0 %v751
          %1367 = vmatpush.msra.mxu0 %v748
          %1368 = vmatpush.msra.mxu0 %v745
          %1369 = vmatpush.msra.mxu0 %v742
          %1370 = vmatpush.msra.mxu0 %v739
          %1371 = vmatpush.msra.mxu0 %v736
          %1372 = vmatmul.f32.gmra.mxu0 %v1355
          %v1373 = vpop.f32.mrf.mxu0
          %v1374 = vadd.f32 %v836, %v1373
          %1375 = vdwg.mxu0
          %1376 = vmatpush.msra.mxu0 %v782
          %1377 = vmatpush.msra.mxu0 %v779
          %1378 = vmatpush.msra.mxu0 %v776
          %1379 = vmatpush.msra.mxu0 %v773
          %1380 = vmatpush.msra.mxu0 %v770
          %1381 = vmatpush.msra.mxu0 %v767
          %1382 = vmatpush.msra.mxu0 %v764
          %1383 = vmatpush.msra.mxu0 %v761
          %1384 = vmatpush.msra.mxu0 %v758
          %1385 = vmatpush.msra.mxu0 %v755
          %1386 = vmatpush.msra.mxu0 %v752
          %1387 = vmatpush.msra.mxu0 %v749
          %1388 = vmatpush.msra.mxu0 %v746
          %1389 = vmatpush.msra.mxu0 %v743
          %1390 = vmatpush.msra.mxu0 %v740
          %1391 = vmatpush.msra.mxu0 %v737
          %1392 = vmatmul.f32.gmra.mxu0 %v1355
          %v1393 = vpop.f32.mrf.mxu0
          %v1394 = vadd.f32 %v837, %v1393
          %1395 = vdwg.mxu0
          %1396 = vmatpush.msra.mxu0 %v783
          %1397 = vmatpush.msra.mxu0 %v780
          %1398 = vmatpush.msra.mxu0 %v777
          %1399 = vmatpush.msra.mxu0 %v774
          %1400 = vmatpush.msra.mxu0 %v771
          %1401 = vmatpush.msra.mxu0 %v768
          %1402 = vmatpush.msra.mxu0 %v765
          %1403 = vmatpush.msra.mxu0 %v762
          %1404 = vmatpush.msra.mxu0 %v759
          %1405 = vmatpush.msra.mxu0 %v756
          %1406 = vmatpush.msra.mxu0 %v753
          %1407 = vmatpush.msra.mxu0 %v750
          %1408 = vmatpush.msra.mxu0 %v747
          %1409 = vmatpush.msra.mxu0 %v744
          %1410 = vmatpush.msra.mxu0 %v741
          %1411 = vmatpush.msra.mxu0 %v738
          %1412 = vmatmul.f32.gmra.mxu0 %v1355
          %v1413 = vpop.f32.mrf.mxu0
          %v1414 = vadd.f32 %v838, %v1413
          %1415 = vdwg.mxu0
          %1416 = vmatpush.msra.mxu0 %v829
          %1417 = vmatpush.msra.mxu0 %v826
          %1418 = vmatpush.msra.mxu0 %v823
          %1419 = vmatpush.msra.mxu0 %v820
          %1420 = vmatpush.msra.mxu0 %v817
          %1421 = vmatpush.msra.mxu0 %v814
          %1422 = vmatpush.msra.mxu0 %v811
          %1423 = vmatpush.msra.mxu0 %v808
          %1424 = vmatpush.msra.mxu0 %v805
          %1425 = vmatpush.msra.mxu0 %v802
          %1426 = vmatpush.msra.mxu0 %v799
          %1427 = vmatpush.msra.mxu0 %v796
          %1428 = vmatpush.msra.mxu0 %v793
          %1429 = vmatpush.msra.mxu0 %v790
          %1430 = vmatpush.msra.mxu0 %v787
          %1431 = vmatpush.msra.mxu0 %v784
          %1432 = vmatmul.f32.gmra.mxu0 %v1353
          %v1433 = vpop.f32.mrf.mxu0
          %v1434 = vadd.f32 %v903, %v1433
          %1435 = vdwg.mxu0
          %1436 = vmatpush.msra.mxu0 %v830
          %1437 = vmatpush.msra.mxu0 %v827
          %1438 = vmatpush.msra.mxu0 %v824
          %1439 = vmatpush.msra.mxu0 %v821
          %1440 = vmatpush.msra.mxu0 %v818
          %1441 = vmatpush.msra.mxu0 %v815
          %1442 = vmatpush.msra.mxu0 %v812
          %1443 = vmatpush.msra.mxu0 %v809
          %1444 = vmatpush.msra.mxu0 %v806
          %1445 = vmatpush.msra.mxu0 %v803
          %1446 = vmatpush.msra.mxu0 %v800
          %1447 = vmatpush.msra.mxu0 %v797
          %1448 = vmatpush.msra.mxu0 %v794
          %1449 = vmatpush.msra.mxu0 %v791
          %1450 = vmatpush.msra.mxu0 %v788
          %1451 = vmatpush.msra.mxu0 %v785
          %1452 = vmatmul.f32.gmra.mxu0 %v1353
          %v1453 = vpop.f32.mrf.mxu0
          %v1454 = vadd.f32 %v904, %v1453
          %1455 = vdwg.mxu0
          %1456 = vmatpush.msra.mxu0 %v831
          %1457 = vmatpush.msra.mxu0 %v828
          %1458 = vmatpush.msra.mxu0 %v825
          %1459 = vmatpush.msra.mxu0 %v822
          %1460 = vmatpush.msra.mxu0 %v819
          %1461 = vmatpush.msra.mxu0 %v816
          %1462 = vmatpush.msra.mxu0 %v813
          %1463 = vmatpush.msra.mxu0 %v810
          %1464 = vmatpush.msra.mxu0 %v807
          %1465 = vmatpush.msra.mxu0 %v804
          %1466 = vmatpush.msra.mxu0 %v801
          %1467 = vmatpush.msra.mxu0 %v798
          %1468 = vmatpush.msra.mxu0 %v795
          %1469 = vmatpush.msra.mxu0 %v792
          %1470 = vmatpush.msra.mxu0 %v789
          %1471 = vmatpush.msra.mxu0 %v786
          %1472 = vmatmul.f32.gmra.mxu0 %v1353
          %v1473 = vpop.f32.mrf.mxu0
          %v1474 = vadd.f32 %v905, %v1473
          %1475 = vdwg.mxu0
          %v1476 = vadd.f32 %v1374, %v1434
          %v1477 = vsub.f32 0.0, %v1476
          %v1478 = vmul.f32 %v1477, 1.442695
          %v1479 = vpow.pop %v1478
          %v1480 = vadd.f32 %v1479, 1.0
          %v1481 = vrcp.pop %v1480
          %v1482 = vmul.f32 %v1480, %v1481
          %v1483 = vsub.f32 1.0, %v1482
          %v1484 = vmul.f32 %v1481, %v1483
          %v1485 = vadd.f32 %v1481, %v1484
          %vm1486 = vweird.f32 %v1480
          %vm1487 = vweird.f32 %v1481
          %vm1488 = vmor %vm1486, %vm1487
          %v1489 = vsel %vm1488, %v1481, %v1485
          %v1490 = vand.u32 2147483647, %v1480
          %vm1491 = vcmp.eq.f32.partialorder %v1490, 8.507059e+37
          %v1492 = vand.u32 %v1480, 2147483648
          %v1493 = vor.u32 1.1754944e-38, %v1492
          %v1494 = vsel %vm1491, %v1493, %v1489
          %v1495 = vmul.f32 1.0, %v1494
          %v1496 = vadd.f32 %v1394, %v1454
          %v1497 = vsub.f32 0.0, %v1496
          %v1498 = vmul.f32 %v1497, 1.442695
          %v1499 = vpow.pop %v1498
          %v1500 = vadd.f32 %v1499, 1.0
          %v1501 = vrcp.pop %v1500
          %v1502 = vmul.f32 %v1500, %v1501
          %v1503 = vsub.f32 1.0, %v1502
          %v1504 = vmul.f32 %v1501, %v1503
          %v1505 = vadd.f32 %v1501, %v1504
          %vm1506 = vweird.f32 %v1500
          %vm1507 = vweird.f32 %v1501
          %vm1508 = vmor %vm1506, %vm1507
          %v1509 = vsel %vm1508, %v1501, %v1505
          %v1510 = vand.u32 2147483647, %v1500
          %vm1511 = vcmp.eq.f32.partialorder %v1510, 8.507059e+37
          %v1512 = vand.u32 %v1500, 2147483648
          %v1513 = vor.u32 1.1754944e-38, %v1512
          %v1514 = vsel %vm1511, %v1513, %v1509
          %v1515 = vmul.f32 1.0, %v1514
          %v1516 = vmul.f32 %v1495, %v1474
          %v1517 = vadd.f32 %v1414, %v1516
          %v1518 = vtanh.pop %v1517
          %v1519 = vsub.f32 1.0, %v1515
          %v1520 = vmul.f32 %v1519, %v1518
          %v1521 = vmul.f32 %v1515, %v1353
          %v1522 = vadd.f32 %v1520, %v1521
          %1523 = vst [vmem:[#allocation2 + $0x3] sm:$0x1] %v1522
          %v1524 = vld [vmem:[#allocation6 + $0x4] sm:$0x1]
          %1525 = vmatpush.msra.mxu0 %v781
          %1526 = vmatpush.msra.mxu0 %v778
          %1527 = vmatpush.msra.mxu0 %v775
          %1528 = vmatpush.msra.mxu0 %v772
          %1529 = vmatpush.msra.mxu0 %v769
          %1530 = vmatpush.msra.mxu0 %v766
          %1531 = vmatpush.msra.mxu0 %v763
          %1532 = vmatpush.msra.mxu0 %v760
          %1533 = vmatpush.msra.mxu0 %v757
          %1534 = vmatpush.msra.mxu0 %v754
          %1535 = vmatpush.msra.mxu0 %v751
          %1536 = vmatpush.msra.mxu0 %v748
          %1537 = vmatpush.msra.mxu0 %v745
          %1538 = vmatpush.msra.mxu0 %v742
          %1539 = vmatpush.msra.mxu0 %v739
          %1540 = vmatpush.msra.mxu0 %v736
          %1541 = vmatmul.f32.gmra.mxu0 %v1524
          %v1542 = vpop.f32.mrf.mxu0
          %v1543 = vadd.f32 %v836, %v1542
          %1544 = vdwg.mxu0
          %1545 = vmatpush.msra.mxu0 %v782
          %1546 = vmatpush.msra.mxu0 %v779
          %1547 = vmatpush.msra.mxu0 %v776
          %1548 = vmatpush.msra.mxu0 %v773
          %1549 = vmatpush.msra.mxu0 %v770
          %1550 = vmatpush.msra.mxu0 %v767
          %1551 = vmatpush.msra.mxu0 %v764
          %1552 = vmatpush.msra.mxu0 %v761
          %1553 = vmatpush.msra.mxu0 %v758
          %1554 = vmatpush.msra.mxu0 %v755
          %1555 = vmatpush.msra.mxu0 %v752
          %1556 = vmatpush.msra.mxu0 %v749
          %1557 = vmatpush.msra.mxu0 %v746
          %1558 = vmatpush.msra.mxu0 %v743
          %1559 = vmatpush.msra.mxu0 %v740
          %1560 = vmatpush.msra.mxu0 %v737
          %1561 = vmatmul.f32.gmra.mxu0 %v1524
          %v1562 = vpop.f32.mrf.mxu0
          %v1563 = vadd.f32 %v837, %v1562
          %1564 = vdwg.mxu0
          %1565 = vmatpush.msra.mxu0 %v783
          %1566 = vmatpush.msra.mxu0 %v780
          %1567 = vmatpush.msra.mxu0 %v777
          %1568 = vmatpush.msra.mxu0 %v774
          %1569 = vmatpush.msra.mxu0 %v771
          %1570 = vmatpush.msra.mxu0 %v768
          %1571 = vmatpush.msra.mxu0 %v765
          %1572 = vmatpush.msra.mxu0 %v762
          %1573 = vmatpush.msra.mxu0 %v759
          %1574 = vmatpush.msra.mxu0 %v756
          %1575 = vmatpush.msra.mxu0 %v753
          %1576 = vmatpush.msra.mxu0 %v750
          %1577 = vmatpush.msra.mxu0 %v747
          %1578 = vmatpush.msra.mxu0 %v744
          %1579 = vmatpush.msra.mxu0 %v741
          %1580 = vmatpush.msra.mxu0 %v738
          %1581 = vmatmul.f32.gmra.mxu0 %v1524
          %v1582 = vpop.f32.mrf.mxu0
          %v1583 = vadd.f32 %v838, %v1582
          %1584 = vdwg.mxu0
          %1585 = vmatpush.msra.mxu0 %v829
          %1586 = vmatpush.msra.mxu0 %v826
          %1587 = vmatpush.msra.mxu0 %v823
          %1588 = vmatpush.msra.mxu0 %v820
          %1589 = vmatpush.msra.mxu0 %v817
          %1590 = vmatpush.msra.mxu0 %v814
          %1591 = vmatpush.msra.mxu0 %v811
          %1592 = vmatpush.msra.mxu0 %v808
          %1593 = vmatpush.msra.mxu0 %v805
          %1594 = vmatpush.msra.mxu0 %v802
          %1595 = vmatpush.msra.mxu0 %v799
          %1596 = vmatpush.msra.mxu0 %v796
          %1597 = vmatpush.msra.mxu0 %v793
          %1598 = vmatpush.msra.mxu0 %v790
          %1599 = vmatpush.msra.mxu0 %v787
          %1600 = vmatpush.msra.mxu0 %v784
          %1601 = vmatmul.f32.gmra.mxu0 %v1522
          %v1602 = vpop.f32.mrf.mxu0
          %v1603 = vadd.f32 %v903, %v1602
          %1604 = vdwg.mxu0
          %1605 = vmatpush.msra.mxu0 %v830
          %1606 = vmatpush.msra.mxu0 %v827
          %1607 = vmatpush.msra.mxu0 %v824
          %1608 = vmatpush.msra.mxu0 %v821
          %1609 = vmatpush.msra.mxu0 %v818
          %1610 = vmatpush.msra.mxu0 %v815
          %1611 = vmatpush.msra.mxu0 %v812
          %1612 = vmatpush.msra.mxu0 %v809
          %1613 = vmatpush.msra.mxu0 %v806
          %1614 = vmatpush.msra.mxu0 %v803
          %1615 = vmatpush.msra.mxu0 %v800
          %1616 = vmatpush.msra.mxu0 %v797
          %1617 = vmatpush.msra.mxu0 %v794
          %1618 = vmatpush.msra.mxu0 %v791
          %1619 = vmatpush.msra.mxu0 %v788
          %1620 = vmatpush.msra.mxu0 %v785
          %1621 = vmatmul.f32.gmra.mxu0 %v1522
          %v1622 = vpop.f32.mrf.mxu0
          %v1623 = vadd.f32 %v904, %v1622
          %1624 = vdwg.mxu0
          %1625 = vmatpush.msra.mxu0 %v831
          %1626 = vmatpush.msra.mxu0 %v828
          %1627 = vmatpush.msra.mxu0 %v825
          %1628 = vmatpush.msra.mxu0 %v822
          %1629 = vmatpush.msra.mxu0 %v819
          %1630 = vmatpush.msra.mxu0 %v816
          %1631 = vmatpush.msra.mxu0 %v813
          %1632 = vmatpush.msra.mxu0 %v810
          %1633 = vmatpush.msra.mxu0 %v807
          %1634 = vmatpush.msra.mxu0 %v804
          %1635 = vmatpush.msra.mxu0 %v801
          %1636 = vmatpush.msra.mxu0 %v798
          %1637 = vmatpush.msra.mxu0 %v795
          %1638 = vmatpush.msra.mxu0 %v792
          %1639 = vmatpush.msra.mxu0 %v789
          %1640 = vmatpush.msra.mxu0 %v786
          %1641 = vmatmul.f32.gmra.mxu0 %v1522
          %v1642 = vpop.f32.mrf.mxu0
          %v1643 = vadd.f32 %v905, %v1642
          %1644 = vdwg.mxu0
          %v1645 = vadd.f32 %v1543, %v1603
          %v1646 = vsub.f32 0.0, %v1645
          %v1647 = vmul.f32 %v1646, 1.442695
          %v1648 = vpow.pop %v1647
          %v1649 = vadd.f32 %v1648, 1.0
          %v1650 = vrcp.pop %v1649
          %v1651 = vmul.f32 %v1649, %v1650
          %v1652 = vsub.f32 1.0, %v1651
          %v1653 = vmul.f32 %v1650, %v1652
          %v1654 = vadd.f32 %v1650, %v1653
          %vm1655 = vweird.f32 %v1649
          %vm1656 = vweird.f32 %v1650
          %vm1657 = vmor %vm1655, %vm1656
          %v1658 = vsel %vm1657, %v1650, %v1654
          %v1659 = vand.u32 2147483647, %v1649
          %vm1660 = vcmp.eq.f32.partialorder %v1659, 8.507059e+37
          %v1661 = vand.u32 %v1649, 2147483648
          %v1662 = vor.u32 1.1754944e-38, %v1661
          %v1663 = vsel %vm1660, %v1662, %v1658
          %v1664 = vmul.f32 1.0, %v1663
          %v1665 = vadd.f32 %v1563, %v1623
          %v1666 = vsub.f32 0.0, %v1665
          %v1667 = vmul.f32 %v1666, 1.442695
          %v1668 = vpow.pop %v1667
          %v1669 = vadd.f32 %v1668, 1.0
          %v1670 = vrcp.pop %v1669
          %v1671 = vmul.f32 %v1669, %v1670
          %v1672 = vsub.f32 1.0, %v1671
          %v1673 = vmul.f32 %v1670, %v1672
          %v1674 = vadd.f32 %v1670, %v1673
          %vm1675 = vweird.f32 %v1669
          %vm1676 = vweird.f32 %v1670
          %vm1677 = vmor %vm1675, %vm1676
          %v1678 = vsel %vm1677, %v1670, %v1674
          %v1679 = vand.u32 2147483647, %v1669
          %vm1680 = vcmp.eq.f32.partialorder %v1679, 8.507059e+37
          %v1681 = vand.u32 %v1669, 2147483648
          %v1682 = vor.u32 1.1754944e-38, %v1681
          %v1683 = vsel %vm1680, %v1682, %v1678
          %v1684 = vmul.f32 1.0, %v1683
          %v1685 = vmul.f32 %v1664, %v1643
          %v1686 = vadd.f32 %v1583, %v1685
          %v1687 = vtanh.pop %v1686
          %v1688 = vsub.f32 1.0, %v1684
          %v1689 = vmul.f32 %v1688, %v1687
          %v1690 = vmul.f32 %v1684, %v1522
          %v1691 = vadd.f32 %v1689, %v1690
          %1692 = vst [vmem:[#allocation2 + $0x4] sm:$0x1] %v1691
          %v1693 = vld [vmem:[#allocation6 + $0x5] sm:$0x1]
          %1694 = vmatpush.msra.mxu0 %v781
          %1695 = vmatpush.msra.mxu0 %v778
          %1696 = vmatpush.msra.mxu0 %v775
          %1697 = vmatpush.msra.mxu0 %v772
          %1698 = vmatpush.msra.mxu0 %v769
          %1699 = vmatpush.msra.mxu0 %v766
          %1700 = vmatpush.msra.mxu0 %v763
          %1701 = vmatpush.msra.mxu0 %v760
          %1702 = vmatpush.msra.mxu0 %v757
          %1703 = vmatpush.msra.mxu0 %v754
          %1704 = vmatpush.msra.mxu0 %v751
          %1705 = vmatpush.msra.mxu0 %v748
          %1706 = vmatpush.msra.mxu0 %v745
          %1707 = vmatpush.msra.mxu0 %v742
          %1708 = vmatpush.msra.mxu0 %v739
          %1709 = vmatpush.msra.mxu0 %v736
          %1710 = vmatmul.f32.gmra.mxu0 %v1693
          %v1711 = vpop.f32.mrf.mxu0
          %v1712 = vadd.f32 %v836, %v1711
          %1713 = vdwg.mxu0
          %1714 = vmatpush.msra.mxu0 %v782
          %1715 = vmatpush.msra.mxu0 %v779
          %1716 = vmatpush.msra.mxu0 %v776
          %1717 = vmatpush.msra.mxu0 %v773
          %1718 = vmatpush.msra.mxu0 %v770
          %1719 = vmatpush.msra.mxu0 %v767
          %1720 = vmatpush.msra.mxu0 %v764
          %1721 = vmatpush.msra.mxu0 %v761
          %1722 = vmatpush.msra.mxu0 %v758
          %1723 = vmatpush.msra.mxu0 %v755
          %1724 = vmatpush.msra.mxu0 %v752
          %1725 = vmatpush.msra.mxu0 %v749
          %1726 = vmatpush.msra.mxu0 %v746
          %1727 = vmatpush.msra.mxu0 %v743
          %1728 = vmatpush.msra.mxu0 %v740
          %1729 = vmatpush.msra.mxu0 %v737
          %1730 = vmatmul.f32.gmra.mxu0 %v1693
          %v1731 = vpop.f32.mrf.mxu0
          %v1732 = vadd.f32 %v837, %v1731
          %1733 = vdwg.mxu0
          %1734 = vmatpush.msra.mxu0 %v783
          %1735 = vmatpush.msra.mxu0 %v780
          %1736 = vmatpush.msra.mxu0 %v777
          %1737 = vmatpush.msra.mxu0 %v774
          %1738 = vmatpush.msra.mxu0 %v771
          %1739 = vmatpush.msra.mxu0 %v768
          %1740 = vmatpush.msra.mxu0 %v765
          %1741 = vmatpush.msra.mxu0 %v762
          %1742 = vmatpush.msra.mxu0 %v759
          %1743 = vmatpush.msra.mxu0 %v756
          %1744 = vmatpush.msra.mxu0 %v753
          %1745 = vmatpush.msra.mxu0 %v750
          %1746 = vmatpush.msra.mxu0 %v747
          %1747 = vmatpush.msra.mxu0 %v744
          %1748 = vmatpush.msra.mxu0 %v741
          %1749 = vmatpush.msra.mxu0 %v738
          %1750 = vmatmul.f32.gmra.mxu0 %v1693
          %v1751 = vpop.f32.mrf.mxu0
          %v1752 = vadd.f32 %v838, %v1751
          %1753 = vdwg.mxu0
          %1754 = vmatpush.msra.mxu0 %v829
          %1755 = vmatpush.msra.mxu0 %v826
          %1756 = vmatpush.msra.mxu0 %v823
          %1757 = vmatpush.msra.mxu0 %v820
          %1758 = vmatpush.msra.mxu0 %v817
          %1759 = vmatpush.msra.mxu0 %v814
          %1760 = vmatpush.msra.mxu0 %v811
          %1761 = vmatpush.msra.mxu0 %v808
          %1762 = vmatpush.msra.mxu0 %v805
          %1763 = vmatpush.msra.mxu0 %v802
          %1764 = vmatpush.msra.mxu0 %v799
          %1765 = vmatpush.msra.mxu0 %v796
          %1766 = vmatpush.msra.mxu0 %v793
          %1767 = vmatpush.msra.mxu0 %v790
          %1768 = vmatpush.msra.mxu0 %v787
          %1769 = vmatpush.msra.mxu0 %v784
          %1770 = vmatmul.f32.gmra.mxu0 %v1691
          %v1771 = vpop.f32.mrf.mxu0
          %v1772 = vadd.f32 %v903, %v1771
          %1773 = vdwg.mxu0
          %1774 = vmatpush.msra.mxu0 %v830
          %1775 = vmatpush.msra.mxu0 %v827
          %1776 = vmatpush.msra.mxu0 %v824
          %1777 = vmatpush.msra.mxu0 %v821
          %1778 = vmatpush.msra.mxu0 %v818
          %1779 = vmatpush.msra.mxu0 %v815
          %1780 = vmatpush.msra.mxu0 %v812
          %1781 = vmatpush.msra.mxu0 %v809
          %1782 = vmatpush.msra.mxu0 %v806
          %1783 = vmatpush.msra.mxu0 %v803
          %1784 = vmatpush.msra.mxu0 %v800
          %1785 = vmatpush.msra.mxu0 %v797
          %1786 = vmatpush.msra.mxu0 %v794
          %1787 = vmatpush.msra.mxu0 %v791
          %1788 = vmatpush.msra.mxu0 %v788
          %1789 = vmatpush.msra.mxu0 %v785
          %1790 = vmatmul.f32.gmra.mxu0 %v1691
          %v1791 = vpop.f32.mrf.mxu0
          %v1792 = vadd.f32 %v904, %v1791
          %1793 = vdwg.mxu0
          %1794 = vmatpush.msra.mxu0 %v831
          %1795 = vmatpush.msra.mxu0 %v828
          %1796 = vmatpush.msra.mxu0 %v825
          %1797 = vmatpush.msra.mxu0 %v822
          %1798 = vmatpush.msra.mxu0 %v819
          %1799 = vmatpush.msra.mxu0 %v816
          %1800 = vmatpush.msra.mxu0 %v813
          %1801 = vmatpush.msra.mxu0 %v810
          %1802 = vmatpush.msra.mxu0 %v807
          %1803 = vmatpush.msra.mxu0 %v804
          %1804 = vmatpush.msra.mxu0 %v801
          %1805 = vmatpush.msra.mxu0 %v798
          %1806 = vmatpush.msra.mxu0 %v795
          %1807 = vmatpush.msra.mxu0 %v792
          %1808 = vmatpush.msra.mxu0 %v789
          %1809 = vmatpush.msra.mxu0 %v786
          %1810 = vmatmul.f32.gmra.mxu0 %v1691
          %v1811 = vpop.f32.mrf.mxu0
          %v1812 = vadd.f32 %v905, %v1811
          %1813 = vdwg.mxu0
          %v1814 = vadd.f32 %v1712, %v1772
          %v1815 = vsub.f32 0.0, %v1814
          %v1816 = vmul.f32 %v1815, 1.442695
          %v1817 = vpow.pop %v1816
          %v1818 = vadd.f32 %v1817, 1.0
          %v1819 = vrcp.pop %v1818
          %v1820 = vmul.f32 %v1818, %v1819
          %v1821 = vsub.f32 1.0, %v1820
          %v1822 = vmul.f32 %v1819, %v1821
          %v1823 = vadd.f32 %v1819, %v1822
          %vm1824 = vweird.f32 %v1818
          %vm1825 = vweird.f32 %v1819
          %vm1826 = vmor %vm1824, %vm1825
          %v1827 = vsel %vm1826, %v1819, %v1823
          %v1828 = vand.u32 2147483647, %v1818
          %vm1829 = vcmp.eq.f32.partialorder %v1828, 8.507059e+37
          %v1830 = vand.u32 %v1818, 2147483648
          %v1831 = vor.u32 1.1754944e-38, %v1830
          %v1832 = vsel %vm1829, %v1831, %v1827
          %v1833 = vmul.f32 1.0, %v1832
          %v1834 = vadd.f32 %v1732, %v1792
          %v1835 = vsub.f32 0.0, %v1834
          %v1836 = vmul.f32 %v1835, 1.442695
          %v1837 = vpow.pop %v1836
          %v1838 = vadd.f32 %v1837, 1.0
          %v1839 = vrcp.pop %v1838
          %v1840 = vmul.f32 %v1838, %v1839
          %v1841 = vsub.f32 1.0, %v1840
          %v1842 = vmul.f32 %v1839, %v1841
          %v1843 = vadd.f32 %v1839, %v1842
          %vm1844 = vweird.f32 %v1838
          %vm1845 = vweird.f32 %v1839
          %vm1846 = vmor %vm1844, %vm1845
          %v1847 = vsel %vm1846, %v1839, %v1843
          %v1848 = vand.u32 2147483647, %v1838
          %vm1849 = vcmp.eq.f32.partialorder %v1848, 8.507059e+37
          %v1850 = vand.u32 %v1838, 2147483648
          %v1851 = vor.u32 1.1754944e-38, %v1850
          %v1852 = vsel %vm1849, %v1851, %v1847
          %v1853 = vmul.f32 1.0, %v1852
          %v1854 = vmul.f32 %v1833, %v1812
          %v1855 = vadd.f32 %v1752, %v1854
          %v1856 = vtanh.pop %v1855
          %v1857 = vsub.f32 1.0, %v1853
          %v1858 = vmul.f32 %v1857, %v1856
          %v1859 = vmul.f32 %v1853, %v1691
          %v1860 = vadd.f32 %v1858, %v1859
          %1861 = vst [vmem:[#allocation2 + $0x5] sm:$0x1] %v1860
          %v1862 = vld [vmem:[#allocation6 + $0x6] sm:$0x1]
          %1863 = vmatpush.msra.mxu0 %v781
          %1864 = vmatpush.msra.mxu0 %v778
          %1865 = vmatpush.msra.mxu0 %v775
          %1866 = vmatpush.msra.mxu0 %v772
          %1867 = vmatpush.msra.mxu0 %v769
          %1868 = vmatpush.msra.mxu0 %v766
          %1869 = vmatpush.msra.mxu0 %v763
          %1870 = vmatpush.msra.mxu0 %v760
          %1871 = vmatpush.msra.mxu0 %v757
          %1872 = vmatpush.msra.mxu0 %v754
          %1873 = vmatpush.msra.mxu0 %v751
          %1874 = vmatpush.msra.mxu0 %v748
          %1875 = vmatpush.msra.mxu0 %v745
          %1876 = vmatpush.msra.mxu0 %v742
          %1877 = vmatpush.msra.mxu0 %v739
          %1878 = vmatpush.msra.mxu0 %v736
          %1879 = vmatmul.f32.gmra.mxu0 %v1862
          %v1880 = vpop.f32.mrf.mxu0
          %v1881 = vadd.f32 %v836, %v1880
          %1882 = vdwg.mxu0
          %1883 = vmatpush.msra.mxu0 %v782
          %1884 = vmatpush.msra.mxu0 %v779
          %1885 = vmatpush.msra.mxu0 %v776
          %1886 = vmatpush.msra.mxu0 %v773
          %1887 = vmatpush.msra.mxu0 %v770
          %1888 = vmatpush.msra.mxu0 %v767
          %1889 = vmatpush.msra.mxu0 %v764
          %1890 = vmatpush.msra.mxu0 %v761
          %1891 = vmatpush.msra.mxu0 %v758
          %1892 = vmatpush.msra.mxu0 %v755
          %1893 = vmatpush.msra.mxu0 %v752
          %1894 = vmatpush.msra.mxu0 %v749
          %1895 = vmatpush.msra.mxu0 %v746
          %1896 = vmatpush.msra.mxu0 %v743
          %1897 = vmatpush.msra.mxu0 %v740
          %1898 = vmatpush.msra.mxu0 %v737
          %1899 = vmatmul.f32.gmra.mxu0 %v1862
          %v1900 = vpop.f32.mrf.mxu0
          %v1901 = vadd.f32 %v837, %v1900
          %1902 = vdwg.mxu0
          %1903 = vmatpush.msra.mxu0 %v783
          %1904 = vmatpush.msra.mxu0 %v780
          %1905 = vmatpush.msra.mxu0 %v777
          %1906 = vmatpush.msra.mxu0 %v774
          %1907 = vmatpush.msra.mxu0 %v771
          %1908 = vmatpush.msra.mxu0 %v768
          %1909 = vmatpush.msra.mxu0 %v765
          %1910 = vmatpush.msra.mxu0 %v762
          %1911 = vmatpush.msra.mxu0 %v759
          %1912 = vmatpush.msra.mxu0 %v756
          %1913 = vmatpush.msra.mxu0 %v753
          %1914 = vmatpush.msra.mxu0 %v750
          %1915 = vmatpush.msra.mxu0 %v747
          %1916 = vmatpush.msra.mxu0 %v744
          %1917 = vmatpush.msra.mxu0 %v741
          %1918 = vmatpush.msra.mxu0 %v738
          %1919 = vmatmul.f32.gmra.mxu0 %v1862
          %v1920 = vpop.f32.mrf.mxu0
          %v1921 = vadd.f32 %v838, %v1920
          %1922 = vdwg.mxu0
          %1923 = vmatpush.msra.mxu0 %v829
          %1924 = vmatpush.msra.mxu0 %v826
          %1925 = vmatpush.msra.mxu0 %v823
          %1926 = vmatpush.msra.mxu0 %v820
          %1927 = vmatpush.msra.mxu0 %v817
          %1928 = vmatpush.msra.mxu0 %v814
          %1929 = vmatpush.msra.mxu0 %v811
          %1930 = vmatpush.msra.mxu0 %v808
          %1931 = vmatpush.msra.mxu0 %v805
          %1932 = vmatpush.msra.mxu0 %v802
          %1933 = vmatpush.msra.mxu0 %v799
          %1934 = vmatpush.msra.mxu0 %v796
          %1935 = vmatpush.msra.mxu0 %v793
          %1936 = vmatpush.msra.mxu0 %v790
          %1937 = vmatpush.msra.mxu0 %v787
          %1938 = vmatpush.msra.mxu0 %v784
          %1939 = vmatmul.f32.gmra.mxu0 %v1860
          %v1940 = vpop.f32.mrf.mxu0
          %v1941 = vadd.f32 %v903, %v1940
          %1942 = vdwg.mxu0
          %1943 = vmatpush.msra.mxu0 %v830
          %1944 = vmatpush.msra.mxu0 %v827
          %1945 = vmatpush.msra.mxu0 %v824
          %1946 = vmatpush.msra.mxu0 %v821
          %1947 = vmatpush.msra.mxu0 %v818
          %1948 = vmatpush.msra.mxu0 %v815
          %1949 = vmatpush.msra.mxu0 %v812
          %1950 = vmatpush.msra.mxu0 %v809
          %1951 = vmatpush.msra.mxu0 %v806
          %1952 = vmatpush.msra.mxu0 %v803
          %1953 = vmatpush.msra.mxu0 %v800
          %1954 = vmatpush.msra.mxu0 %v797
          %1955 = vmatpush.msra.mxu0 %v794
          %1956 = vmatpush.msra.mxu0 %v791
          %1957 = vmatpush.msra.mxu0 %v788
          %1958 = vmatpush.msra.mxu0 %v785
          %1959 = vmatmul.f32.gmra.mxu0 %v1860
          %v1960 = vpop.f32.mrf.mxu0
          %v1961 = vadd.f32 %v904, %v1960
          %1962 = vdwg.mxu0
          %1963 = vmatpush.msra.mxu0 %v831
          %1964 = vmatpush.msra.mxu0 %v828
          %1965 = vmatpush.msra.mxu0 %v825
          %1966 = vmatpush.msra.mxu0 %v822
          %1967 = vmatpush.msra.mxu0 %v819
          %1968 = vmatpush.msra.mxu0 %v816
          %1969 = vmatpush.msra.mxu0 %v813
          %1970 = vmatpush.msra.mxu0 %v810
          %1971 = vmatpush.msra.mxu0 %v807
          %1972 = vmatpush.msra.mxu0 %v804
          %1973 = vmatpush.msra.mxu0 %v801
          %1974 = vmatpush.msra.mxu0 %v798
          %1975 = vmatpush.msra.mxu0 %v795
          %1976 = vmatpush.msra.mxu0 %v792
          %1977 = vmatpush.msra.mxu0 %v789
          %1978 = vmatpush.msra.mxu0 %v786
          %1979 = vmatmul.f32.gmra.mxu0 %v1860
          %v1980 = vpop.f32.mrf.mxu0
          %v1981 = vadd.f32 %v905, %v1980
          %1982 = vdwg.mxu0
          %v1983 = vadd.f32 %v1881, %v1941
          %v1984 = vsub.f32 0.0, %v1983
          %v1985 = vmul.f32 %v1984, 1.442695
          %v1986 = vpow.pop %v1985
          %v1987 = vadd.f32 %v1986, 1.0
          %v1988 = vrcp.pop %v1987
          %v1989 = vmul.f32 %v1987, %v1988
          %v1990 = vsub.f32 1.0, %v1989
          %v1991 = vmul.f32 %v1988, %v1990
          %v1992 = vadd.f32 %v1988, %v1991
          %vm1993 = vweird.f32 %v1987
          %vm1994 = vweird.f32 %v1988
          %vm1995 = vmor %vm1993, %vm1994
          %v1996 = vsel %vm1995, %v1988, %v1992
          %v1997 = vand.u32 2147483647, %v1987
          %vm1998 = vcmp.eq.f32.partialorder %v1997, 8.507059e+37
          %v1999 = vand.u32 %v1987, 2147483648
          %v2000 = vor.u32 1.1754944e-38, %v1999
          %v2001 = vsel %vm1998, %v2000, %v1996
          %v2002 = vmul.f32 1.0, %v2001
          %v2003 = vadd.f32 %v1901, %v1961
          %v2004 = vsub.f32 0.0, %v2003
          %v2005 = vmul.f32 %v2004, 1.442695
          %v2006 = vpow.pop %v2005
          %v2007 = vadd.f32 %v2006, 1.0
          %v2008 = vrcp.pop %v2007
          %v2009 = vmul.f32 %v2007, %v2008
          %v2010 = vsub.f32 1.0, %v2009
          %v2011 = vmul.f32 %v2008, %v2010
          %v2012 = vadd.f32 %v2008, %v2011
          %vm2013 = vweird.f32 %v2007
          %vm2014 = vweird.f32 %v2008
          %vm2015 = vmor %vm2013, %vm2014
          %v2016 = vsel %vm2015, %v2008, %v2012
          %v2017 = vand.u32 2147483647, %v2007
          %vm2018 = vcmp.eq.f32.partialorder %v2017, 8.507059e+37
          %v2019 = vand.u32 %v2007, 2147483648
          %v2020 = vor.u32 1.1754944e-38, %v2019
          %v2021 = vsel %vm2018, %v2020, %v2016
          %v2022 = vmul.f32 1.0, %v2021
          %v2023 = vmul.f32 %v2002, %v1981
          %v2024 = vadd.f32 %v1921, %v2023
          %v2025 = vtanh.pop %v2024
          %v2026 = vsub.f32 1.0, %v2022
          %v2027 = vmul.f32 %v2026, %v2025
          %v2028 = vmul.f32 %v2022, %v1860
          %v2029 = vadd.f32 %v2027, %v2028
          %2030 = vst [vmem:[#allocation2 + $0x6] sm:$0x1] %v2029
          %v2031 = vld [vmem:[#allocation6 + $0x7] sm:$0x1]
          %2032 = vmatpush.msra.mxu0 %v781
          %2033 = vmatpush.msra.mxu0 %v778
          %2034 = vmatpush.msra.mxu0 %v775
          %2035 = vmatpush.msra.mxu0 %v772
          %2036 = vmatpush.msra.mxu0 %v769
          %2037 = vmatpush.msra.mxu0 %v766
          %2038 = vmatpush.msra.mxu0 %v763
          %2039 = vmatpush.msra.mxu0 %v760
          %2040 = vmatpush.msra.mxu0 %v757
          %2041 = vmatpush.msra.mxu0 %v754
          %2042 = vmatpush.msra.mxu0 %v751
          %2043 = vmatpush.msra.mxu0 %v748
          %2044 = vmatpush.msra.mxu0 %v745
          %2045 = vmatpush.msra.mxu0 %v742
          %2046 = vmatpush.msra.mxu0 %v739
          %2047 = vmatpush.msra.mxu0 %v736
          %2048 = vmatmul.f32.gmra.mxu0 %v2031
          %v2049 = vpop.f32.mrf.mxu0
          %v2050 = vadd.f32 %v836, %v2049
          %2051 = vdwg.mxu0
          %2052 = vmatpush.msra.mxu0 %v782
          %2053 = vmatpush.msra.mxu0 %v779
          %2054 = vmatpush.msra.mxu0 %v776
          %2055 = vmatpush.msra.mxu0 %v773
          %2056 = vmatpush.msra.mxu0 %v770
          %2057 = vmatpush.msra.mxu0 %v767
          %2058 = vmatpush.msra.mxu0 %v764
          %2059 = vmatpush.msra.mxu0 %v761
          %2060 = vmatpush.msra.mxu0 %v758
          %2061 = vmatpush.msra.mxu0 %v755
          %2062 = vmatpush.msra.mxu0 %v752
          %2063 = vmatpush.msra.mxu0 %v749
          %2064 = vmatpush.msra.mxu0 %v746
          %2065 = vmatpush.msra.mxu0 %v743
          %2066 = vmatpush.msra.mxu0 %v740
          %2067 = vmatpush.msra.mxu0 %v737
          %2068 = vmatmul.f32.gmra.mxu0 %v2031
          %v2069 = vpop.f32.mrf.mxu0
          %v2070 = vadd.f32 %v837, %v2069
          %2071 = vdwg.mxu0
          %2072 = vmatpush.msra.mxu0 %v783
          %2073 = vmatpush.msra.mxu0 %v780
          %2074 = vmatpush.msra.mxu0 %v777
          %2075 = vmatpush.msra.mxu0 %v774
          %2076 = vmatpush.msra.mxu0 %v771
          %2077 = vmatpush.msra.mxu0 %v768
          %2078 = vmatpush.msra.mxu0 %v765
          %2079 = vmatpush.msra.mxu0 %v762
          %2080 = vmatpush.msra.mxu0 %v759
          %2081 = vmatpush.msra.mxu0 %v756
          %2082 = vmatpush.msra.mxu0 %v753
          %2083 = vmatpush.msra.mxu0 %v750
          %2084 = vmatpush.msra.mxu0 %v747
          %2085 = vmatpush.msra.mxu0 %v744
          %2086 = vmatpush.msra.mxu0 %v741
          %2087 = vmatpush.msra.mxu0 %v738
          %2088 = vmatmul.f32.gmra.mxu0 %v2031
          %v2089 = vpop.f32.mrf.mxu0
          %v2090 = vadd.f32 %v838, %v2089
          %2091 = vdwg.mxu0
          %2092 = vmatpush.msra.mxu0 %v829
          %2093 = vmatpush.msra.mxu0 %v826
          %2094 = vmatpush.msra.mxu0 %v823
          %2095 = vmatpush.msra.mxu0 %v820
          %2096 = vmatpush.msra.mxu0 %v817
          %2097 = vmatpush.msra.mxu0 %v814
          %2098 = vmatpush.msra.mxu0 %v811
          %2099 = vmatpush.msra.mxu0 %v808
          %2100 = vmatpush.msra.mxu0 %v805
          %2101 = vmatpush.msra.mxu0 %v802
          %2102 = vmatpush.msra.mxu0 %v799
          %2103 = vmatpush.msra.mxu0 %v796
          %2104 = vmatpush.msra.mxu0 %v793
          %2105 = vmatpush.msra.mxu0 %v790
          %2106 = vmatpush.msra.mxu0 %v787
          %2107 = vmatpush.msra.mxu0 %v784
          %2108 = vmatmul.f32.gmra.mxu0 %v2029
          %v2109 = vpop.f32.mrf.mxu0
          %v2110 = vadd.f32 %v903, %v2109
          %2111 = vdwg.mxu0
          %2112 = vmatpush.msra.mxu0 %v830
          %2113 = vmatpush.msra.mxu0 %v827
          %2114 = vmatpush.msra.mxu0 %v824
          %2115 = vmatpush.msra.mxu0 %v821
          %2116 = vmatpush.msra.mxu0 %v818
          %2117 = vmatpush.msra.mxu0 %v815
          %2118 = vmatpush.msra.mxu0 %v812
          %2119 = vmatpush.msra.mxu0 %v809
          %2120 = vmatpush.msra.mxu0 %v806
          %2121 = vmatpush.msra.mxu0 %v803
          %2122 = vmatpush.msra.mxu0 %v800
          %2123 = vmatpush.msra.mxu0 %v797
          %2124 = vmatpush.msra.mxu0 %v794
          %2125 = vmatpush.msra.mxu0 %v791
          %2126 = vmatpush.msra.mxu0 %v788
          %2127 = vmatpush.msra.mxu0 %v785
          %2128 = vmatmul.f32.gmra.mxu0 %v2029
          %v2129 = vpop.f32.mrf.mxu0
          %v2130 = vadd.f32 %v904, %v2129
          %2131 = vdwg.mxu0
          %2132 = vmatpush.msra.mxu0 %v831
          %2133 = vmatpush.msra.mxu0 %v828
          %2134 = vmatpush.msra.mxu0 %v825
          %2135 = vmatpush.msra.mxu0 %v822
          %2136 = vmatpush.msra.mxu0 %v819
          %2137 = vmatpush.msra.mxu0 %v816
          %2138 = vmatpush.msra.mxu0 %v813
          %2139 = vmatpush.msra.mxu0 %v810
          %2140 = vmatpush.msra.mxu0 %v807
          %2141 = vmatpush.msra.mxu0 %v804
          %2142 = vmatpush.msra.mxu0 %v801
          %2143 = vmatpush.msra.mxu0 %v798
          %2144 = vmatpush.msra.mxu0 %v795
          %2145 = vmatpush.msra.mxu0 %v792
          %2146 = vmatpush.msra.mxu0 %v789
          %2147 = vmatpush.msra.mxu0 %v786
          %2148 = vmatmul.f32.gmra.mxu0 %v2029
          %v2149 = vpop.f32.mrf.mxu0
          %v2150 = vadd.f32 %v905, %v2149
          %2151 = vdwg.mxu0
          %v2152 = vadd.f32 %v2050, %v2110
          %v2153 = vsub.f32 0.0, %v2152
          %v2154 = vmul.f32 %v2153, 1.442695
          %v2155 = vpow.pop %v2154
          %v2156 = vadd.f32 %v2155, 1.0
          %v2157 = vrcp.pop %v2156
          %v2158 = vmul.f32 %v2156, %v2157
          %v2159 = vsub.f32 1.0, %v2158
          %v2160 = vmul.f32 %v2157, %v2159
          %v2161 = vadd.f32 %v2157, %v2160
          %vm2162 = vweird.f32 %v2156
          %vm2163 = vweird.f32 %v2157
          %vm2164 = vmor %vm2162, %vm2163
          %v2165 = vsel %vm2164, %v2157, %v2161
          %v2166 = vand.u32 2147483647, %v2156
          %vm2167 = vcmp.eq.f32.partialorder %v2166, 8.507059e+37
          %v2168 = vand.u32 %v2156, 2147483648
          %v2169 = vor.u32 1.1754944e-38, %v2168
          %v2170 = vsel %vm2167, %v2169, %v2165
          %v2171 = vmul.f32 1.0, %v2170
          %v2172 = vadd.f32 %v2070, %v2130
          %v2173 = vsub.f32 0.0, %v2172
          %v2174 = vmul.f32 %v2173, 1.442695
          %v2175 = vpow.pop %v2174
          %v2176 = vadd.f32 %v2175, 1.0
          %v2177 = vrcp.pop %v2176
          %v2178 = vmul.f32 %v2176, %v2177
          %v2179 = vsub.f32 1.0, %v2178
          %v2180 = vmul.f32 %v2177, %v2179
          %v2181 = vadd.f32 %v2177, %v2180
          %vm2182 = vweird.f32 %v2176
          %vm2183 = vweird.f32 %v2177
          %vm2184 = vmor %vm2182, %vm2183
          %v2185 = vsel %vm2184, %v2177, %v2181
          %v2186 = vand.u32 2147483647, %v2176
          %vm2187 = vcmp.eq.f32.partialorder %v2186, 8.507059e+37
          %v2188 = vand.u32 %v2176, 2147483648
          %v2189 = vor.u32 1.1754944e-38, %v2188
          %v2190 = vsel %vm2187, %v2189, %v2185
          %v2191 = vmul.f32 1.0, %v2190
          %v2192 = vmul.f32 %v2171, %v2150
          %v2193 = vadd.f32 %v2090, %v2192
          %v2194 = vtanh.pop %v2193
          %v2195 = vsub.f32 1.0, %v2191
          %v2196 = vmul.f32 %v2195, %v2194
          %v2197 = vmul.f32 %v2191, %v2029
          %v2198 = vadd.f32 %v2196, %v2197
          %2199 = vst [vmem:[#allocation2 + $0x7] sm:$0x1] %v2198
          %2200 = vst [vmem:[#allocation3] sm:$0x1] %v2198
          %v2201 = vlaneseq
          %v2202 = vand.u32 %v2201, 127
          %vm2203 = vcmp.eq.s32.totalorder %v2202, 0
          %v2204 = vsel %vm2203, 1, 0
          %v2205 = vcvt.s32.f32 %v2204
          %2206 = vst [vmem:[#allocation4] sm:$0x1] %v2205
          %vm2207 = vcmask 0
          %2208 = vst.msk [vmem:[#allocation5] sm:$0x1] %vm2207, 0.0
          %2209 = vst.msk [vmem:[#allocation27] sm:$0x1] %vm2207, 0
        $region136: #{tpu_custom_call.1} parent=83 // pred_fallthru
          _
        %v2210 = vld [vmem:[#allocation5] sm:$0x1]
        %vm2211 = vcmp.lt.f32.partialorder %v2210, 0.5
        %v2212 = vld [vmem:[#allocation3] sm:$0x1]
        %v2213 = vld [vmem:[#allocation4] sm:$0x1]
        %v2214 = vld [vmem:[#allocation9] sm:$0xff]
        %v2215 = vld [vmem:[#allocation9 + $0x8] sm:$0xff]
        %v2216 = vld [vmem:[#allocation9 + $0x10] sm:$0xff]
        %v2217 = vld [vmem:[#allocation9 + $0x18] sm:$0xff]
        %v2218 = vld [vmem:[#allocation9 + $0x20] sm:$0xff]
        %v2219 = vld [vmem:[#allocation9 + $0x28] sm:$0xff]
        %v2220 = vld [vmem:[#allocation9 + $0x30] sm:$0xff]
        %v2221 = vld [vmem:[#allocation9 + $0x38] sm:$0xff]
        %v2222 = vld [vmem:[#allocation9 + $0x40] sm:$0xff]
        %v2223 = vld [vmem:[#allocation9 + $0x48] sm:$0xff]
        %v2224 = vld [vmem:[#allocation9 + $0x50] sm:$0xff]
        %v2225 = vld [vmem:[#allocation9 + $0x58] sm:$0xff]
        %v2226 = vld [vmem:[#allocation9 + $0x60] sm:$0xff]
        %v2227 = vld [vmem:[#allocation9 + $0x68] sm:$0xff]
        %v2228 = vld [vmem:[#allocation9 + $0x70] sm:$0xff]
        %v2229 = vld [vmem:[#allocation9 + $0x78] sm:$0xff]
        %2230 = vmatpush.msra.mxu0 %v2229
        %2231 = vmatpush.msra.mxu0 %v2228
        %2232 = vmatpush.msra.mxu0 %v2227
        %2233 = vmatpush.msra.mxu0 %v2226
        %2234 = vmatpush.msra.mxu0 %v2225
        %2235 = vmatpush.msra.mxu0 %v2224
        %2236 = vmatpush.msra.mxu0 %v2223
        %2237 = vmatpush.msra.mxu0 %v2222
        %2238 = vmatpush.msra.mxu0 %v2221
        %2239 = vmatpush.msra.mxu0 %v2220
        %2240 = vmatpush.msra.mxu0 %v2219
        %2241 = vmatpush.msra.mxu0 %v2218
        %2242 = vmatpush.msra.mxu0 %v2217
        %2243 = vmatpush.msra.mxu0 %v2216
        %2244 = vmatpush.msra.mxu0 %v2215
        %2245 = vmatpush.msra.mxu0 %v2214
        %2246 = vmatmul.f32.gmra.mxu0 %v2213
        %v2247 = vpop.f32.mrf.mxu0
        %v2248 = vadd.f32 0.0, %v2247
        %2249 = vdwg.mxu0
        %v2250 = vld [vmem:[#allocation15] sm:$0xff]
        %v2251 = vld [vmem:[#allocation15 + $0x8] sm:$0xff]
        %v2252 = vld [vmem:[#allocation15 + $0x10] sm:$0xff]
        %v2253 = vld [vmem:[#allocation15 + $0x18] sm:$0xff]
        %v2254 = vld [vmem:[#allocation15 + $0x20] sm:$0xff]
        %v2255 = vld [vmem:[#allocation15 + $0x28] sm:$0xff]
        %v2256 = vld [vmem:[#allocation15 + $0x30] sm:$0xff]
        %v2257 = vld [vmem:[#allocation15 + $0x38] sm:$0xff]
        %v2258 = vld [vmem:[#allocation15 + $0x40] sm:$0xff]
        %v2259 = vld [vmem:[#allocation15 + $0x48] sm:$0xff]
        %v2260 = vld [vmem:[#allocation15 + $0x50] sm:$0xff]
        %v2261 = vld [vmem:[#allocation15 + $0x58] sm:$0xff]
        %v2262 = vld [vmem:[#allocation15 + $0x60] sm:$0xff]
        %v2263 = vld [vmem:[#allocation15 + $0x68] sm:$0xff]
        %v2264 = vld [vmem:[#allocation15 + $0x70] sm:$0xff]
        %v2265 = vld [vmem:[#allocation15 + $0x78] sm:$0xff]
        %v2266 = vld [vmem:[#allocation15 + $0x80] sm:$0xff]
        %v2267 = vld [vmem:[#allocation15 + $0x88] sm:$0xff]
        %v2268 = vld [vmem:[#allocation15 + $0x90] sm:$0xff]
        %v2269 = vld [vmem:[#allocation15 + $0x98] sm:$0xff]
        %v2270 = vld [vmem:[#allocation15 + $0xa0] sm:$0xff]
        %v2271 = vld [vmem:[#allocation15 + $0xa8] sm:$0xff]
        %v2272 = vld [vmem:[#allocation15 + $0xb0] sm:$0xff]
        %v2273 = vld [vmem:[#allocation15 + $0xb8] sm:$0xff]
        %v2274 = vld [vmem:[#allocation15 + $0xc0] sm:$0xff]
        %v2275 = vld [vmem:[#allocation15 + $0xc8] sm:$0xff]
        %v2276 = vld [vmem:[#allocation15 + $0xd0] sm:$0xff]
        %v2277 = vld [vmem:[#allocation15 + $0xd8] sm:$0xff]
        %v2278 = vld [vmem:[#allocation15 + $0xe0] sm:$0xff]
        %v2279 = vld [vmem:[#allocation15 + $0xe8] sm:$0xff]
        %v2280 = vld [vmem:[#allocation15 + $0xf0] sm:$0xff]
        %v2281 = vld [vmem:[#allocation15 + $0xf8] sm:$0xff]
        %v2282 = vld [vmem:[#allocation17] sm:$0x1]
        %2283 = vmatpush.msra.mxu0 %v2265
        %2284 = vmatpush.msra.mxu0 %v2264
        %2285 = vmatpush.msra.mxu0 %v2263
        %2286 = vmatpush.msra.mxu0 %v2262
        %2287 = vmatpush.msra.mxu0 %v2261
        %2288 = vmatpush.msra.mxu0 %v2260
        %2289 = vmatpush.msra.mxu0 %v2259
        %2290 = vmatpush.msra.mxu0 %v2258
        %2291 = vmatpush.msra.mxu0 %v2257
        %2292 = vmatpush.msra.mxu0 %v2256
        %2293 = vmatpush.msra.mxu0 %v2255
        %2294 = vmatpush.msra.mxu0 %v2254
        %2295 = vmatpush.msra.mxu0 %v2253
        %2296 = vmatpush.msra.mxu0 %v2252
        %2297 = vmatpush.msra.mxu0 %v2251
        %2298 = vmatpush.msra.mxu0 %v2250
        %2299 = vmatmul.f32.gmra.mxu0 %v2248
        %v2300 = vpop.f32.mrf.mxu0
        %v2301 = vadd.f32 %v2282, %v2300
        %2302 = vdwg.mxu0
        %2303 = vmatpush.msra.mxu0 %v2281
        %2304 = vmatpush.msra.mxu0 %v2280
        %2305 = vmatpush.msra.mxu0 %v2279
        %2306 = vmatpush.msra.mxu0 %v2278
        %2307 = vmatpush.msra.mxu0 %v2277
        %2308 = vmatpush.msra.mxu0 %v2276
        %2309 = vmatpush.msra.mxu0 %v2275
        %2310 = vmatpush.msra.mxu0 %v2274
        %2311 = vmatpush.msra.mxu0 %v2273
        %2312 = vmatpush.msra.mxu0 %v2272
        %2313 = vmatpush.msra.mxu0 %v2271
        %2314 = vmatpush.msra.mxu0 %v2270
        %2315 = vmatpush.msra.mxu0 %v2269
        %2316 = vmatpush.msra.mxu0 %v2268
        %2317 = vmatpush.msra.mxu0 %v2267
        %2318 = vmatpush.msra.mxu0 %v2266
        %2319 = vmatmul.f32.gmra.mxu0 %v2212
        %v2320 = vpop.f32.mrf.mxu0
        %v2321 = vadd.f32 %v2301, %v2320
        %2322 = vdwg.mxu0
        %vm2323 = vcmask 1040384
        %v2324 = vsel %vm2323, %v2321, -inf
        %2325 = vmax.xlane.f32.xlu0 %v2324
        %v2326 = vpop.xlane.xlu0 %2325
        %v2327 = vsub.f32 %v2321, %v2326
        %v2328 = vmul.f32 %v2327, 1.442695
        %v2329 = vpow.pop %v2328
        %v2330 = vsel %vm2323, %v2329, 0.0
        %2331 = vadd.xlane.f32.xlu0 %v2330
        %v2332 = vpop.xlane.xlu0 %2331
        %v2333 = vrcp.pop %v2332
        %v2334 = vmul.f32 %v2329, %v2333
        %v2335 = vld [vmem:[#allocation2] sm:$0xff]
        %v2336 = vld [vmem:[#allocation2 + $0x8] sm:$0xff]
        %v2337 = vld [vmem:[#allocation2 + $0x10] sm:$0xff]
        %v2338 = vld [vmem:[#allocation2 + $0x18] sm:$0xff]
        %v2339 = vld [vmem:[#allocation2 + $0x20] sm:$0xff]
        %v2340 = vld [vmem:[#allocation2 + $0x28] sm:$0xff]
        %v2341 = vld [vmem:[#allocation2 + $0x30] sm:$0xff]
        %v2342 = vld [vmem:[#allocation2 + $0x38] sm:$0xff]
        %v2343 = vld [vmem:[#allocation2 + $0x40] sm:$0xff]
        %v2344 = vld [vmem:[#allocation2 + $0x48] sm:$0xff]
        %v2345 = vld [vmem:[#allocation2 + $0x50] sm:$0xff]
        %v2346 = vld [vmem:[#allocation2 + $0x58] sm:$0xff]
        %v2347 = vld [vmem:[#allocation2 + $0x60] sm:$0xff]
        %v2348 = vld [vmem:[#allocation2 + $0x68] sm:$0xff]
        %v2349 = vld [vmem:[#allocation2 + $0x70] sm:$0xff]
        %v2350 = vld [vmem:[#allocation2 + $0x78] sm:$0xff]
        %2351 = vmatpush.msra.mxu0 %v2350
        %2352 = vmatpush.msra.mxu0 %v2349
        %2353 = vmatpush.msra.mxu0 %v2348
        %2354 = vmatpush.msra.mxu0 %v2347
        %2355 = vmatpush.msra.mxu0 %v2346
        %2356 = vmatpush.msra.mxu0 %v2345
        %2357 = vmatpush.msra.mxu0 %v2344
        %2358 = vmatpush.msra.mxu0 %v2343
        %2359 = vmatpush.msra.mxu0 %v2342
        %2360 = vmatpush.msra.mxu0 %v2341
        %2361 = vmatpush.msra.mxu0 %v2340
        %2362 = vmatpush.msra.mxu0 %v2339
        %2363 = vmatpush.msra.mxu0 %v2338
        %2364 = vmatpush.msra.mxu0 %v2337
        %2365 = vmatpush.msra.mxu0 %v2336
        %2366 = vmatpush.msra.mxu0 %v2335
        %2367 = vmatmul.f32.gmra.mxu0 %v2334
        %v2368 = vpop.f32.mrf.mxu0
        %v2369 = vadd.f32 0.0, %v2368
        %2370 = vdwg.mxu0
        %v2371 = vld [vmem:[#allocation18] sm:$0xff]
        %v2372 = vld [vmem:[#allocation18 + $0x8] sm:$0xff]
        %v2373 = vld [vmem:[#allocation18 + $0x10] sm:$0xff]
        %v2374 = vld [vmem:[#allocation18 + $0x18] sm:$0xff]
        %v2375 = vld [vmem:[#allocation18 + $0x20] sm:$0xff]
        %v2376 = vld [vmem:[#allocation18 + $0x28] sm:$0xff]
        %v2377 = vld [vmem:[#allocation18 + $0x30] sm:$0xff]
        %v2378 = vld [vmem:[#allocation18 + $0x38] sm:$0xff]
        %v2379 = vld [vmem:[#allocation18 + $0x40] sm:$0xff]
        %v2380 = vld [vmem:[#allocation18 + $0x48] sm:$0xff]
        %v2381 = vld [vmem:[#allocation18 + $0x50] sm:$0xff]
        %v2382 = vld [vmem:[#allocation18 + $0x58] sm:$0xff]
        %v2383 = vld [vmem:[#allocation18 + $0x60] sm:$0xff]
        %v2384 = vld [vmem:[#allocation18 + $0x68] sm:$0xff]
        %v2385 = vld [vmem:[#allocation18 + $0x70] sm:$0xff]
        %v2386 = vld [vmem:[#allocation18 + $0x78] sm:$0xff]
        %v2387 = vld [vmem:[#allocation18 + $0x80] sm:$0xff]
        %v2388 = vld [vmem:[#allocation18 + $0x88] sm:$0xff]
        %v2389 = vld [vmem:[#allocation18 + $0x90] sm:$0xff]
        %v2390 = vld [vmem:[#allocation18 + $0x98] sm:$0xff]
        %v2391 = vld [vmem:[#allocation18 + $0xa0] sm:$0xff]
        %v2392 = vld [vmem:[#allocation18 + $0xa8] sm:$0xff]
        %v2393 = vld [vmem:[#allocation18 + $0xb0] sm:$0xff]
        %v2394 = vld [vmem:[#allocation18 + $0xb8] sm:$0xff]
        %v2395 = vld [vmem:[#allocation18 + $0xc0] sm:$0xff]
        %v2396 = vld [vmem:[#allocation18 + $0xc8] sm:$0xff]
        %v2397 = vld [vmem:[#allocation18 + $0xd0] sm:$0xff]
        %v2398 = vld [vmem:[#allocation18 + $0xd8] sm:$0xff]
        %v2399 = vld [vmem:[#allocation18 + $0xe0] sm:$0xff]
        %v2400 = vld [vmem:[#allocation18 + $0xe8] sm:$0xff]
        %v2401 = vld [vmem:[#allocation18 + $0xf0] sm:$0xff]
        %v2402 = vld [vmem:[#allocation18 + $0xf8] sm:$0xff]
        %v2403 = vld [vmem:[#allocation20] sm:$0x1]
        %2404 = vmatpush.msra.mxu0 %v2386
        %2405 = vmatpush.msra.mxu0 %v2385
        %2406 = vmatpush.msra.mxu0 %v2384
        %2407 = vmatpush.msra.mxu0 %v2383
        %2408 = vmatpush.msra.mxu0 %v2382
        %2409 = vmatpush.msra.mxu0 %v2381
        %2410 = vmatpush.msra.mxu0 %v2380
        %2411 = vmatpush.msra.mxu0 %v2379
        %2412 = vmatpush.msra.mxu0 %v2378
        %2413 = vmatpush.msra.mxu0 %v2377
        %2414 = vmatpush.msra.mxu0 %v2376
        %2415 = vmatpush.msra.mxu0 %v2375
        %2416 = vmatpush.msra.mxu0 %v2374
        %2417 = vmatpush.msra.mxu0 %v2373
        %2418 = vmatpush.msra.mxu0 %v2372
        %2419 = vmatpush.msra.mxu0 %v2371
        %2420 = vmatmul.f32.gmra.mxu0 %v2248
        %v2421 = vpop.f32.mrf.mxu0
        %v2422 = vadd.f32 %v2403, %v2421
        %2423 = vdwg.mxu0
        %2424 = vmatpush.msra.mxu0 %v2402
        %2425 = vmatpush.msra.mxu0 %v2401
        %2426 = vmatpush.msra.mxu0 %v2400
        %2427 = vmatpush.msra.mxu0 %v2399
        %2428 = vmatpush.msra.mxu0 %v2398
        %2429 = vmatpush.msra.mxu0 %v2397
        %2430 = vmatpush.msra.mxu0 %v2396
        %2431 = vmatpush.msra.mxu0 %v2395
        %2432 = vmatpush.msra.mxu0 %v2394
        %2433 = vmatpush.msra.mxu0 %v2393
        %2434 = vmatpush.msra.mxu0 %v2392
        %2435 = vmatpush.msra.mxu0 %v2391
        %2436 = vmatpush.msra.mxu0 %v2390
        %2437 = vmatpush.msra.mxu0 %v2389
        %2438 = vmatpush.msra.mxu0 %v2388
        %2439 = vmatpush.msra.mxu0 %v2387
        %2440 = vmatmul.f32.gmra.mxu0 %v2369
        %v2441 = vpop.f32.mrf.mxu0
        %v2442 = vadd.f32 %v2422, %v2441
        %2443 = vdwg.mxu0
        %v2444 = vmax.f32 %v2442, 0.0
        %v2445 = vld [vmem:[#allocation21] sm:$0xff]
        %v2446 = vld [vmem:[#allocation21 + $0x8] sm:$0xff]
        %v2447 = vld [vmem:[#allocation21 + $0x10] sm:$0xff]
        %v2448 = vld [vmem:[#allocation21 + $0x18] sm:$0xff]
        %v2449 = vld [vmem:[#allocation21 + $0x20] sm:$0xff]
        %v2450 = vld [vmem:[#allocation21 + $0x28] sm:$0xff]
        %v2451 = vld [vmem:[#allocation21 + $0x30] sm:$0xff]
        %v2452 = vld [vmem:[#allocation21 + $0x38] sm:$0xff]
        %v2453 = vld [vmem:[#allocation21 + $0x40] sm:$0xff]
        %v2454 = vld [vmem:[#allocation21 + $0x48] sm:$0xff]
        %v2455 = vld [vmem:[#allocation21 + $0x50] sm:$0xff]
        %v2456 = vld [vmem:[#allocation21 + $0x58] sm:$0xff]
        %v2457 = vld [vmem:[#allocation21 + $0x60] sm:$0xff]
        %v2458 = vld [vmem:[#allocation21 + $0x68] sm:$0xff]
        %v2459 = vld [vmem:[#allocation21 + $0x70] sm:$0xff]
        %v2460 = vld [vmem:[#allocation21 + $0x78] sm:$0xff]
        %v2461 = vld [vmem:[#allocation21 + $0x80] sm:$0xff]
        %v2462 = vld [vmem:[#allocation21 + $0x88] sm:$0xff]
        %v2463 = vld [vmem:[#allocation21 + $0x90] sm:$0xff]
        %v2464 = vld [vmem:[#allocation21 + $0x98] sm:$0xff]
        %v2465 = vld [vmem:[#allocation21 + $0xa0] sm:$0xff]
        %v2466 = vld [vmem:[#allocation21 + $0xa8] sm:$0xff]
        %v2467 = vld [vmem:[#allocation21 + $0xb0] sm:$0xff]
        %v2468 = vld [vmem:[#allocation21 + $0xb8] sm:$0xff]
        %v2469 = vld [vmem:[#allocation21 + $0xc0] sm:$0xff]
        %v2470 = vld [vmem:[#allocation21 + $0xc8] sm:$0xff]
        %v2471 = vld [vmem:[#allocation21 + $0xd0] sm:$0xff]
        %v2472 = vld [vmem:[#allocation21 + $0xd8] sm:$0xff]
        %v2473 = vld [vmem:[#allocation21 + $0xe0] sm:$0xff]
        %v2474 = vld [vmem:[#allocation21 + $0xe8] sm:$0xff]
        %v2475 = vld [vmem:[#allocation21 + $0xf0] sm:$0xff]
        %v2476 = vld [vmem:[#allocation21 + $0xf8] sm:$0xff]
        %v2477 = vld [vmem:[#allocation21 + $0x100] sm:$0xff]
        %v2478 = vld [vmem:[#allocation21 + $0x108] sm:$0xff]
        %v2479 = vld [vmem:[#allocation21 + $0x110] sm:$0xff]
        %v2480 = vld [vmem:[#allocation21 + $0x118] sm:$0xff]
        %v2481 = vld [vmem:[#allocation21 + $0x120] sm:$0xff]
        %v2482 = vld [vmem:[#allocation21 + $0x128] sm:$0xff]
        %v2483 = vld [vmem:[#allocation21 + $0x130] sm:$0xff]
        %v2484 = vld [vmem:[#allocation21 + $0x138] sm:$0xff]
        %v2485 = vld [vmem:[#allocation21 + $0x140] sm:$0xff]
        %v2486 = vld [vmem:[#allocation21 + $0x148] sm:$0xff]
        %v2487 = vld [vmem:[#allocation21 + $0x150] sm:$0xff]
        %v2488 = vld [vmem:[#allocation21 + $0x158] sm:$0xff]
        %v2489 = vld [vmem:[#allocation21 + $0x160] sm:$0xff]
        %v2490 = vld [vmem:[#allocation21 + $0x168] sm:$0xff]
        %v2491 = vld [vmem:[#allocation21 + $0x170] sm:$0xff]
        %v2492 = vld [vmem:[#allocation21 + $0x178] sm:$0xff]
        %v2493 = vld [vmem:[#allocation23] sm:$0xff]
        %v2494 = vld [vmem:[#allocation23 + $0x8] sm:$0xff]
        %v2495 = vld [vmem:[#allocation23 + $0x10] sm:$0xff]
        %v2496 = vld [vmem:[#allocation23 + $0x18] sm:$0xff]
        %v2497 = vld [vmem:[#allocation23 + $0x20] sm:$0xff]
        %v2498 = vld [vmem:[#allocation23 + $0x28] sm:$0xff]
        %v2499 = vld [vmem:[#allocation23 + $0x30] sm:$0xff]
        %v2500 = vld [vmem:[#allocation23 + $0x38] sm:$0xff]
        %v2501 = vld [vmem:[#allocation23 + $0x40] sm:$0xff]
        %v2502 = vld [vmem:[#allocation23 + $0x48] sm:$0xff]
        %v2503 = vld [vmem:[#allocation23 + $0x50] sm:$0xff]
        %v2504 = vld [vmem:[#allocation23 + $0x58] sm:$0xff]
        %v2505 = vld [vmem:[#allocation23 + $0x60] sm:$0xff]
        %v2506 = vld [vmem:[#allocation23 + $0x68] sm:$0xff]
        %v2507 = vld [vmem:[#allocation23 + $0x70] sm:$0xff]
        %v2508 = vld [vmem:[#allocation23 + $0x78] sm:$0xff]
        %v2509 = vld [vmem:[#allocation23 + $0x80] sm:$0xff]
        %v2510 = vld [vmem:[#allocation23 + $0x88] sm:$0xff]
        %v2511 = vld [vmem:[#allocation23 + $0x90] sm:$0xff]
        %v2512 = vld [vmem:[#allocation23 + $0x98] sm:$0xff]
        %v2513 = vld [vmem:[#allocation23 + $0xa0] sm:$0xff]
        %v2514 = vld [vmem:[#allocation23 + $0xa8] sm:$0xff]
        %v2515 = vld [vmem:[#allocation23 + $0xb0] sm:$0xff]
        %v2516 = vld [vmem:[#allocation23 + $0xb8] sm:$0xff]
        %v2517 = vld [vmem:[#allocation23 + $0xc0] sm:$0xff]
        %v2518 = vld [vmem:[#allocation23 + $0xc8] sm:$0xff]
        %v2519 = vld [vmem:[#allocation23 + $0xd0] sm:$0xff]
        %v2520 = vld [vmem:[#allocation23 + $0xd8] sm:$0xff]
        %v2521 = vld [vmem:[#allocation23 + $0xe0] sm:$0xff]
        %v2522 = vld [vmem:[#allocation23 + $0xe8] sm:$0xff]
        %v2523 = vld [vmem:[#allocation23 + $0xf0] sm:$0xff]
        %v2524 = vld [vmem:[#allocation23 + $0xf8] sm:$0xff]
        %v2525 = vld [vmem:[#allocation23 + $0x100] sm:$0xff]
        %v2526 = vld [vmem:[#allocation23 + $0x108] sm:$0xff]
        %v2527 = vld [vmem:[#allocation23 + $0x110] sm:$0xff]
        %v2528 = vld [vmem:[#allocation23 + $0x118] sm:$0xff]
        %v2529 = vld [vmem:[#allocation23 + $0x120] sm:$0xff]
        %v2530 = vld [vmem:[#allocation23 + $0x128] sm:$0xff]
        %v2531 = vld [vmem:[#allocation23 + $0x130] sm:$0xff]
        %v2532 = vld [vmem:[#allocation23 + $0x138] sm:$0xff]
        %v2533 = vld [vmem:[#allocation23 + $0x140] sm:$0xff]
        %v2534 = vld [vmem:[#allocation23 + $0x148] sm:$0xff]
        %v2535 = vld [vmem:[#allocation23 + $0x150] sm:$0xff]
        %v2536 = vld [vmem:[#allocation23 + $0x158] sm:$0xff]
        %v2537 = vld [vmem:[#allocation23 + $0x160] sm:$0xff]
        %v2538 = vld [vmem:[#allocation23 + $0x168] sm:$0xff]
        %v2539 = vld [vmem:[#allocation23 + $0x170] sm:$0xff]
        %v2540 = vld [vmem:[#allocation23 + $0x178] sm:$0xff]
        %v2541 = vld [vmem:[%s12] sm:$0x7]
        %v2542 = vld [vmem:[%s13] sm:$0x7]
        %v2544 = vperm.slane %v2541, 0
        %v2545 = vperm.slane %v2541, 1
        %v2546 = vperm.slane %v2541, 2
        %2550 = vmatpush.msra.mxu0 %v2490
        %2551 = vmatpush.msra.mxu0 %v2487
        %2552 = vmatpush.msra.mxu0 %v2484
        %2553 = vmatpush.msra.mxu0 %v2481
        %2554 = vmatpush.msra.mxu0 %v2478
        %2555 = vmatpush.msra.mxu0 %v2475
        %2556 = vmatpush.msra.mxu0 %v2472
        %2557 = vmatpush.msra.mxu0 %v2469
        %2558 = vmatpush.msra.mxu0 %v2466
        %2559 = vmatpush.msra.mxu0 %v2463
        %2560 = vmatpush.msra.mxu0 %v2460
        %2561 = vmatpush.msra.mxu0 %v2457
        %2562 = vmatpush.msra.mxu0 %v2454
        %2563 = vmatpush.msra.mxu0 %v2451
        %2564 = vmatpush.msra.mxu0 %v2448
        %2565 = vmatpush.msra.mxu0 %v2445
        %2566 = vmatmul.f32.gmra.mxu0 %v2444
        %v2567 = vpop.f32.mrf.mxu0
        %v2568 = vadd.f32 %v2544, %v2567
        %2569 = vdwg.mxu0
        %2570 = vmatpush.msra.mxu0 %v2491
        %2571 = vmatpush.msra.mxu0 %v2488
        %2572 = vmatpush.msra.mxu0 %v2485
        %2573 = vmatpush.msra.mxu0 %v2482
        %2574 = vmatpush.msra.mxu0 %v2479
        %2575 = vmatpush.msra.mxu0 %v2476
        %2576 = vmatpush.msra.mxu0 %v2473
        %2577 = vmatpush.msra.mxu0 %v2470
        %2578 = vmatpush.msra.mxu0 %v2467
        %2579 = vmatpush.msra.mxu0 %v2464
        %2580 = vmatpush.msra.mxu0 %v2461
        %2581 = vmatpush.msra.mxu0 %v2458
        %2582 = vmatpush.msra.mxu0 %v2455
        %2583 = vmatpush.msra.mxu0 %v2452
        %2584 = vmatpush.msra.mxu0 %v2449
        %2585 = vmatpush.msra.mxu0 %v2446
        %2586 = vmatmul.f32.gmra.mxu0 %v2444
        %v2587 = vpop.f32.mrf.mxu0
        %v2588 = vadd.f32 %v2545, %v2587
        %2589 = vdwg.mxu0
        %2590 = vmatpush.msra.mxu0 %v2492
        %2591 = vmatpush.msra.mxu0 %v2489
        %2592 = vmatpush.msra.mxu0 %v2486
        %2593 = vmatpush.msra.mxu0 %v2483
        %2594 = vmatpush.msra.mxu0 %v2480
        %2595 = vmatpush.msra.mxu0 %v2477
        %2596 = vmatpush.msra.mxu0 %v2474
        %2597 = vmatpush.msra.mxu0 %v2471
        %2598 = vmatpush.msra.mxu0 %v2468
        %2599 = vmatpush.msra.mxu0 %v2465
        %2600 = vmatpush.msra.mxu0 %v2462
        %2601 = vmatpush.msra.mxu0 %v2459
        %2602 = vmatpush.msra.mxu0 %v2456
        %2603 = vmatpush.msra.mxu0 %v2453
        %2604 = vmatpush.msra.mxu0 %v2450
        %2605 = vmatpush.msra.mxu0 %v2447
        %2606 = vmatmul.f32.gmra.mxu0 %v2444
        %v2607 = vpop.f32.mrf.mxu0
        %v2608 = vadd.f32 %v2546, %v2607
        %2609 = vdwg.mxu0
        %v2611 = vperm.slane %v2542, 0
        %v2612 = vperm.slane %v2542, 1
        %v2613 = vperm.slane %v2542, 2
        %2617 = vmatpush.msra.mxu0 %v2538
        %2618 = vmatpush.msra.mxu0 %v2535
        %2619 = vmatpush.msra.mxu0 %v2532
        %2620 = vmatpush.msra.mxu0 %v2529
        %2621 = vmatpush.msra.mxu0 %v2526
        %2622 = vmatpush.msra.mxu0 %v2523
        %2623 = vmatpush.msra.mxu0 %v2520
        %2624 = vmatpush.msra.mxu0 %v2517
        %2625 = vmatpush.msra.mxu0 %v2514
        %2626 = vmatpush.msra.mxu0 %v2511
        %2627 = vmatpush.msra.mxu0 %v2508
        %2628 = vmatpush.msra.mxu0 %v2505
        %2629 = vmatpush.msra.mxu0 %v2502
        %2630 = vmatpush.msra.mxu0 %v2499
        %2631 = vmatpush.msra.mxu0 %v2496
        %2632 = vmatpush.msra.mxu0 %v2493
        %2633 = vmatmul.f32.gmra.mxu0 %v2212
        %v2634 = vpop.f32.mrf.mxu0
        %v2635 = vadd.f32 %v2611, %v2634
        %2636 = vdwg.mxu0
        %2637 = vmatpush.msra.mxu0 %v2539
        %2638 = vmatpush.msra.mxu0 %v2536
        %2639 = vmatpush.msra.mxu0 %v2533
        %2640 = vmatpush.msra.mxu0 %v2530
        %2641 = vmatpush.msra.mxu0 %v2527
        %2642 = vmatpush.msra.mxu0 %v2524
        %2643 = vmatpush.msra.mxu0 %v2521
        %2644 = vmatpush.msra.mxu0 %v2518
        %2645 = vmatpush.msra.mxu0 %v2515
        %2646 = vmatpush.msra.mxu0 %v2512
        %2647 = vmatpush.msra.mxu0 %v2509
        %2648 = vmatpush.msra.mxu0 %v2506
        %2649 = vmatpush.msra.mxu0 %v2503
        %2650 = vmatpush.msra.mxu0 %v2500
        %2651 = vmatpush.msra.mxu0 %v2497
        %2652 = vmatpush.msra.mxu0 %v2494
        %2653 = vmatmul.f32.gmra.mxu0 %v2212
        %v2654 = vpop.f32.mrf.mxu0
        %v2655 = vadd.f32 %v2612, %v2654
        %2656 = vdwg.mxu0
        %2657 = vmatpush.msra.mxu0 %v2540
        %2658 = vmatpush.msra.mxu0 %v2537
        %2659 = vmatpush.msra.mxu0 %v2534
        %2660 = vmatpush.msra.mxu0 %v2531
        %2661 = vmatpush.msra.mxu0 %v2528
        %2662 = vmatpush.msra.mxu0 %v2525
        %2663 = vmatpush.msra.mxu0 %v2522
        %2664 = vmatpush.msra.mxu0 %v2519
        %2665 = vmatpush.msra.mxu0 %v2516
        %2666 = vmatpush.msra.mxu0 %v2513
        %2667 = vmatpush.msra.mxu0 %v2510
        %2668 = vmatpush.msra.mxu0 %v2507
        %2669 = vmatpush.msra.mxu0 %v2504
        %2670 = vmatpush.msra.mxu0 %v2501
        %2671 = vmatpush.msra.mxu0 %v2498
        %2672 = vmatpush.msra.mxu0 %v2495
        %2673 = vmatmul.f32.gmra.mxu0 %v2212
        %v2674 = vpop.f32.mrf.mxu0
        %v2675 = vadd.f32 %v2613, %v2674
        %2676 = vdwg.mxu0
        %v2677 = vadd.f32 %v2568, %v2635
        %v2678 = vsub.f32 0.0, %v2677
        %v2679 = vmul.f32 %v2678, 1.442695
        %v2680 = vpow.pop %v2679
        %v2681 = vadd.f32 %v2680, 1.0
        %v2682 = vrcp.pop %v2681
        %v2683 = vmul.f32 %v2681, %v2682
        %v2684 = vsub.f32 1.0, %v2683
        %v2685 = vmul.f32 %v2682, %v2684
        %v2686 = vadd.f32 %v2682, %v2685
        %vm2687 = vweird.f32 %v2681
        %vm2688 = vweird.f32 %v2682
        %vm2689 = vmor %vm2687, %vm2688
        %v2690 = vsel %vm2689, %v2682, %v2686
        %v2691 = vand.u32 2147483647, %v2681
        %vm2692 = vcmp.eq.f32.partialorder %v2691, 8.507059e+37
        %v2693 = vand.u32 %v2681, 2147483648
        %v2694 = vor.u32 1.1754944e-38, %v2693
        %v2695 = vsel %vm2692, %v2694, %v2690
        %v2696 = vmul.f32 1.0, %v2695
        %v2697 = vadd.f32 %v2588, %v2655
        %v2698 = vsub.f32 0.0, %v2697
        %v2699 = vmul.f32 %v2698, 1.442695
        %v2700 = vpow.pop %v2699
        %v2701 = vadd.f32 %v2700, 1.0
        %v2702 = vrcp.pop %v2701
        %v2703 = vmul.f32 %v2701, %v2702
        %v2704 = vsub.f32 1.0, %v2703
        %v2705 = vmul.f32 %v2702, %v2704
        %v2706 = vadd.f32 %v2702, %v2705
        %vm2707 = vweird.f32 %v2701
        %vm2708 = vweird.f32 %v2702
        %vm2709 = vmor %vm2707, %vm2708
        %v2710 = vsel %vm2709, %v2702, %v2706
        %v2711 = vand.u32 2147483647, %v2701
        %vm2712 = vcmp.eq.f32.partialorder %v2711, 8.507059e+37
        %v2713 = vand.u32 %v2701, 2147483648
        %v2714 = vor.u32 1.1754944e-38, %v2713
        %v2715 = vsel %vm2712, %v2714, %v2710
        %v2716 = vmul.f32 1.0, %v2715
        %v2717 = vmul.f32 %v2696, %v2675
        %v2718 = vadd.f32 %v2608, %v2717
        %v2719 = vtanh.pop %v2718
        %v2720 = vsub.f32 1.0, %v2716
        %v2721 = vmul.f32 %v2720, %v2719
        %v2722 = vmul.f32 %v2716, %v2212
        %v2723 = vadd.f32 %v2721, %v2722
        %v2724 = vld [vmem:[#allocation24] sm:$0xff]
        %v2725 = vld [vmem:[#allocation24 + $0x8] sm:$0xff]
        %v2726 = vld [vmem:[#allocation24 + $0x10] sm:$0xff]
        %v2727 = vld [vmem:[#allocation24 + $0x18] sm:$0xff]
        %v2728 = vld [vmem:[#allocation24 + $0x20] sm:$0xff]
        %v2729 = vld [vmem:[#allocation24 + $0x28] sm:$0xff]
        %v2730 = vld [vmem:[#allocation24 + $0x30] sm:$0xff]
        %v2731 = vld [vmem:[#allocation24 + $0x38] sm:$0xff]
        %v2732 = vld [vmem:[#allocation24 + $0x40] sm:$0xff]
        %v2733 = vld [vmem:[#allocation24 + $0x48] sm:$0xff]
        %v2734 = vld [vmem:[#allocation24 + $0x50] sm:$0xff]
        %v2735 = vld [vmem:[#allocation24 + $0x58] sm:$0xff]
        %v2736 = vld [vmem:[#allocation24 + $0x60] sm:$0xff]
        %v2737 = vld [vmem:[#allocation24 + $0x68] sm:$0xff]
        %v2738 = vld [vmem:[#allocation24 + $0x70] sm:$0xff]
        %v2739 = vld [vmem:[#allocation24 + $0x78] sm:$0xff]
        %v2740 = vld [vmem:[%s15] sm:$0x1]
        %2741 = vmatpush.msra.mxu0 %v2739
        %2742 = vmatpush.msra.mxu0 %v2738
        %2743 = vmatpush.msra.mxu0 %v2737
        %2744 = vmatpush.msra.mxu0 %v2736
        %2745 = vmatpush.msra.mxu0 %v2735
        %2746 = vmatpush.msra.mxu0 %v2734
        %2747 = vmatpush.msra.mxu0 %v2733
        %2748 = vmatpush.msra.mxu0 %v2732
        %2749 = vmatpush.msra.mxu0 %v2731
        %2750 = vmatpush.msra.mxu0 %v2730
        %2751 = vmatpush.msra.mxu0 %v2729
        %2752 = vmatpush.msra.mxu0 %v2728
        %2753 = vmatpush.msra.mxu0 %v2727
        %2754 = vmatpush.msra.mxu0 %v2726
        %2755 = vmatpush.msra.mxu0 %v2725
        %2756 = vmatpush.msra.mxu0 %v2724
        %2757 = vmatmul.f32.gmra.mxu0 %v2723
        %v2758 = vpop.f32.mrf.mxu0
        %v2759 = vadd.f32 %v2740, %v2758
        %2760 = vdwg.mxu0
        %v2761 = vsel %vm2323, %v2759, -inf
        %2762 = vmax.xlane.f32.xlu0 %v2761
        %v2763 = vpop.xlane.xlu0 %2762
        %v2764 = vsub.f32 %v2759, %v2763
        %v2765 = vmul.f32 %v2764, 1.442695
        %v2766 = vpow.pop %v2765
        %v2767 = vsel %vm2323, %v2766, 0.0
        %2768 = vadd.xlane.f32.xlu0 %v2767
        %v2769 = vpop.xlane.xlu0 %2768
        %v2770 = vlog2.pop %v2769
        %v2771 = vmul.f32 %v2770, 0.6931472
        %v2772 = vsub.f32 %v2764, %v2771
        %v2773 = vlaneseq
        %v2774 = vand.u32 %v2773, 127
        %v2775 = vcvt.s32.f32 %v2774
        %v2776 = vsel %vm2323, %v2772, -inf
        %2777 = vmax.xlane.f32.xlu0 %v2776
        %v2778 = vpop.xlane.xlu0 %2777
        %vm2779 = vcmp.eq.f32.partialorder %v2772, %v2778
        %v2780 = vsel %vm2779, %v2775, 128.0
        %v2781 = vsel %vm2323, %v2780, inf
        %2782 = vmin.xlane.f32.xlu0 %v2781
        %v2783 = vpop.xlane.xlu0 %2782
        %vm2784 = vcmp.eq.f32.partialorder %v2775, %v2783
        %v2785 = vsel %vm2784, 1, 0
        %v2786 = vcvt.s32.f32 %v2785
        %vm2787 = vcmp.eq.f32.partialorder %v2783, 1.0
        %v2788 = vsel %vm2787, 1, 0
        %v2789 = vcvt.s32.f32 %v2788
        %v2790 = vsel %vm2211, 1, 0
        %2791 = vset.pattern.permute.xlu0 0
        %2792 = vperm.xlu0 %2791, %v2790
        %v2793 = vpop.permute.xlu0 %2792
        %v2794 = vperm.slane %v2793, 0
        %vm2795 = vcmp.eq.s32.totalorder %v2794, 1
        %v2796 = vsel %vm2795, %v2772, 0.0
        %2797 = vst [vmem:[%s713] sm:$0x1] %v2796
        %v2798 = vsel %vm2795, %v2723, %v2212
        %2799 = vst [vmem:[#allocation3] sm:$0x1] %v2798
        %v2800 = vsel %vm2795, %v2786, %v2213
        %2801 = vst [vmem:[#allocation4] sm:$0x1] %v2800
        %s2802 = sadd.s32 %s40, 1
        %v2803 = vstv %s2802
        %v2804 = vld [vmem:[#allocation27] sm:$0x1]
        %v2805 = vsel %vm2211, %v2803, %v2804
        %vm2806 = vcmask 0
        %2807 = vst.msk [vmem:[#allocation27] sm:$0x1] %vm2806, %v2805
        %v2808 = vld [vmem:[#allocation5] sm:$0x1]
        %v2809 = vmax.f32 %v2808, %v2789
        %2810 = vst.msk [vmem:[#allocation5] sm:$0x1] %vm2806, %v2809
        %s2811 = sand.u32 %s384, 1
        %s2812 = scalar_lea.sflag [#allocation8], %s2811
        %s2813 = sand.u32 %s384, 1
        %s2814 = scalar_lea.vmem [#allocation26], %s2813
        // Predicated region
        $region137: #{tpu_custom_call.1} parent=83 // pred_check
          %p2815 = pneg %p394
        $region138: #{tpu_custom_call.1} parent=83 // pred_check_branch
          %2817 = sbr.rel (%p2815) target = $region140
        $region139: #{tpu_custom_call.1} parent=83 // pred_region
          %2819 = vsyncadd %s2812, 0
          %s2820 = scalar_lea.hbm %s16, %s40
          %s2822 = sshll.u32 %s2814, 4
          %s2823 = int_to_ptr.vmem [resolvable:$true] %s2822
          %s2824 = sshll.u32 %s2820, 4
          %s2825 = int_to_ptr.hbm [resolvable:$true] %s2824
          %2827 = dma.vmem_to_hbm [thread:$0]  %s2823, 16, %s2825, %s2812
        $region140: #{tpu_custom_call.1} parent=83 // pred_fallthru
          _
        // Predicated region
        $region141: #{tpu_custom_call.1} parent=83 // pred_check
          %p2828 = pneg %p415
        $region142: #{tpu_custom_call.1} parent=83 // pred_check_branch
          %2830 = sbr.rel (%p2828) target = $region144
        $region143: #{tpu_custom_call.1} parent=83 // pred_region
          %2832 = vsyncadd [#allocation28], 0
          %s2834 = sshll.u32 [#allocation27], 4
          %s2835 = int_to_ptr.vmem [resolvable:$true] %s2834
          %s2836 = sshll.u32 %s17, 4
          %s2837 = int_to_ptr.hbm [resolvable:$true] %s2836
          %2839 = dma.vmem_to_hbm [thread:$0]  %s2835, 16, %s2837, [#allocation28]
        $region144: #{tpu_custom_call.1} parent=83 // pred_fallthru
          _
        // Predicated region
        $region145: #{tpu_custom_call.1} parent=83 // pred_check
          %p2840 = pneg %p415
        $region146: #{tpu_custom_call.1} parent=83 // pred_check_branch
          %2842 = sbr.rel (%p2840) target = $region148
        $region147: #{tpu_custom_call.1} parent=83 // pred_region
          %2844 = dma.done [#allocation28], 16
        $region148: #{tpu_custom_call.1} parent=83 // pred_fallthru
          _
      $region84: #{tpu_custom_call.1} parent=5 // pred_fallthru
        _
      %p2845 = scmp.le.s32.totalorder 2, %s35
      // Predicated region
      $region149: #{tpu_custom_call.1} parent=5 // pred_check
        %p2846 = pneg %p2845
      $region150: #{tpu_custom_call.1} parent=5 // pred_check_branch
        %2848 = sbr.rel (%p2846) target = $region152
      $region151: #{tpu_custom_call.1} parent=5 // pred_region
        %s2849 = ssub.s32 %s35, 2
        // Predicated region
        $region153: #{tpu_custom_call.1} parent=151 // pred_check
          %p2850 = pneg %p400
        $region154: #{tpu_custom_call.1} parent=151 // pred_check_branch
          %2852 = sbr.rel (%p2850) target = $region156
        $region155: #{tpu_custom_call.1} parent=151 // pred_region
          %s2853 = sand.u32 %s385, 1
          %s2854 = scalar_lea.sflag [#allocation8], %s2853
          %s2855 = sand.u32 %s385, 1
          %s2856 = scalar_lea.vmem [#allocation26], %s2855
          %2858 = dma.done %s2854, 16
        $region156: #{tpu_custom_call.1} parent=151 // pred_fallthru
          _
      $region152: #{tpu_custom_call.1} parent=5 // pred_fallthru
        _
    $region6: #{tpu_custom_call.1} parent=1 // loop_footer
      %s39 = sadd.s32 1, %s35
    $region7: #{tpu_custom_call.1} parent=1 // loop_footer_branch
      %34 = sbr.rel target = $region3
    $region8: #{tpu_custom_call.1} parent=1 // loop_exit
      _
    %2859 = vsyncpa [#allocation7], 1
    %s2860 = scalar_lea.sflag [#allocation7], 1
    %2861 = vsyncpa %s2860, 1
    %2862 = vsyncpa [#allocation10], 1
    %2863 = vsyncpa [#allocation13], 1
    %2864 = vsyncpa [#allocation16], 1
    %2865 = vsyncpa [#allocation19], 1
    %2866 = vsyncpa [#allocation22], 1
    %2867 = vsyncpa [#allocation25], 1
    %2868 = vsyncpa [#allocation8], 1
    %s2869 = scalar_lea.sflag [#allocation8], 1
    %2870 = vsyncpa %s2869, 1
    %2871 = vsyncpa [#allocation28], 1

</llo_original>
